<compile_context>
chip_gen: v6e
topology: v6e:2x2x1
jax: 0.10.0
libtpu: 0.0.40
codegen_flags: <defaults>
</compile_context>

<pallas_src>
import jax
import jax.numpy as jnp
from jax.experimental import pallas as pl
from jax.experimental.pallas import tpu as pltpu

ELU_ALPHA = 0.2            # nn.ELU(0.2)
BN_EPS = 1e-5              # nn.BatchNorm2d default eps
LANE = 128                 # pad Cout to the TPU lane width -> unmasked stores
VMEM_LIMIT = 32 * 1024 * 1024


def _elu(x):
    return jnp.where(x > 0, x, ELU_ALPHA * (jnp.exp(x) - 1.0))


# ----------------------------- Pallas kernels ------------------------------ #

def conv_elu_kernel(p_ref, w_ref, o_ref):
    """o = ELU_0.2(patches @ W)  (layer 1, no BatchNorm; tiles independent)."""
    y = jnp.dot(p_ref[...], w_ref[...], preferred_element_type=jnp.float32)
    o_ref[...] = _elu(y)


def conv_sigmoid_kernel(p_ref, w_ref, o_ref):
    """o = sigmoid(patches @ W)  (final 4x4 valid conv)."""
    y = jnp.dot(p_ref[...], w_ref[...], preferred_element_type=jnp.float32)
    s = pl.reciprocal(1.0 + jnp.exp(-y), approx=True)   # EUP recip slot
    o_ref[...] = jnp.clip(s, 0.0, 1.0)


def conv_bn_elu_kernel(p_ref, w_ref, o_ref):
    """o = ELU_0.2(BatchNorm(patches @ W)) with exact batch-global statistics.

    The output block is the FULL [M, 128] conv result and stays resident in
    VMEM across the M-tiled grid (constant out index_map).  Each grid step
    writes its tile of raw conv output; the last step computes per-channel
    mean / biased var over all M rows and normalizes in place (PyTorch
    training-mode BN with default gamma=1, beta=0).
    """
    i = pl.program_id(0)
    tm = p_ref.shape[0]
    y = jnp.dot(p_ref[...], w_ref[...], preferred_element_type=jnp.float32)
    row0 = pl.multiple_of(i * tm, tm)
    o_ref[pl.ds(row0, tm), :] = y

    @pl.when(i == pl.num_programs(0) - 1)
    def _():
        yall = o_ref[...]
        mean = jnp.mean(yall, axis=0, keepdims=True)
        var = jnp.mean((yall - mean) * (yall - mean), axis=0, keepdims=True)
        o_ref[...] = _elu((yall - mean) * jax.lax.rsqrt(var + BN_EPS))


# --------------------------- pallas_call wrappers --------------------------- #

def _pick_tile(m):
    for t in (512, 256, 128):
        if m % t == 0:
            return t
    return m


def _conv_act(patches, wmat, kernel):
    """Tiled-M matmul + elementwise epilogue; tiles independent -> parallel."""
    M, K = patches.shape
    _, Np = wmat.shape
    tm = _pick_tile(M)
    return pl.pallas_call(
        kernel,
        out_shape=jax.ShapeDtypeStruct((M, Np), jnp.float32),
        grid=(M // tm,),
        in_specs=[
            pl.BlockSpec((tm, K), lambda i: (i, 0)),
            pl.BlockSpec((K, Np), lambda i: (0, 0)),
        ],
        out_specs=pl.BlockSpec((tm, Np), lambda i: (i, 0)),
        compiler_params=pltpu.CompilerParams(
            dimension_semantics=("parallel",),
            vmem_limit_bytes=VMEM_LIMIT),
    )(patches, wmat)


def _conv_bn_act(patches, wmat):
    """Tiled-M matmul with batch-global BN + ELU epilogue (resident output)."""
    M, K = patches.shape
    _, Np = wmat.shape
    tm = _pick_tile(M)
    return pl.pallas_call(
        conv_bn_elu_kernel,
        out_shape=jax.ShapeDtypeStruct((M, Np), jnp.float32),
        grid=(M // tm,),
        in_specs=[
            pl.BlockSpec((tm, K), lambda i: (i, 0)),
            pl.BlockSpec((K, Np), lambda i: (0, 0)),
        ],
        # Constant index_map: full output stays resident in VMEM across the
        # grid so the last step can normalize with batch-global statistics.
        out_specs=pl.BlockSpec((M, Np), lambda i: (0, 0)),
        compiler_params=pltpu.CompilerParams(
            dimension_semantics=("arbitrary",),
            vmem_limit_bytes=VMEM_LIMIT),
    )(patches, wmat)


# ------------------------------- JAX glue ----------------------------------- #

def im2col(x_nhwc, k, stride, pad):
    """[N,H,W,C] -> patches [N*Ho*Wo, k*k*C], feature order (dh, dw, c)."""
    if pad > 0:
        x_nhwc = jnp.pad(x_nhwc, ((0, 0), (pad, pad), (pad, pad), (0, 0)))
    N, H, W, C = x_nhwc.shape
    Ho = (H - k) // stride + 1
    Wo = (W - k) // stride + 1
    cols = []
    for dh in range(k):
        for dw in range(k):
            cols.append(x_nhwc[:, dh:dh + stride * Ho:stride,
                               dw:dw + stride * Wo:stride, :])
    p = jnp.stack(cols, axis=3)                        # [N,Ho,Wo,k*k,C]
    return p.reshape(N * Ho * Wo, k * k * C), (N, Ho, Wo)


LAYER_CFG = [
    # (kind, stride, pad)
    ("elu",     2, 1),
    ("bn_elu",  2, 1),
    ("bn_elu",  2, 1),
    ("bn_elu",  2, 1),
    ("sigmoid", 1, 0),
]


def prepare_params(weights):
    """PyTorch (Cout,Cin,4,4) -> bf16 [16*Cin, Cout zero-padded to 128].

    Hoisted out of the forward pass: reorder, pad to lane-dense width, cast.
    """
    prepped = []
    for (kind, stride, pad), w in zip(LAYER_CFG, weights):
        cout, cin, kh, kw = w.shape
        wm = jnp.transpose(w, (2, 3, 1, 0)).reshape(kh * kw * cin, cout)
        cpad = (-cout) % LANE
        if cpad:
            wm = jnp.pad(wm, ((0, 0), (0, cpad)))
        prepped.append((wm.astype(jnp.bfloat16), cout, kind, stride, pad))
    return prepped


def discriminator_forward(x_nchw, prepped):
    x = jnp.transpose(x_nchw, (0, 2, 3, 1)).astype(jnp.float32)   # NHWC, f32
    for wmat, cout, kind, stride, pad in prepped:
        patches, (N, Ho, Wo) = im2col(x, 4, stride, pad)
        patches = patches.astype(jnp.bfloat16)        # bf16 MXU operands
        if kind == "bn_elu":
            y = _conv_bn_act(patches, wmat)
        elif kind == "elu":
            y = _conv_act(patches, wmat, conv_elu_kernel)
        else:
            y = _conv_act(patches, wmat, conv_sigmoid_kernel)
        # y is lane-dense [M, 128]; keep only the true channels going forward.
        x = y.reshape(N, Ho, Wo, y.shape[-1])[..., :cout]
    return x.reshape(-1, 1)                           # output.view(-1, 1)


# --------------------------------- main -------------------------------------- #

if __name__ == "__main__":
    # opt.channal = 3, opt.DFilter = 8; 64x64 input so the final 4x4 valid conv
    # sees a 4x4 feature map (the smallest spatial size this architecture supports).
    N, C, H, W = 2, 3, 64, 64
    DF = 8

    key = jax.random.PRNGKey(0)
    kx, k1, k2, k3, k4, k5 = jax.random.split(key, 6)
    x = jax.random.normal(kx, (N, C, H, W), dtype=jnp.float32)

    def init_w(k, cout, cin):
        # DCGAN-style deterministic init N(0, 0.02); bias=False everywhere.
        return 0.02 * jax.random.normal(k, (cout, cin, 4, 4), dtype=jnp.float32)

    weights = [
        init_w(k1, DF,     C),
        init_w(k2, DF * 2, DF),
        init_w(k3, DF * 4, DF * 2),
        init_w(k4, DF * 8, DF * 4),
        init_w(k5, 1,      DF * 8),
    ]
    # BatchNorm affine params are PyTorch defaults (gamma=1, beta=0) -> folded out.

    prepped = prepare_params(weights)   # weight prep hoisted out of the forward
    fwd = jax.jit(lambda inp: discriminator_forward(inp, prepped))

    out = jax.block_until_ready(fwd(x))

    assert out.shape == (N, 1), out.shape
    assert bool(jnp.all(jnp.isfinite(out)))
    assert bool(jnp.all((out >= 0.0) & (out <= 1.0)))
    print("KERNEL_OK")
</pallas_src>

<mosaic_0001>
module attributes {stable_mosaic.version = 11 : i64} {
  func.func @conv_elu_kernel(%arg0: i32, %arg1: memref<512x48xbf16, #tpu.memory_space<vmem>>, %arg2: memref<48x128xbf16, #tpu.memory_space<vmem>>, %arg3: memref<512x128xf32, #tpu.memory_space<vmem>>) attributes {dimension_semantics = [#tpu.dimension_semantics<parallel>], iteration_bounds = array<i64: 4>, scalar_prefetch = 0 : i64, scratch_operands = 0 : i64, tpu.core_type = #tpu.core_type<tc>, window_params = [{transform_indices = @transform_0, window_bounds = array<i64: 512, 48>}, {pipeline_mode = #tpu.pipeline_mode<synchronous>, transform_indices = @transform_1, window_bounds = array<i64: 48, 128>}, {transform_indices = @transform_2, window_bounds = array<i64: 512, 128>}]} {
    %c0 = arith.constant 0 : index
    %c0_0 = arith.constant 0 : index
    %0 = vector.load %arg1[%c0, %c0_0] : memref<512x48xbf16, #tpu.memory_space<vmem>>, vector<512x48xbf16>
    %c0_1 = arith.constant 0 : index
    %c0_2 = arith.constant 0 : index
    %1 = vector.load %arg2[%c0_1, %c0_2] : memref<48x128xbf16, #tpu.memory_space<vmem>>, vector<48x128xbf16>
    %cst = arith.constant dense<0.000000e+00> : vector<512x128xf32>
    %2 = tpu.matmul %0, %1, %cst {dimension_numbers = #tpu.dot_dimension_numbers<[1], [0], [0], [1], [0, 0, 1, 1], [], []>} : vector<512x48xbf16>, vector<48x128xbf16>, vector<512x128xf32> -> vector<512x128xf32>
    %cst_3 = arith.constant 0.000000e+00 : f32
    %3 = vector.broadcast %cst_3 : f32 to vector<512x128xf32>
    %4 = arith.cmpf ogt, %2, %3 : vector<512x128xf32>
    %5 = math.exp %2 : vector<512x128xf32>
    %cst_4 = arith.constant 1.000000e+00 : f32
    %6 = vector.broadcast %cst_4 : f32 to vector<512x128xf32>
    %7 = arith.subf %5, %6 : vector<512x128xf32>
    %cst_5 = arith.constant 2.000000e-01 : f32
    %8 = vector.broadcast %cst_5 : f32 to vector<512x128xf32>
    %9 = arith.mulf %8, %7 : vector<512x128xf32>
    %10 = arith.select %4, %2, %9 : vector<512x128xi1>, vector<512x128xf32>
    %c0_6 = arith.constant 0 : index
    %c0_7 = arith.constant 0 : index
    %11 = vector.load %arg3[%c0_6, %c0_7] : memref<512x128xf32, #tpu.memory_space<vmem>>, vector<512x128xf32>
    tpu.vector_store %arg3[%c0_6, %c0_7], %10 {strides = array<i32>} : memref<512x128xf32, #tpu.memory_space<vmem>>, vector<512x128xf32>,
    return
  }
  func.func @transform_0(%arg0: i32) -> (i32, i32) {
    %c0_i32 = arith.constant 0 : i32
    %c0_i32_0 = arith.constant 0 : i32
    return %arg0, %c0_i32 : i32, i32
  }
  func.func @transform_1(%arg0: i32) -> (i32, i32) {
    %c0_i32 = arith.constant 0 : i32
    %c0_i32_0 = arith.constant 0 : i32
    %c0_i32_1 = arith.constant 0 : i32
    return %c0_i32, %c0_i32_0 : i32, i32
  }
  func.func @transform_2(%arg0: i32) -> (i32, i32) {
    %c0_i32 = arith.constant 0 : i32
    %c0_i32_0 = arith.constant 0 : i32
    return %arg0, %c0_i32 : i32, i32
  }
}

module attributes {stable_mosaic.version = 11 : i64} {
  func.func @conv_bn_elu_kernel(%arg0: i32, %arg1: memref<512x128xbf16, #tpu.memory_space<vmem>>, %arg2: memref<128x128xbf16, #tpu.memory_space<vmem>>, %arg3: memref<512x128xf32, #tpu.memory_space<vmem>>) attributes {dimension_semantics = [#tpu.dimension_semantics<arbitrary>], iteration_bounds = array<i64: 1>, scalar_prefetch = 0 : i64, scratch_operands = 0 : i64, tpu.core_type = #tpu.core_type<tc>, window_params = [{transform_indices = @transform_0, window_bounds = array<i64: 512, 128>}, {pipeline_mode = #tpu.pipeline_mode<synchronous>, transform_indices = @transform_1, window_bounds = array<i64: 128, 128>}, {pipeline_mode = #tpu.pipeline_mode<synchronous>, transform_indices = @transform_2, window_bounds = array<i64: 512, 128>}]} {
    %c0 = arith.constant 0 : index
    %c0_0 = arith.constant 0 : index
    %0 = vector.load %arg1[%c0, %c0_0] : memref<512x128xbf16, #tpu.memory_space<vmem>>, vector<512x128xbf16>
    %c0_1 = arith.constant 0 : index
    %c0_2 = arith.constant 0 : index
    %1 = vector.load %arg2[%c0_1, %c0_2] : memref<128x128xbf16, #tpu.memory_space<vmem>>, vector<128x128xbf16>
    %cst = arith.constant dense<0.000000e+00> : vector<512x128xf32>
    %2 = tpu.matmul %0, %1, %cst {dimension_numbers = #tpu.dot_dimension_numbers<[1], [0], [0], [1], [0, 0, 1, 1], [], []>} : vector<512x128xbf16>, vector<128x128xbf16>, vector<512x128xf32> -> vector<512x128xf32>
    %c512_i32 = arith.constant 512 : i32
    %3 = arith.muli %arg0, %c512_i32 : i32
    %4 = tpu.assume_multiple %3, 512 : i32
    %5 = arith.index_cast %4 : i32 to index
    %c0_3 = arith.constant 0 : index
    %6 = vector.load %arg3[%5, %c0_3] : memref<512x128xf32, #tpu.memory_space<vmem>>, vector<512x128xf32>
    tpu.vector_store %arg3[%5, %c0_3], %2 {strides = array<i32>} : memref<512x128xf32, #tpu.memory_space<vmem>>, vector<512x128xf32>,
    %c0_i32 = arith.constant 0 : i32
    %7 = arith.cmpi eq, %arg0, %c0_i32 : i32
    %8 = arith.extui %7 : i1 to i32
    %c0_i32_4 = arith.constant 0 : i32
    %9 = arith.cmpi ne, %8, %c0_i32_4 : i32
    scf.if %9 {
      %c0_5 = arith.constant 0 : index
      %c0_6 = arith.constant 0 : index
      %10 = vector.load %arg3[%c0_5, %c0_6] : memref<512x128xf32, #tpu.memory_space<vmem>>, vector<512x128xf32>
      %cst_7 = arith.constant dense<0.000000e+00> : vector<128xf32>
      %11 = vector.multi_reduction <add>, %10, %cst_7 [0] : vector<512x128xf32> to vector<128xf32>
      %12 = vector.shape_cast %11 : vector<128xf32> to vector<1x128xf32>
      %cst_8 = arith.constant 5.120000e+02 : f32
      %13 = vector.broadcast %cst_8 : f32 to vector<1x128xf32>
      %14 = arith.divf %12, %13 : vector<1x128xf32>
      %15 = vector.broadcast %14 : vector<1x128xf32> to vector<512x128xf32>
      %16 = arith.subf %10, %15 : vector<512x128xf32>
      %17 = vector.broadcast %14 : vector<1x128xf32> to vector<512x128xf32>
      %18 = arith.subf %10, %17 : vector<512x128xf32>
      %19 = arith.mulf %16, %18 : vector<512x128xf32>
      %cst_9 = arith.constant dense<0.000000e+00> : vector<128xf32>
      %20 = vector.multi_reduction <add>, %19, %cst_9 [0] : vector<512x128xf32> to vector<128xf32>
      %21 = vector.shape_cast %20 : vector<128xf32> to vector<1x128xf32>
      %cst_10 = arith.constant 5.120000e+02 : f32
      %22 = vector.broadcast %cst_10 : f32 to vector<1x128xf32>
      %23 = arith.divf %21, %22 : vector<1x128xf32>
      %24 = vector.broadcast %14 : vector<1x128xf32> to vector<512x128xf32>
      %25 = arith.subf %10, %24 : vector<512x128xf32>
      %cst_11 = arith.constant 9.99999974E-6 : f32
      %26 = vector.broadcast %cst_11 : f32 to vector<1x128xf32>
      %27 = arith.addf %23, %26 : vector<1x128xf32>
      %28 = math.rsqrt %27 : vector<1x128xf32>
      %29 = vector.broadcast %28 : vector<1x128xf32> to vector<512x128xf32>
      %30 = arith.mulf %25, %29 : vector<512x128xf32>
      %cst_12 = arith.constant 0.000000e+00 : f32
      %31 = vector.broadcast %cst_12 : f32 to vector<512x128xf32>
      %32 = arith.cmpf ogt, %30, %31 : vector<512x128xf32>
      %33 = math.exp %30 : vector<512x128xf32>
      %cst_13 = arith.constant 1.000000e+00 : f32
      %34 = vector.broadcast %cst_13 : f32 to vector<512x128xf32>
      %35 = arith.subf %33, %34 : vector<512x128xf32>
      %cst_14 = arith.constant 2.000000e-01 : f32
      %36 = vector.broadcast %cst_14 : f32 to vector<512x128xf32>
      %37 = arith.mulf %36, %35 : vector<512x128xf32>
      %38 = arith.select %32, %30, %37 : vector<512x128xi1>, vector<512x128xf32>
      %c0_15 = arith.constant 0 : index
      %c0_16 = arith.constant 0 : index
      %39 = vector.load %arg3[%c0_15, %c0_16] : memref<512x128xf32, #tpu.memory_space<vmem>>, vector<512x128xf32>
      tpu.vector_store %arg3[%c0_15, %c0_16], %38 {strides = array<i32>} : memref<512x128xf32, #tpu.memory_space<vmem>>, vector<512x128xf32>,
    } else {
    }
    return
  }
  func.func @transform_0(%arg0: i32) -> (i32, i32) {
    %c0_i32 = arith.constant 0 : i32
    %c0_i32_0 = arith.constant 0 : i32
    return %arg0, %c0_i32 : i32, i32
  }
  func.func @transform_1(%arg0: i32) -> (i32, i32) {
    %c0_i32 = arith.constant 0 : i32
    %c0_i32_0 = arith.constant 0 : i32
    %c0_i32_1 = arith.constant 0 : i32
    return %c0_i32, %c0_i32_0 : i32, i32
  }
  func.func @transform_2(%arg0: i32) -> (i32, i32) {
    %c0_i32 = arith.constant 0 : i32
    %c0_i32_0 = arith.constant 0 : i32
    %c0_i32_1 = arith.constant 0 : i32
    return %c0_i32, %c0_i32_0 : i32, i32
  }
}

module attributes {stable_mosaic.version = 11 : i64} {
  func.func @conv_bn_elu_kernel(%arg0: i32, %arg1: memref<128x256xbf16, #tpu.memory_space<vmem>>, %arg2: memref<256x128xbf16, #tpu.memory_space<vmem>>, %arg3: memref<128x128xf32, #tpu.memory_space<vmem>>) attributes {dimension_semantics = [#tpu.dimension_semantics<arbitrary>], iteration_bounds = array<i64: 1>, scalar_prefetch = 0 : i64, scratch_operands = 0 : i64, tpu.core_type = #tpu.core_type<tc>, window_params = [{transform_indices = @transform_0, window_bounds = array<i64: 128, 256>}, {pipeline_mode = #tpu.pipeline_mode<synchronous>, transform_indices = @transform_1, window_bounds = array<i64: 256, 128>}, {pipeline_mode = #tpu.pipeline_mode<synchronous>, transform_indices = @transform_2, window_bounds = array<i64: 128, 128>}]} {
    %c0 = arith.constant 0 : index
    %c0_0 = arith.constant 0 : index
    %0 = vector.load %arg1[%c0, %c0_0] : memref<128x256xbf16, #tpu.memory_space<vmem>>, vector<128x256xbf16>
    %c0_1 = arith.constant 0 : index
    %c0_2 = arith.constant 0 : index
    %1 = vector.load %arg2[%c0_1, %c0_2] : memref<256x128xbf16, #tpu.memory_space<vmem>>, vector<256x128xbf16>
    %cst = arith.constant dense<0.000000e+00> : vector<128x128xf32>
    %2 = tpu.matmul %0, %1, %cst {dimension_numbers = #tpu.dot_dimension_numbers<[1], [0], [0], [1], [0, 0, 1, 1], [], []>} : vector<128x256xbf16>, vector<256x128xbf16>, vector<128x128xf32> -> vector<128x128xf32>
    %c128_i32 = arith.constant 128 : i32
    %3 = arith.muli %arg0, %c128_i32 : i32
    %4 = tpu.assume_multiple %3, 128 : i32
    %5 = arith.index_cast %4 : i32 to index
    %c0_3 = arith.constant 0 : index
    %6 = vector.load %arg3[%5, %c0_3] : memref<128x128xf32, #tpu.memory_space<vmem>>, vector<128x128xf32>
    tpu.vector_store %arg3[%5, %c0_3], %2 {strides = array<i32>} : memref<128x128xf32, #tpu.memory_space<vmem>>, vector<128x128xf32>,
    %c0_i32 = arith.constant 0 : i32
    %7 = arith.cmpi eq, %arg0, %c0_i32 : i32
    %8 = arith.extui %7 : i1 to i32
    %c0_i32_4 = arith.constant 0 : i32
    %9 = arith.cmpi ne, %8, %c0_i32_4 : i32
    scf.if %9 {
      %c0_5 = arith.constant 0 : index
      %c0_6 = arith.constant 0 : index
      %10 = vector.load %arg3[%c0_5, %c0_6] : memref<128x128xf32, #tpu.memory_space<vmem>>, vector<128x128xf32>
      %cst_7 = arith.constant dense<0.000000e+00> : vector<128xf32>
      %11 = vector.multi_reduction <add>, %10, %cst_7 [0] : vector<128x128xf32> to vector<128xf32>
      %12 = vector.shape_cast %11 : vector<128xf32> to vector<1x128xf32>
      %cst_8 = arith.constant 1.280000e+02 : f32
      %13 = vector.broadcast %cst_8 : f32 to vector<1x128xf32>
      %14 = arith.divf %12, %13 : vector<1x128xf32>
      %15 = vector.broadcast %14 : vector<1x128xf32> to vector<128x128xf32>
      %16 = arith.subf %10, %15 : vector<128x128xf32>
      %17 = vector.broadcast %14 : vector<1x128xf32> to vector<128x128xf32>
      %18 = arith.subf %10, %17 : vector<128x128xf32>
      %19 = arith.mulf %16, %18 : vector<128x128xf32>
      %cst_9 = arith.constant dense<0.000000e+00> : vector<128xf32>
      %20 = vector.multi_reduction <add>, %19, %cst_9 [0] : vector<128x128xf32> to vector<128xf32>
      %21 = vector.shape_cast %20 : vector<128xf32> to vector<1x128xf32>
      %cst_10 = arith.constant 1.280000e+02 : f32
      %22 = vector.broadcast %cst_10 : f32 to vector<1x128xf32>
      %23 = arith.divf %21, %22 : vector<1x128xf32>
      %24 = vector.broadcast %14 : vector<1x128xf32> to vector<128x128xf32>
      %25 = arith.subf %10, %24 : vector<128x128xf32>
      %cst_11 = arith.constant 9.99999974E-6 : f32
      %26 = vector.broadcast %cst_11 : f32 to vector<1x128xf32>
      %27 = arith.addf %23, %26 : vector<1x128xf32>
      %28 = math.rsqrt %27 : vector<1x128xf32>
      %29 = vector.broadcast %28 : vector<1x128xf32> to vector<128x128xf32>
      %30 = arith.mulf %25, %29 : vector<128x128xf32>
      %cst_12 = arith.constant 0.000000e+00 : f32
      %31 = vector.broadcast %cst_12 : f32 to vector<128x128xf32>
      %32 = arith.cmpf ogt, %30, %31 : vector<128x128xf32>
      %33 = math.exp %30 : vector<128x128xf32>
      %cst_13 = arith.constant 1.000000e+00 : f32
      %34 = vector.broadcast %cst_13 : f32 to vector<128x128xf32>
      %35 = arith.subf %33, %34 : vector<128x128xf32>
      %cst_14 = arith.constant 2.000000e-01 : f32
      %36 = vector.broadcast %cst_14 : f32 to vector<128x128xf32>
      %37 = arith.mulf %36, %35 : vector<128x128xf32>
      %38 = arith.select %32, %30, %37 : vector<128x128xi1>, vector<128x128xf32>
      %c0_15 = arith.constant 0 : index
      %c0_16 = arith.constant 0 : index
      %39 = vector.load %arg3[%c0_15, %c0_16] : memref<128x128xf32, #tpu.memory_space<vmem>>, vector<128x128xf32>
      tpu.vector_store %arg3[%c0_15, %c0_16], %38 {strides = array<i32>} : memref<128x128xf32, #tpu.memory_space<vmem>>, vector<128x128xf32>,
    } else {
    }
    return
  }
  func.func @transform_0(%arg0: i32) -> (i32, i32) {
    %c0_i32 = arith.constant 0 : i32
    %c0_i32_0 = arith.constant 0 : i32
    return %arg0, %c0_i32 : i32, i32
  }
  func.func @transform_1(%arg0: i32) -> (i32, i32) {
    %c0_i32 = arith.constant 0 : i32
    %c0_i32_0 = arith.constant 0 : i32
    %c0_i32_1 = arith.constant 0 : i32
    return %c0_i32, %c0_i32_0 : i32, i32
  }
  func.func @transform_2(%arg0: i32) -> (i32, i32) {
    %c0_i32 = arith.constant 0 : i32
    %c0_i32_0 = arith.constant 0 : i32
    %c0_i32_1 = arith.constant 0 : i32
    return %c0_i32, %c0_i32_0 : i32, i32
  }
}

module attributes {stable_mosaic.version = 11 : i64} {
  func.func @conv_bn_elu_kernel(%arg0: i32, %arg1: memref<32x512xbf16, #tpu.memory_space<vmem>>, %arg2: memref<512x128xbf16, #tpu.memory_space<vmem>>, %arg3: memref<32x128xf32, #tpu.memory_space<vmem>>) attributes {dimension_semantics = [#tpu.dimension_semantics<arbitrary>], iteration_bounds = array<i64: 1>, scalar_prefetch = 0 : i64, scratch_operands = 0 : i64, tpu.core_type = #tpu.core_type<tc>, window_params = [{transform_indices = @transform_0, window_bounds = array<i64: 32, 512>}, {pipeline_mode = #tpu.pipeline_mode<synchronous>, transform_indices = @transform_1, window_bounds = array<i64: 512, 128>}, {pipeline_mode = #tpu.pipeline_mode<synchronous>, transform_indices = @transform_2, window_bounds = array<i64: 32, 128>}]} {
    %c0 = arith.constant 0 : index
    %c0_0 = arith.constant 0 : index
    %0 = vector.load %arg1[%c0, %c0_0] : memref<32x512xbf16, #tpu.memory_space<vmem>>, vector<32x512xbf16>
    %c0_1 = arith.constant 0 : index
    %c0_2 = arith.constant 0 : index
    %1 = vector.load %arg2[%c0_1, %c0_2] : memref<512x128xbf16, #tpu.memory_space<vmem>>, vector<512x128xbf16>
    %cst = arith.constant dense<0.000000e+00> : vector<32x128xf32>
    %2 = tpu.matmul %0, %1, %cst {dimension_numbers = #tpu.dot_dimension_numbers<[1], [0], [0], [1], [0, 0, 1, 1], [], []>} : vector<32x512xbf16>, vector<512x128xbf16>, vector<32x128xf32> -> vector<32x128xf32>
    %c32_i32 = arith.constant 32 : i32
    %3 = arith.muli %arg0, %c32_i32 : i32
    %4 = tpu.assume_multiple %3, 32 : i32
    %5 = arith.index_cast %4 : i32 to index
    %c0_3 = arith.constant 0 : index
    %6 = vector.load %arg3[%5, %c0_3] : memref<32x128xf32, #tpu.memory_space<vmem>>, vector<32x128xf32>
    tpu.vector_store %arg3[%5, %c0_3], %2 {strides = array<i32>} : memref<32x128xf32, #tpu.memory_space<vmem>>, vector<32x128xf32>,
    %c0_i32 = arith.constant 0 : i32
    %7 = arith.cmpi eq, %arg0, %c0_i32 : i32
    %8 = arith.extui %7 : i1 to i32
    %c0_i32_4 = arith.constant 0 : i32
    %9 = arith.cmpi ne, %8, %c0_i32_4 : i32
    scf.if %9 {
      %c0_5 = arith.constant 0 : index
      %c0_6 = arith.constant 0 : index
      %10 = vector.load %arg3[%c0_5, %c0_6] : memref<32x128xf32, #tpu.memory_space<vmem>>, vector<32x128xf32>
      %cst_7 = arith.constant dense<0.000000e+00> : vector<128xf32>
      %11 = vector.multi_reduction <add>, %10, %cst_7 [0] : vector<32x128xf32> to vector<128xf32>
      %12 = vector.shape_cast %11 : vector<128xf32> to vector<1x128xf32>
      %cst_8 = arith.constant 3.200000e+01 : f32
      %13 = vector.broadcast %cst_8 : f32 to vector<1x128xf32>
      %14 = arith.divf %12, %13 : vector<1x128xf32>
      %15 = vector.broadcast %14 : vector<1x128xf32> to vector<32x128xf32>
      %16 = arith.subf %10, %15 : vector<32x128xf32>
      %17 = vector.broadcast %14 : vector<1x128xf32> to vector<32x128xf32>
      %18 = arith.subf %10, %17 : vector<32x128xf32>
      %19 = arith.mulf %16, %18 : vector<32x128xf32>
      %cst_9 = arith.constant dense<0.000000e+00> : vector<128xf32>
      %20 = vector.multi_reduction <add>, %19, %cst_9 [0] : vector<32x128xf32> to vector<128xf32>
      %21 = vector.shape_cast %20 : vector<128xf32> to vector<1x128xf32>
      %cst_10 = arith.constant 3.200000e+01 : f32
      %22 = vector.broadcast %cst_10 : f32 to vector<1x128xf32>
      %23 = arith.divf %21, %22 : vector<1x128xf32>
      %24 = vector.broadcast %14 : vector<1x128xf32> to vector<32x128xf32>
      %25 = arith.subf %10, %24 : vector<32x128xf32>
      %cst_11 = arith.constant 9.99999974E-6 : f32
      %26 = vector.broadcast %cst_11 : f32 to vector<1x128xf32>
      %27 = arith.addf %23, %26 : vector<1x128xf32>
      %28 = math.rsqrt %27 : vector<1x128xf32>
      %29 = vector.broadcast %28 : vector<1x128xf32> to vector<32x128xf32>
      %30 = arith.mulf %25, %29 : vector<32x128xf32>
      %cst_12 = arith.constant 0.000000e+00 : f32
      %31 = vector.broadcast %cst_12 : f32 to vector<32x128xf32>
      %32 = arith.cmpf ogt, %30, %31 : vector<32x128xf32>
      %33 = math.exp %30 : vector<32x128xf32>
      %cst_13 = arith.constant 1.000000e+00 : f32
      %34 = vector.broadcast %cst_13 : f32 to vector<32x128xf32>
      %35 = arith.subf %33, %34 : vector<32x128xf32>
      %cst_14 = arith.constant 2.000000e-01 : f32
      %36 = vector.broadcast %cst_14 : f32 to vector<32x128xf32>
      %37 = arith.mulf %36, %35 : vector<32x128xf32>
      %38 = arith.select %32, %30, %37 : vector<32x128xi1>, vector<32x128xf32>
      %c0_15 = arith.constant 0 : index
      %c0_16 = arith.constant 0 : index
      %39 = vector.load %arg3[%c0_15, %c0_16] : memref<32x128xf32, #tpu.memory_space<vmem>>, vector<32x128xf32>
      tpu.vector_store %arg3[%c0_15, %c0_16], %38 {strides = array<i32>} : memref<32x128xf32, #tpu.memory_space<vmem>>, vector<32x128xf32>,
    } else {
    }
    return
  }
  func.func @transform_0(%arg0: i32) -> (i32, i32) {
    %c0_i32 = arith.constant 0 : i32
    %c0_i32_0 = arith.constant 0 : i32
    return %arg0, %c0_i32 : i32, i32
  }
  func.func @transform_1(%arg0: i32) -> (i32, i32) {
    %c0_i32 = arith.constant 0 : i32
    %c0_i32_0 = arith.constant 0 : i32
    %c0_i32_1 = arith.constant 0 : i32
    return %c0_i32, %c0_i32_0 : i32, i32
  }
  func.func @transform_2(%arg0: i32) -> (i32, i32) {
    %c0_i32 = arith.constant 0 : i32
    %c0_i32_0 = arith.constant 0 : i32
    %c0_i32_1 = arith.constant 0 : i32
    return %c0_i32, %c0_i32_0 : i32, i32
  }
}

module attributes {stable_mosaic.version = 11 : i64} {
  func.func @conv_sigmoid_kernel(%arg0: i32, %arg1: memref<2x1024xbf16, #tpu.memory_space<vmem>>, %arg2: memref<1024x128xbf16, #tpu.memory_space<vmem>>, %arg3: memref<2x128xf32, #tpu.memory_space<vmem>>) attributes {dimension_semantics = [#tpu.dimension_semantics<parallel>], iteration_bounds = array<i64: 1>, scalar_prefetch = 0 : i64, scratch_operands = 0 : i64, tpu.core_type = #tpu.core_type<tc>, window_params = [{transform_indices = @transform_0, window_bounds = array<i64: 2, 1024>}, {pipeline_mode = #tpu.pipeline_mode<synchronous>, transform_indices = @transform_1, window_bounds = array<i64: 1024, 128>}, {transform_indices = @transform_2, window_bounds = array<i64: 2, 128>}]} {
    %c0 = arith.constant 0 : index
    %c0_0 = arith.constant 0 : index
    %0 = vector.load %arg1[%c0, %c0_0] : memref<2x1024xbf16, #tpu.memory_space<vmem>>, vector<2x1024xbf16>
    %c0_1 = arith.constant 0 : index
    %c0_2 = arith.constant 0 : index
    %1 = vector.load %arg2[%c0_1, %c0_2] : memref<1024x128xbf16, #tpu.memory_space<vmem>>, vector<1024x128xbf16>
    %cst = arith.constant dense<0.000000e+00> : vector<2x128xf32>
    %2 = tpu.matmul %0, %1, %cst {dimension_numbers = #tpu.dot_dimension_numbers<[1], [0], [0], [1], [0, 0, 1, 1], [], []>} : vector<2x1024xbf16>, vector<1024x128xbf16>, vector<2x128xf32> -> vector<2x128xf32>
    %cst_3 = arith.constant 0.000000e+00 : f32
    %3 = vector.broadcast %cst_3 : f32 to vector<2x128xf32>
    %4 = arith.subf %3, %2 : vector<2x128xf32>
    %5 = math.exp %4 : vector<2x128xf32>
    %cst_4 = arith.constant 1.000000e+00 : f32
    %6 = vector.broadcast %cst_4 : f32 to vector<2x128xf32>
    %7 = arith.addf %6, %5 : vector<2x128xf32>
    %8 = tpu.reciprocal %7 {approx = true} : vector<2x128xf32> -> vector<2x128xf32>
    %cst_5 = arith.constant 0.000000e+00 : f32
    %cst_6 = arith.constant 1.000000e+00 : f32
    %9 = vector.broadcast %cst_5 : f32 to vector<2x128xf32>
    %10 = arith.maximumf %9, %8 : vector<2x128xf32>
    %11 = vector.broadcast %cst_6 : f32 to vector<2x128xf32>
    %12 = arith.minimumf %11, %10 : vector<2x128xf32>
    %c0_7 = arith.constant 0 : index
    %c0_8 = arith.constant 0 : index
    %13 = vector.load %arg3[%c0_7, %c0_8] : memref<2x128xf32, #tpu.memory_space<vmem>>, vector<2x128xf32>
    tpu.vector_store %arg3[%c0_7, %c0_8], %12 {strides = array<i32>} : memref<2x128xf32, #tpu.memory_space<vmem>>, vector<2x128xf32>,
    return
  }
  func.func @transform_0(%arg0: i32) -> (i32, i32) {
    %c0_i32 = arith.constant 0 : i32
    %c0_i32_0 = arith.constant 0 : i32
    return %arg0, %c0_i32 : i32, i32
  }
  func.func @transform_1(%arg0: i32) -> (i32, i32) {
    %c0_i32 = arith.constant 0 : i32
    %c0_i32_0 = arith.constant 0 : i32
    %c0_i32_1 = arith.constant 0 : i32
    return %c0_i32, %c0_i32_0 : i32, i32
  }
  func.func @transform_2(%arg0: i32) -> (i32, i32) {
    %c0_i32 = arith.constant 0 : i32
    %c0_i32_0 = arith.constant 0 : i32
    return %arg0, %c0_i32 : i32, i32
  }
}

</mosaic_0001>

<llo_original>
// kernel: _lambda_.5
$region0: #{_lambda_.5}
  #allocation0 [shape = 'u32[]', space=smem, size = 0x4, offset = 0x4, fixed_abs, tag = 'smem constant byte address 0x4 - core index']
  #allocation1 [shape = 'u32[144,128]{1,0:T(1,128)}', space=vmem, size = 0x12000, scoped, tag = 'internal scratch']
  %s0 = inlined_call_operand.vmem [shape: bf16[2048,48], index: 0, kind: input, shape index: {}]
  %s1 = inlined_call_operand.vmem [shape: bf16[48,128], index: 1, kind: input, shape index: {}]
  %s2 = inlined_call_operand.vmem [shape: f32[2048,128], index: 2, kind: output, shape index: {}]
  %s3 = sld [smem:[#allocation0]]
  $region41: #{_lambda_.5} parent=0
    _
  %s5 = ssub.s32 1, %s3
  %s6 = scalar_select 0, %s5, %s3
  loop: start=0, step=1, limit=6
  $region2: #{_lambda_.5} parent=0 // loop_pre_header
    _
  $region3: #{_lambda_.5} parent=0 // loop_header
    %s8 = sphi 0, %s12
    %p9 = scmp.ge.s32.totalorder %s8, 6
    %s18 = sphi 0, %s20
    %s21 = sphi 0, %s18
    %s22 = sphi 0, %s21
    %s38 = sphi 0, %s22
    %s42 = sphi 0, %s42
    %s44 = sphi 0, %s42
    %s45 = sphi 0, %s44
    %s59 = sphi 0, %s45
    %s65 = sphi 0, %s67
    %s68 = sphi 0, %s65
    %s69 = sphi 0, %s68
    %s85 = sphi 0, %s69
  $region4: #{_lambda_.5} parent=0 // loop_header_branch
    %11 = sbr.rel (%p9) target = $region8
  $region5: #{_lambda_.5} parent=0 // loop_body
    %s13 = ssub.s32 %s8, 1
    %s14 = ssub.s32 %s8, 2
    %s15 = sadd.s32 %s8, 1
    %s16 = ssub.s32 %s8, %s15
    %p17 = scmp.eq.s32.totalorder %s16, 0
    %s19 = sadd.s32 %s18, 1
    %s20 = scalar_select %p17, %s18, %s19
    %p23 = pneg %p17
    %p24 = scmp.eq.s32.totalorder %s8, 3
    %p25 = por %p23, %p24
    %p26 = scmp.ne.s32.totalorder %s18, %s21
    %p27 = scmp.eq.s32.totalorder %s8, 0
    %p28 = por %p26, %p27
    %p29 = scmp.ne.s32.totalorder %s18, %s21
    %p30 = scmp.eq.s32.totalorder %s13, 3
    %p31 = por %p29, %p30
    %p32 = scmp.ne.s32.totalorder %s21, %s22
    %p33 = scmp.eq.s32.totalorder %s13, 0
    %p34 = por %p32, %p33
    %p35 = scmp.ne.s32.totalorder %s21, %s22
    %p36 = scmp.eq.s32.totalorder %s14, 3
    %p37 = por %p35, %p36
    %p39 = scmp.ne.s32.totalorder %s22, %s38
    %p40 = scmp.eq.s32.totalorder %s14, 0
    %p41 = por %p39, %p40
    %s43 = sadd.s32 %s42, 1
    %p46 = scmp.eq.s32.totalorder %s8, 3
    %p47 = scmp.ne.s32.totalorder %s42, %s44
    %p48 = scmp.eq.s32.totalorder %s8, 0
    %p49 = por %p47, %p48
    %p50 = scmp.ne.s32.totalorder %s42, %s44
    %p51 = scmp.eq.s32.totalorder %s13, 3
    %p52 = por %p50, %p51
    %p53 = scmp.ne.s32.totalorder %s44, %s45
    %p54 = scmp.eq.s32.totalorder %s13, 0
    %p55 = por %p53, %p54
    %p56 = scmp.ne.s32.totalorder %s44, %s45
    %p57 = scmp.eq.s32.totalorder %s14, 3
    %p58 = por %p56, %p57
    %p60 = scmp.ne.s32.totalorder %s45, %s59
    %p61 = scmp.eq.s32.totalorder %s14, 0
    %p62 = por %p60, %p61
    %s63 = ssub.s32 %s8, %s15
    %p64 = scmp.eq.s32.totalorder %s63, 0
    %s66 = sadd.s32 %s65, 1
    %s67 = scalar_select %p64, %s65, %s66
    %p70 = pneg %p64
    %p71 = scmp.eq.s32.totalorder %s8, 3
    %p72 = por %p70, %p71
    %p73 = scmp.ne.s32.totalorder %s65, %s68
    %p74 = scmp.eq.s32.totalorder %s8, 0
    %p75 = por %p73, %p74
    %p76 = scmp.ne.s32.totalorder %s65, %s68
    %p77 = scmp.eq.s32.totalorder %s13, 3
    %p78 = por %p76, %p77
    %p79 = scmp.ne.s32.totalorder %s68, %s69
    %p80 = scmp.eq.s32.totalorder %s13, 0
    %p81 = por %p79, %p80
    %p82 = scmp.ne.s32.totalorder %s68, %s69
    %p83 = scmp.eq.s32.totalorder %s14, 3
    %p84 = por %p82, %p83
    %p86 = scmp.ne.s32.totalorder %s69, %s85
    %p87 = scmp.eq.s32.totalorder %s14, 0
    %p88 = por %p86, %p87
    %p89 = scmp.le.s32.totalorder 1, %s8
    %p90 = scmp.lt.s32.totalorder %s8, 5
    %p91 = pnand %p89, %p90
    %p92 = pneg %p91
    // Predicated region
    $region9: #{_lambda_.5} parent=5 // pred_check
      _
    $region10: #{_lambda_.5} parent=5 // pred_check_branch
      %94 = sbr.rel (%p91) target = $region12
    $region11: #{_lambda_.5} parent=5 // pred_region
      %s95 = ssub.s32 %s8, 1
      // Predicated region
      $region13: #{_lambda_.5} parent=11 // pred_check
        %p96 = pneg %p55
      $region14: #{_lambda_.5} parent=11 // pred_check_branch
        %98 = sbr.rel (%p96) target = $region16
      $region15: #{_lambda_.5} parent=11 // pred_region
        _
      $region16: #{_lambda_.5} parent=11 // pred_fallthru
        _
    $region12: #{_lambda_.5} parent=5 // pred_fallthru
      _
    %p99 = scmp.lt.s32.totalorder %s8, 4
    // Predicated region
    $region17: #{_lambda_.5} parent=5 // pred_check
      %p100 = pneg %p99
    $region18: #{_lambda_.5} parent=5 // pred_check_branch
      %102 = sbr.rel (%p100) target = $region20
    $region19: #{_lambda_.5} parent=5 // pred_region
      // Predicated region
      $region21: #{_lambda_.5} parent=19 // pred_check
        %p103 = pneg %p28
      $region22: #{_lambda_.5} parent=19 // pred_check_branch
        %105 = sbr.rel (%p103) target = $region24
      $region23: #{_lambda_.5} parent=19 // pred_region
        %s106 = smul.u32 64, %s8
        %p107 = scmp.lt.s32.totalorder %s106, 255
        %s108 = scalar_select %p107, %s106, 255
        %s109 = smul.addr %s108, 4
        %s110 = scalar_lea.vmem %s0, %s109
        %s111 = smul.u32 64, %s8
      $region24: #{_lambda_.5} parent=19 // pred_fallthru
        _
    $region20: #{_lambda_.5} parent=5 // pred_fallthru
      _
    %p112 = scmp.le.s32.totalorder 1, %s8
    %p113 = scmp.lt.s32.totalorder %s8, 5
    %p114 = pnand %p112, %p113
    %p115 = pneg %p114
    // Predicated region
    $region25: #{_lambda_.5} parent=5 // pred_check
      _
    $region26: #{_lambda_.5} parent=5 // pred_check_branch
      %117 = sbr.rel (%p114) target = $region28
    $region27: #{_lambda_.5} parent=5 // pred_region
      %s118 = ssub.s32 %s8, 1
      %s119 = smul.u32 64, %s13
      %p120 = scmp.lt.s32.totalorder %s119, 255
      %s121 = scalar_select %p120, %s119, 255
      %s122 = smul.addr %s121, 4
      %s123 = scalar_lea.vmem %s0, %s122
      %p124 = pneg %p34
      %p125 = pneg %p31
      %p126 = pneg %p55
      %p127 = pneg %p52
      %p128 = pneg %p81
      %p129 = pneg %p78
      %s130 = smul.u32 64, %s13
      %p131 = scmp.lt.s32.totalorder %s130, 255
      %s132 = scalar_select %p131, %s130, 255
      %s133 = smul.addr %s132, 8
      %s134 = scalar_lea.vmem %s2, %s133
      %s135 = smul.u32 64, %s13
      %p136 = scmp.lt.s32.totalorder %s135, 255
      %s137 = scalar_select %p136, %s135, 255
      %s138 = smul.addr %s137, 4
      %s139 = scalar_lea.vmem %s0, %s138
      %s140 = smul.u32 64, %s13
      %s141 = smul.u32 64, %s13
      %p142 = scmp.lt.s32.totalorder %s141, 255
      %s143 = scalar_select %p142, %s141, 255
      %s144 = smul.addr %s143, 8
      %s145 = scalar_lea.vmem %s2, %s144
      %s146 = smul.u32 64, %s13
      %v148 = vld [vmem:[%s139] sm:$0xf]
      %v149 = vld [vmem:[%s139 + $0x4] sm:$0xf]
      %v150 = vld [vmem:[%s139 + $0x8] sm:$0xf]
      %v151 = vld [vmem:[%s139 + $0xc] sm:$0xf]
      %v152 = vld [vmem:[%s139 + $0x10] sm:$0xf]
      %v153 = vld [vmem:[%s139 + $0x14] sm:$0xf]
      %v154 = vld [vmem:[%s139 + $0x18] sm:$0xf]
      %v155 = vld [vmem:[%s139 + $0x1c] sm:$0xf]
      %v156 = vld [vmem:[%s139 + $0x20] sm:$0xf]
      %v157 = vld [vmem:[%s139 + $0x24] sm:$0xf]
      %v158 = vld [vmem:[%s139 + $0x28] sm:$0xf]
      %v159 = vld [vmem:[%s139 + $0x2c] sm:$0xf]
      %v160 = vld [vmem:[%s139 + $0x30] sm:$0xf]
      %v161 = vld [vmem:[%s139 + $0x34] sm:$0xf]
      %v162 = vld [vmem:[%s139 + $0x38] sm:$0xf]
      %v163 = vld [vmem:[%s139 + $0x3c] sm:$0xf]
      %v164 = vld [vmem:[%s139 + $0x40] sm:$0xf]
      %v165 = vld [vmem:[%s139 + $0x44] sm:$0xf]
      %v166 = vld [vmem:[%s139 + $0x48] sm:$0xf]
      %v167 = vld [vmem:[%s139 + $0x4c] sm:$0xf]
      %v168 = vld [vmem:[%s139 + $0x50] sm:$0xf]
      %v169 = vld [vmem:[%s139 + $0x54] sm:$0xf]
      %v170 = vld [vmem:[%s139 + $0x58] sm:$0xf]
      %v171 = vld [vmem:[%s139 + $0x5c] sm:$0xf]
      %v172 = vld [vmem:[%s139 + $0x60] sm:$0xf]
      %v173 = vld [vmem:[%s139 + $0x64] sm:$0xf]
      %v174 = vld [vmem:[%s139 + $0x68] sm:$0xf]
      %v175 = vld [vmem:[%s139 + $0x6c] sm:$0xf]
      %v176 = vld [vmem:[%s139 + $0x70] sm:$0xf]
      %v177 = vld [vmem:[%s139 + $0x74] sm:$0xf]
      %v178 = vld [vmem:[%s139 + $0x78] sm:$0xf]
      %v179 = vld [vmem:[%s139 + $0x7c] sm:$0xf]
      %v180 = vld [vmem:[%s139 + $0x80] sm:$0xf]
      %v181 = vld [vmem:[%s139 + $0x84] sm:$0xf]
      %v182 = vld [vmem:[%s139 + $0x88] sm:$0xf]
      %v183 = vld [vmem:[%s139 + $0x8c] sm:$0xf]
      %v184 = vld [vmem:[%s139 + $0x90] sm:$0xf]
      %v185 = vld [vmem:[%s139 + $0x94] sm:$0xf]
      %v186 = vld [vmem:[%s139 + $0x98] sm:$0xf]
      %v187 = vld [vmem:[%s139 + $0x9c] sm:$0xf]
      %v188 = vld [vmem:[%s139 + $0xa0] sm:$0xf]
      %v189 = vld [vmem:[%s139 + $0xa4] sm:$0xf]
      %v190 = vld [vmem:[%s139 + $0xa8] sm:$0xf]
      %v191 = vld [vmem:[%s139 + $0xac] sm:$0xf]
      %v192 = vld [vmem:[%s139 + $0xb0] sm:$0xf]
      %v193 = vld [vmem:[%s139 + $0xb4] sm:$0xf]
      %v194 = vld [vmem:[%s139 + $0xb8] sm:$0xf]
      %v195 = vld [vmem:[%s139 + $0xbc] sm:$0xf]
      %v196 = vld [vmem:[%s139 + $0xc0] sm:$0xf]
      %v197 = vld [vmem:[%s139 + $0xc4] sm:$0xf]
      %v198 = vld [vmem:[%s139 + $0xc8] sm:$0xf]
      %v199 = vld [vmem:[%s139 + $0xcc] sm:$0xf]
      %v200 = vld [vmem:[%s139 + $0xd0] sm:$0xf]
      %v201 = vld [vmem:[%s139 + $0xd4] sm:$0xf]
      %v202 = vld [vmem:[%s139 + $0xd8] sm:$0xf]
      %v203 = vld [vmem:[%s139 + $0xdc] sm:$0xf]
      %v204 = vld [vmem:[%s139 + $0xe0] sm:$0xf]
      %v205 = vld [vmem:[%s139 + $0xe4] sm:$0xf]
      %v206 = vld [vmem:[%s139 + $0xe8] sm:$0xf]
      %v207 = vld [vmem:[%s139 + $0xec] sm:$0xf]
      %v208 = vld [vmem:[%s139 + $0xf0] sm:$0xf]
      %v209 = vld [vmem:[%s139 + $0xf4] sm:$0xf]
      %v210 = vld [vmem:[%s139 + $0xf8] sm:$0xf]
      %v211 = vld [vmem:[%s139 + $0xfc] sm:$0xf]
      %v212 = vld [vmem:[%s1] sm:$0xf]
      %v213 = vld [vmem:[%s1 + $0x4] sm:$0xf]
      %v214 = vld [vmem:[%s1 + $0x8] sm:$0xf]
      %v215 = vld [vmem:[%s1 + $0xc] sm:$0xf]
      %v216 = vld [vmem:[%s1 + $0x10] sm:$0xf]
      %v217 = vld [vmem:[%s1 + $0x14] sm:$0xf]
      %v282 = vunpack.c.l.b16 %v148
      %v283 = vunpack.c.l.b16 %v149
      %v284 = vunpack.c.l.b16 %v150
      %v285 = vunpack.c.l.b16 %v151
      %v286 = vunpack.c.l.b16 %v152
      %v287 = vunpack.c.l.b16 %v153
      %v288 = vunpack.c.l.b16 %v154
      %v289 = vunpack.c.l.b16 %v155
      %v290 = vunpack.c.l.b16 %v156
      %v291 = vunpack.c.l.b16 %v157
      %v292 = vunpack.c.l.b16 %v158
      %v293 = vunpack.c.l.b16 %v159
      %v294 = vunpack.c.l.b16 %v160
      %v295 = vunpack.c.l.b16 %v161
      %v296 = vunpack.c.l.b16 %v162
      %v297 = vunpack.c.l.b16 %v163
      %v298 = vunpack.c.l.b16 %v164
      %v299 = vunpack.c.l.b16 %v165
      %v300 = vunpack.c.l.b16 %v166
      %v301 = vunpack.c.l.b16 %v167
      %v302 = vunpack.c.l.b16 %v168
      %v303 = vunpack.c.l.b16 %v169
      %v304 = vunpack.c.l.b16 %v170
      %v305 = vunpack.c.l.b16 %v171
      %v306 = vunpack.c.l.b16 %v172
      %v307 = vunpack.c.l.b16 %v173
      %v308 = vunpack.c.l.b16 %v174
      %v309 = vunpack.c.l.b16 %v175
      %v310 = vunpack.c.l.b16 %v176
      %v311 = vunpack.c.l.b16 %v177
      %v312 = vunpack.c.l.b16 %v178
      %v313 = vunpack.c.l.b16 %v179
      %v314 = vunpack.c.l.b16 %v180
      %v315 = vunpack.c.l.b16 %v181
      %v316 = vunpack.c.l.b16 %v182
      %v317 = vunpack.c.l.b16 %v183
      %v318 = vunpack.c.l.b16 %v184
      %v319 = vunpack.c.l.b16 %v185
      %v320 = vunpack.c.l.b16 %v186
      %v321 = vunpack.c.l.b16 %v187
      %v322 = vunpack.c.l.b16 %v188
      %v323 = vunpack.c.l.b16 %v189
      %v324 = vunpack.c.l.b16 %v190
      %v325 = vunpack.c.l.b16 %v191
      %v326 = vunpack.c.l.b16 %v192
      %v327 = vunpack.c.l.b16 %v193
      %v328 = vunpack.c.l.b16 %v194
      %v329 = vunpack.c.l.b16 %v195
      %v330 = vunpack.c.l.b16 %v196
      %v331 = vunpack.c.l.b16 %v197
      %v332 = vunpack.c.l.b16 %v198
      %v333 = vunpack.c.l.b16 %v199
      %v334 = vunpack.c.l.b16 %v200
      %v335 = vunpack.c.l.b16 %v201
      %v336 = vunpack.c.l.b16 %v202
      %v337 = vunpack.c.l.b16 %v203
      %v338 = vunpack.c.l.b16 %v204
      %v339 = vunpack.c.l.b16 %v205
      %v340 = vunpack.c.l.b16 %v206
      %v341 = vunpack.c.l.b16 %v207
      %v342 = vunpack.c.l.b16 %v208
      %v343 = vunpack.c.l.b16 %v209
      %v344 = vunpack.c.l.b16 %v210
      %v345 = vunpack.c.l.b16 %v211
      %v346 = vpack.c.b16 %v283, %v282
      %v347 = vpack.c.b16 %v285, %v284
      %v348 = vpack.c.b16 %v287, %v286
      %v349 = vpack.c.b16 %v289, %v288
      %v350 = vpack.c.b16 %v291, %v290
      %v351 = vpack.c.b16 %v293, %v292
      %v352 = vpack.c.b16 %v295, %v294
      %v353 = vpack.c.b16 %v297, %v296
      %v354 = vpack.c.b16 %v299, %v298
      %v355 = vpack.c.b16 %v301, %v300
      %v356 = vpack.c.b16 %v303, %v302
      %v357 = vpack.c.b16 %v305, %v304
      %v358 = vpack.c.b16 %v307, %v306
      %v359 = vpack.c.b16 %v309, %v308
      %v360 = vpack.c.b16 %v311, %v310
      %v361 = vpack.c.b16 %v313, %v312
      %v362 = vpack.c.b16 %v315, %v314
      %v363 = vpack.c.b16 %v317, %v316
      %v364 = vpack.c.b16 %v319, %v318
      %v365 = vpack.c.b16 %v321, %v320
      %v366 = vpack.c.b16 %v323, %v322
      %v367 = vpack.c.b16 %v325, %v324
      %v368 = vpack.c.b16 %v327, %v326
      %v369 = vpack.c.b16 %v329, %v328
      %v370 = vpack.c.b16 %v331, %v330
      %v371 = vpack.c.b16 %v333, %v332
      %v372 = vpack.c.b16 %v335, %v334
      %v373 = vpack.c.b16 %v337, %v336
      %v374 = vpack.c.b16 %v339, %v338
      %v375 = vpack.c.b16 %v341, %v340
      %v376 = vpack.c.b16 %v343, %v342
      %v377 = vpack.c.b16 %v345, %v344
      %v384 = vunpack.c.l.b16 %v212
      %v385 = vunpack.c.l.b16 %v213
      %v386 = vunpack.c.l.b16 %v214
      %v387 = vunpack.c.l.b16 %v215
      %v388 = vunpack.c.l.b16 %v216
      %v389 = vunpack.c.l.b16 %v217
      %v390 = vpack.c.b16 %v385, %v384
      %v391 = vpack.c.b16 %v387, %v386
      %v392 = vpack.c.b16 %v389, %v388
      %vm396 = vcmask 392192
      %v398 = vsel %vm396, %v346, 0
      %v401 = vsel %vm396, %v347, 0
      %v404 = vsel %vm396, %v348, 0
      %v407 = vsel %vm396, %v349, 0
      %v410 = vsel %vm396, %v350, 0
      %v413 = vsel %vm396, %v351, 0
      %v416 = vsel %vm396, %v352, 0
      %v419 = vsel %vm396, %v353, 0
      %v422 = vsel %vm396, %v354, 0
      %v425 = vsel %vm396, %v355, 0
      %v428 = vsel %vm396, %v356, 0
      %v431 = vsel %vm396, %v357, 0
      %v434 = vsel %vm396, %v358, 0
      %v437 = vsel %vm396, %v359, 0
      %v440 = vsel %vm396, %v360, 0
      %v443 = vsel %vm396, %v361, 0
      %v446 = vsel %vm396, %v362, 0
      %v449 = vsel %vm396, %v363, 0
      %v452 = vsel %vm396, %v364, 0
      %v455 = vsel %vm396, %v365, 0
      %v458 = vsel %vm396, %v366, 0
      %v461 = vsel %vm396, %v367, 0
      %v464 = vsel %vm396, %v368, 0
      %v467 = vsel %vm396, %v369, 0
      %v470 = vsel %vm396, %v370, 0
      %v473 = vsel %vm396, %v371, 0
      %v476 = vsel %vm396, %v372, 0
      %v479 = vsel %vm396, %v373, 0
      %v482 = vsel %vm396, %v374, 0
      %v485 = vsel %vm396, %v375, 0
      %v488 = vsel %vm396, %v376, 0
      %v491 = vsel %vm396, %v377, 0
      %493 = vmatprep.subr.bf16.mxu0 0
      %494 = vmatpush1.bf16.msra.mxu0 0
      %495 = vmatprep.subr.bf16.mxu0 0
      %496 = vmatpush1.bf16.msra.mxu0 0
      %497 = vmatprep.subr.bf16.mxu0 0
      %498 = vmatpush1.bf16.msra.mxu0 0
      %499 = vmatprep.subr.bf16.mxu0 0
      %500 = vmatpush1.bf16.msra.mxu0 0
      %501 = vmatprep.subr.bf16.mxu0 0
      %502 = vmatpush1.bf16.msra.mxu0 0
      %503 = vmatprep.subr.bf16.mxu0 0
      %504 = vmatpush1.bf16.msra.mxu0 %v392
      %505 = vmatprep.subr.bf16.mxu0 0
      %506 = vmatpush1.bf16.msra.mxu0 %v391
      %507 = vmatprep.subr.bf16.mxu0 0
      %508 = vmatpush1.bf16.msra.mxu0 %v390
      %509 = vmatprep.subr.bf16.mxu0 0
      %510 = vmatpush2.bf16.msra.mxu0 0
      %511 = vmatprep.subr.bf16.mxu0 0
      %512 = vmatpush2.bf16.msra.mxu0 0
      %513 = vmatprep.subr.bf16.mxu0 0
      %514 = vmatpush2.bf16.msra.mxu0 0
      %515 = vmatprep.subr.bf16.mxu0 0
      %516 = vmatpush2.bf16.msra.mxu0 0
      %517 = vmatprep.subr.bf16.mxu0 0
      %518 = vmatpush2.bf16.msra.mxu0 0
      %519 = vmatprep.subr.bf16.mxu0 0
      %520 = vmatpush2.bf16.msra.mxu0 0
      %521 = vmatprep.subr.bf16.mxu0 0
      %522 = vmatpush2.bf16.msra.mxu0 0
      %523 = vmatprep.subr.bf16.mxu0 0
      %524 = vmatpush2.bf16.msra.mxu0 0
      %525 = vmatprep.mubr.bf16.mxu0 0
      %526 = vmatmul.mubr.bf16.gmra.mxu0 %v398
      %v527 = vpop.f32.mrf.mxu0
      %v528 = vadd.f32 0.0, %v527
      %v529 = vpop.f32.mrf.mxu0
      %v530 = vpop.f32.mrf.mxu0
      %v531 = vadd.f32 0.0, %v530
      %v532 = vpop.f32.mrf.mxu0
      %533 = vmatprep.mubr.bf16.mxu0 0
      %534 = vmatmul.mubr.bf16.gmra.mxu0 %v401
      %v535 = vpop.f32.mrf.mxu0
      %v536 = vadd.f32 0.0, %v535
      %v537 = vpop.f32.mrf.mxu0
      %v538 = vpop.f32.mrf.mxu0
      %v539 = vadd.f32 0.0, %v538
      %v540 = vpop.f32.mrf.mxu0
      %541 = vmatprep.mubr.bf16.mxu0 0
      %542 = vmatmul.mubr.bf16.gmra.mxu0 %v404
      %v543 = vpop.f32.mrf.mxu0
      %v544 = vadd.f32 0.0, %v543
      %v545 = vpop.f32.mrf.mxu0
      %v546 = vpop.f32.mrf.mxu0
      %v547 = vadd.f32 0.0, %v546
      %v548 = vpop.f32.mrf.mxu0
      %549 = vmatprep.mubr.bf16.mxu0 0
      %550 = vmatmul.mubr.bf16.gmra.mxu0 %v407
      %v551 = vpop.f32.mrf.mxu0
      %v552 = vadd.f32 0.0, %v551
      %v553 = vpop.f32.mrf.mxu0
      %v554 = vpop.f32.mrf.mxu0
      %v555 = vadd.f32 0.0, %v554
      %v556 = vpop.f32.mrf.mxu0
      %557 = vmatprep.mubr.bf16.mxu0 0
      %558 = vmatmul.mubr.bf16.gmra.mxu0 %v410
      %v559 = vpop.f32.mrf.mxu0
      %v560 = vadd.f32 0.0, %v559
      %v561 = vpop.f32.mrf.mxu0
      %v562 = vpop.f32.mrf.mxu0
      %v563 = vadd.f32 0.0, %v562
      %v564 = vpop.f32.mrf.mxu0
      %565 = vmatprep.mubr.bf16.mxu0 0
      %566 = vmatmul.mubr.bf16.gmra.mxu0 %v413
      %v567 = vpop.f32.mrf.mxu0
      %v568 = vadd.f32 0.0, %v567
      %v569 = vpop.f32.mrf.mxu0
      %v570 = vpop.f32.mrf.mxu0
      %v571 = vadd.f32 0.0, %v570
      %v572 = vpop.f32.mrf.mxu0
      %573 = vmatprep.mubr.bf16.mxu0 0
      %574 = vmatmul.mubr.bf16.gmra.mxu0 %v416
      %v575 = vpop.f32.mrf.mxu0
      %v576 = vadd.f32 0.0, %v575
      %v577 = vpop.f32.mrf.mxu0
      %v578 = vpop.f32.mrf.mxu0
      %v579 = vadd.f32 0.0, %v578
      %v580 = vpop.f32.mrf.mxu0
      %581 = vmatprep.mubr.bf16.mxu0 0
      %582 = vmatmul.mubr.bf16.gmra.mxu0 %v419
      %v583 = vpop.f32.mrf.mxu0
      %v584 = vadd.f32 0.0, %v583
      %v585 = vpop.f32.mrf.mxu0
      %v586 = vpop.f32.mrf.mxu0
      %v587 = vadd.f32 0.0, %v586
      %v588 = vpop.f32.mrf.mxu0
      %589 = vmatprep.mubr.bf16.mxu0 0
      %590 = vmatmul.mubr.bf16.gmra.mxu0 %v422
      %v591 = vpop.f32.mrf.mxu0
      %v592 = vadd.f32 0.0, %v591
      %v593 = vpop.f32.mrf.mxu0
      %v594 = vpop.f32.mrf.mxu0
      %v595 = vadd.f32 0.0, %v594
      %v596 = vpop.f32.mrf.mxu0
      %597 = vmatprep.mubr.bf16.mxu0 0
      %598 = vmatmul.mubr.bf16.gmra.mxu0 %v425
      %v599 = vpop.f32.mrf.mxu0
      %v600 = vadd.f32 0.0, %v599
      %v601 = vpop.f32.mrf.mxu0
      %v602 = vpop.f32.mrf.mxu0
      %v603 = vadd.f32 0.0, %v602
      %v604 = vpop.f32.mrf.mxu0
      %605 = vmatprep.mubr.bf16.mxu0 0
      %606 = vmatmul.mubr.bf16.gmra.mxu0 %v428
      %v607 = vpop.f32.mrf.mxu0
      %v608 = vadd.f32 0.0, %v607
      %v609 = vpop.f32.mrf.mxu0
      %v610 = vpop.f32.mrf.mxu0
      %v611 = vadd.f32 0.0, %v610
      %v612 = vpop.f32.mrf.mxu0
      %613 = vmatprep.mubr.bf16.mxu0 0
      %614 = vmatmul.mubr.bf16.gmra.mxu0 %v431
      %v615 = vpop.f32.mrf.mxu0
      %v616 = vadd.f32 0.0, %v615
      %v617 = vpop.f32.mrf.mxu0
      %v618 = vpop.f32.mrf.mxu0
      %v619 = vadd.f32 0.0, %v618
      %v620 = vpop.f32.mrf.mxu0
      %621 = vmatprep.mubr.bf16.mxu0 0
      %622 = vmatmul.mubr.bf16.gmra.mxu0 %v434
      %v623 = vpop.f32.mrf.mxu0
      %v624 = vadd.f32 0.0, %v623
      %v625 = vpop.f32.mrf.mxu0
      %v626 = vpop.f32.mrf.mxu0
      %v627 = vadd.f32 0.0, %v626
      %v628 = vpop.f32.mrf.mxu0
      %629 = vmatprep.mubr.bf16.mxu0 0
      %630 = vmatmul.mubr.bf16.gmra.mxu0 %v437
      %v631 = vpop.f32.mrf.mxu0
      %v632 = vadd.f32 0.0, %v631
      %v633 = vpop.f32.mrf.mxu0
      %v634 = vpop.f32.mrf.mxu0
      %v635 = vadd.f32 0.0, %v634
      %v636 = vpop.f32.mrf.mxu0
      %637 = vmatprep.mubr.bf16.mxu0 0
      %638 = vmatmul.mubr.bf16.gmra.mxu0 %v440
      %v639 = vpop.f32.mrf.mxu0
      %v640 = vadd.f32 0.0, %v639
      %v641 = vpop.f32.mrf.mxu0
      %v642 = vpop.f32.mrf.mxu0
      %v643 = vadd.f32 0.0, %v642
      %v644 = vpop.f32.mrf.mxu0
      %645 = vmatprep.mubr.bf16.mxu0 0
      %646 = vmatmul.mubr.bf16.gmra.mxu0 %v443
      %v647 = vpop.f32.mrf.mxu0
      %v648 = vadd.f32 0.0, %v647
      %v649 = vpop.f32.mrf.mxu0
      %v650 = vpop.f32.mrf.mxu0
      %v651 = vadd.f32 0.0, %v650
      %v652 = vpop.f32.mrf.mxu0
      %653 = vmatprep.mubr.bf16.mxu0 0
      %654 = vmatmul.mubr.bf16.gmra.mxu0 %v446
      %v655 = vpop.f32.mrf.mxu0
      %v656 = vadd.f32 0.0, %v655
      %v657 = vpop.f32.mrf.mxu0
      %v658 = vpop.f32.mrf.mxu0
      %v659 = vadd.f32 0.0, %v658
      %v660 = vpop.f32.mrf.mxu0
      %661 = vmatprep.mubr.bf16.mxu0 0
      %662 = vmatmul.mubr.bf16.gmra.mxu0 %v449
      %v663 = vpop.f32.mrf.mxu0
      %v664 = vadd.f32 0.0, %v663
      %v665 = vpop.f32.mrf.mxu0
      %v666 = vpop.f32.mrf.mxu0
      %v667 = vadd.f32 0.0, %v666
      %v668 = vpop.f32.mrf.mxu0
      %669 = vmatprep.mubr.bf16.mxu0 0
      %670 = vmatmul.mubr.bf16.gmra.mxu0 %v452
      %v671 = vpop.f32.mrf.mxu0
      %v672 = vadd.f32 0.0, %v671
      %v673 = vpop.f32.mrf.mxu0
      %v674 = vpop.f32.mrf.mxu0
      %v675 = vadd.f32 0.0, %v674
      %v676 = vpop.f32.mrf.mxu0
      %677 = vmatprep.mubr.bf16.mxu0 0
      %678 = vmatmul.mubr.bf16.gmra.mxu0 %v455
      %v679 = vpop.f32.mrf.mxu0
      %v680 = vadd.f32 0.0, %v679
      %v681 = vpop.f32.mrf.mxu0
      %v682 = vpop.f32.mrf.mxu0
      %v683 = vadd.f32 0.0, %v682
      %v684 = vpop.f32.mrf.mxu0
      %685 = vmatprep.mubr.bf16.mxu0 0
      %686 = vmatmul.mubr.bf16.gmra.mxu0 %v458
      %v687 = vpop.f32.mrf.mxu0
      %v688 = vadd.f32 0.0, %v687
      %v689 = vpop.f32.mrf.mxu0
      %v690 = vpop.f32.mrf.mxu0
      %v691 = vadd.f32 0.0, %v690
      %v692 = vpop.f32.mrf.mxu0
      %693 = vmatprep.mubr.bf16.mxu0 0
      %694 = vmatmul.mubr.bf16.gmra.mxu0 %v461
      %v695 = vpop.f32.mrf.mxu0
      %v696 = vadd.f32 0.0, %v695
      %v697 = vpop.f32.mrf.mxu0
      %v698 = vpop.f32.mrf.mxu0
      %v699 = vadd.f32 0.0, %v698
      %v700 = vpop.f32.mrf.mxu0
      %701 = vmatprep.mubr.bf16.mxu0 0
      %702 = vmatmul.mubr.bf16.gmra.mxu0 %v464
      %v703 = vpop.f32.mrf.mxu0
      %v704 = vadd.f32 0.0, %v703
      %v705 = vpop.f32.mrf.mxu0
      %v706 = vpop.f32.mrf.mxu0
      %v707 = vadd.f32 0.0, %v706
      %v708 = vpop.f32.mrf.mxu0
      %709 = vmatprep.mubr.bf16.mxu0 0
      %710 = vmatmul.mubr.bf16.gmra.mxu0 %v467
      %v711 = vpop.f32.mrf.mxu0
      %v712 = vadd.f32 0.0, %v711
      %v713 = vpop.f32.mrf.mxu0
      %v714 = vpop.f32.mrf.mxu0
      %v715 = vadd.f32 0.0, %v714
      %v716 = vpop.f32.mrf.mxu0
      %717 = vmatprep.mubr.bf16.mxu0 0
      %718 = vmatmul.mubr.bf16.gmra.mxu0 %v470
      %v719 = vpop.f32.mrf.mxu0
      %v720 = vadd.f32 0.0, %v719
      %v721 = vpop.f32.mrf.mxu0
      %v722 = vpop.f32.mrf.mxu0
      %v723 = vadd.f32 0.0, %v722
      %v724 = vpop.f32.mrf.mxu0
      %725 = vmatprep.mubr.bf16.mxu0 0
      %726 = vmatmul.mubr.bf16.gmra.mxu0 %v473
      %v727 = vpop.f32.mrf.mxu0
      %v728 = vadd.f32 0.0, %v727
      %v729 = vpop.f32.mrf.mxu0
      %v730 = vpop.f32.mrf.mxu0
      %v731 = vadd.f32 0.0, %v730
      %v732 = vpop.f32.mrf.mxu0
      %733 = vmatprep.mubr.bf16.mxu0 0
      %734 = vmatmul.mubr.bf16.gmra.mxu0 %v476
      %v735 = vpop.f32.mrf.mxu0
      %v736 = vadd.f32 0.0, %v735
      %v737 = vpop.f32.mrf.mxu0
      %v738 = vpop.f32.mrf.mxu0
      %v739 = vadd.f32 0.0, %v738
      %v740 = vpop.f32.mrf.mxu0
      %741 = vmatprep.mubr.bf16.mxu0 0
      %742 = vmatmul.mubr.bf16.gmra.mxu0 %v479
      %v743 = vpop.f32.mrf.mxu0
      %v744 = vadd.f32 0.0, %v743
      %v745 = vpop.f32.mrf.mxu0
      %v746 = vpop.f32.mrf.mxu0
      %v747 = vadd.f32 0.0, %v746
      %v748 = vpop.f32.mrf.mxu0
      %749 = vmatprep.mubr.bf16.mxu0 0
      %750 = vmatmul.mubr.bf16.gmra.mxu0 %v482
      %v751 = vpop.f32.mrf.mxu0
      %v752 = vadd.f32 0.0, %v751
      %v753 = vpop.f32.mrf.mxu0
      %v754 = vpop.f32.mrf.mxu0
      %v755 = vadd.f32 0.0, %v754
      %v756 = vpop.f32.mrf.mxu0
      %757 = vmatprep.mubr.bf16.mxu0 0
      %758 = vmatmul.mubr.bf16.gmra.mxu0 %v485
      %v759 = vpop.f32.mrf.mxu0
      %v760 = vadd.f32 0.0, %v759
      %v761 = vpop.f32.mrf.mxu0
      %v762 = vpop.f32.mrf.mxu0
      %v763 = vadd.f32 0.0, %v762
      %v764 = vpop.f32.mrf.mxu0
      %765 = vmatprep.mubr.bf16.mxu0 0
      %766 = vmatmul.mubr.bf16.gmra.mxu0 %v488
      %v767 = vpop.f32.mrf.mxu0
      %v768 = vadd.f32 0.0, %v767
      %v769 = vpop.f32.mrf.mxu0
      %v770 = vpop.f32.mrf.mxu0
      %v771 = vadd.f32 0.0, %v770
      %v772 = vpop.f32.mrf.mxu0
      %773 = vmatprep.mubr.bf16.mxu0 0
      %774 = vmatmul.mubr.bf16.gmra.mxu0 %v491
      %v775 = vpop.f32.mrf.mxu0
      %v776 = vadd.f32 0.0, %v775
      %v777 = vpop.f32.mrf.mxu0
      %v778 = vpop.f32.mrf.mxu0
      %v779 = vadd.f32 0.0, %v778
      %v780 = vpop.f32.mrf.mxu0
      %781 = vdwg.mxu0
      %vm782 = vcmp.gt.f32.partialorder %v528, 0.0
      %vm783 = vcmp.gt.f32.partialorder %v531, 0.0
      %vm784 = vcmp.gt.f32.partialorder %v536, 0.0
      %vm785 = vcmp.gt.f32.partialorder %v539, 0.0
      %vm786 = vcmp.gt.f32.partialorder %v544, 0.0
      %vm787 = vcmp.gt.f32.partialorder %v547, 0.0
      %vm788 = vcmp.gt.f32.partialorder %v552, 0.0
      %vm789 = vcmp.gt.f32.partialorder %v555, 0.0
      %vm790 = vcmp.gt.f32.partialorder %v560, 0.0
      %vm791 = vcmp.gt.f32.partialorder %v563, 0.0
      %vm792 = vcmp.gt.f32.partialorder %v568, 0.0
      %vm793 = vcmp.gt.f32.partialorder %v571, 0.0
      %vm794 = vcmp.gt.f32.partialorder %v576, 0.0
      %vm795 = vcmp.gt.f32.partialorder %v579, 0.0
      %vm796 = vcmp.gt.f32.partialorder %v584, 0.0
      %vm797 = vcmp.gt.f32.partialorder %v587, 0.0
      %vm798 = vcmp.gt.f32.partialorder %v592, 0.0
      %vm799 = vcmp.gt.f32.partialorder %v595, 0.0
      %vm800 = vcmp.gt.f32.partialorder %v600, 0.0
      %vm801 = vcmp.gt.f32.partialorder %v603, 0.0
      %vm802 = vcmp.gt.f32.partialorder %v608, 0.0
      %vm803 = vcmp.gt.f32.partialorder %v611, 0.0
      %vm804 = vcmp.gt.f32.partialorder %v616, 0.0
      %vm805 = vcmp.gt.f32.partialorder %v619, 0.0
      %vm806 = vcmp.gt.f32.partialorder %v624, 0.0
      %vm807 = vcmp.gt.f32.partialorder %v627, 0.0
      %vm808 = vcmp.gt.f32.partialorder %v632, 0.0
      %vm809 = vcmp.gt.f32.partialorder %v635, 0.0
      %vm810 = vcmp.gt.f32.partialorder %v640, 0.0
      %vm811 = vcmp.gt.f32.partialorder %v643, 0.0
      %vm812 = vcmp.gt.f32.partialorder %v648, 0.0
      %vm813 = vcmp.gt.f32.partialorder %v651, 0.0
      %vm814 = vcmp.gt.f32.partialorder %v656, 0.0
      %vm815 = vcmp.gt.f32.partialorder %v659, 0.0
      %vm816 = vcmp.gt.f32.partialorder %v664, 0.0
      %vm817 = vcmp.gt.f32.partialorder %v667, 0.0
      %vm818 = vcmp.gt.f32.partialorder %v672, 0.0
      %vm819 = vcmp.gt.f32.partialorder %v675, 0.0
      %vm820 = vcmp.gt.f32.partialorder %v680, 0.0
      %vm821 = vcmp.gt.f32.partialorder %v683, 0.0
      %vm822 = vcmp.gt.f32.partialorder %v688, 0.0
      %vm823 = vcmp.gt.f32.partialorder %v691, 0.0
      %vm824 = vcmp.gt.f32.partialorder %v696, 0.0
      %vm825 = vcmp.gt.f32.partialorder %v699, 0.0
      %vm826 = vcmp.gt.f32.partialorder %v704, 0.0
      %vm827 = vcmp.gt.f32.partialorder %v707, 0.0
      %vm828 = vcmp.gt.f32.partialorder %v712, 0.0
      %vm829 = vcmp.gt.f32.partialorder %v715, 0.0
      %vm830 = vcmp.gt.f32.partialorder %v720, 0.0
      %vm831 = vcmp.gt.f32.partialorder %v723, 0.0
      %vm832 = vcmp.gt.f32.partialorder %v728, 0.0
      %vm833 = vcmp.gt.f32.partialorder %v731, 0.0
      %vm834 = vcmp.gt.f32.partialorder %v736, 0.0
      %vm835 = vcmp.gt.f32.partialorder %v739, 0.0
      %vm836 = vcmp.gt.f32.partialorder %v744, 0.0
      %vm837 = vcmp.gt.f32.partialorder %v747, 0.0
      %vm838 = vcmp.gt.f32.partialorder %v752, 0.0
      %vm839 = vcmp.gt.f32.partialorder %v755, 0.0
      %vm840 = vcmp.gt.f32.partialorder %v760, 0.0
      %vm841 = vcmp.gt.f32.partialorder %v763, 0.0
      %vm842 = vcmp.gt.f32.partialorder %v768, 0.0
      %vm843 = vcmp.gt.f32.partialorder %v771, 0.0
      %vm844 = vcmp.gt.f32.partialorder %v776, 0.0
      %vm845 = vcmp.gt.f32.partialorder %v779, 0.0
      %v846 = vmul.f32 %v528, 1.442695
      %v847 = vpow.pop %v846
      %v848 = vmul.f32 %v531, 1.442695
      %v849 = vpow.pop %v848
      %v850 = vmul.f32 %v536, 1.442695
      %v851 = vpow.pop %v850
      %v852 = vmul.f32 %v539, 1.442695
      %v853 = vpow.pop %v852
      %v854 = vmul.f32 %v544, 1.442695
      %v855 = vpow.pop %v854
      %v856 = vmul.f32 %v547, 1.442695
      %v857 = vpow.pop %v856
      %v858 = vmul.f32 %v552, 1.442695
      %v859 = vpow.pop %v858
      %v860 = vmul.f32 %v555, 1.442695
      %v861 = vpow.pop %v860
      %v862 = vmul.f32 %v560, 1.442695
      %v863 = vpow.pop %v862
      %v864 = vmul.f32 %v563, 1.442695
      %v865 = vpow.pop %v864
      %v866 = vmul.f32 %v568, 1.442695
      %v867 = vpow.pop %v866
      %v868 = vmul.f32 %v571, 1.442695
      %v869 = vpow.pop %v868
      %v870 = vmul.f32 %v576, 1.442695
      %v871 = vpow.pop %v870
      %v872 = vmul.f32 %v579, 1.442695
      %v873 = vpow.pop %v872
      %v874 = vmul.f32 %v584, 1.442695
      %v875 = vpow.pop %v874
      %v876 = vmul.f32 %v587, 1.442695
      %v877 = vpow.pop %v876
      %v878 = vmul.f32 %v592, 1.442695
      %v879 = vpow.pop %v878
      %v880 = vmul.f32 %v595, 1.442695
      %v881 = vpow.pop %v880
      %v882 = vmul.f32 %v600, 1.442695
      %v883 = vpow.pop %v882
      %v884 = vmul.f32 %v603, 1.442695
      %v885 = vpow.pop %v884
      %v886 = vmul.f32 %v608, 1.442695
      %v887 = vpow.pop %v886
      %v888 = vmul.f32 %v611, 1.442695
      %v889 = vpow.pop %v888
      %v890 = vmul.f32 %v616, 1.442695
      %v891 = vpow.pop %v890
      %v892 = vmul.f32 %v619, 1.442695
      %v893 = vpow.pop %v892
      %v894 = vmul.f32 %v624, 1.442695
      %v895 = vpow.pop %v894
      %v896 = vmul.f32 %v627, 1.442695
      %v897 = vpow.pop %v896
      %v898 = vmul.f32 %v632, 1.442695
      %v899 = vpow.pop %v898
      %v900 = vmul.f32 %v635, 1.442695
      %v901 = vpow.pop %v900
      %v902 = vmul.f32 %v640, 1.442695
      %v903 = vpow.pop %v902
      %v904 = vmul.f32 %v643, 1.442695
      %v905 = vpow.pop %v904
      %v906 = vmul.f32 %v648, 1.442695
      %v907 = vpow.pop %v906
      %v908 = vmul.f32 %v651, 1.442695
      %v909 = vpow.pop %v908
      %v910 = vmul.f32 %v656, 1.442695
      %v911 = vpow.pop %v910
      %v912 = vmul.f32 %v659, 1.442695
      %v913 = vpow.pop %v912
      %v914 = vmul.f32 %v664, 1.442695
      %v915 = vpow.pop %v914
      %v916 = vmul.f32 %v667, 1.442695
      %v917 = vpow.pop %v916
      %v918 = vmul.f32 %v672, 1.442695
      %v919 = vpow.pop %v918
      %v920 = vmul.f32 %v675, 1.442695
      %v921 = vpow.pop %v920
      %v922 = vmul.f32 %v680, 1.442695
      %v923 = vpow.pop %v922
      %v924 = vmul.f32 %v683, 1.442695
      %v925 = vpow.pop %v924
      %v926 = vmul.f32 %v688, 1.442695
      %v927 = vpow.pop %v926
      %v928 = vmul.f32 %v691, 1.442695
      %v929 = vpow.pop %v928
      %v930 = vmul.f32 %v696, 1.442695
      %v931 = vpow.pop %v930
      %v932 = vmul.f32 %v699, 1.442695
      %v933 = vpow.pop %v932
      %v934 = vmul.f32 %v704, 1.442695
      %v935 = vpow.pop %v934
      %v936 = vmul.f32 %v707, 1.442695
      %v937 = vpow.pop %v936
      %v938 = vmul.f32 %v712, 1.442695
      %v939 = vpow.pop %v938
      %v940 = vmul.f32 %v715, 1.442695
      %v941 = vpow.pop %v940
      %v942 = vmul.f32 %v720, 1.442695
      %v943 = vpow.pop %v942
      %v944 = vmul.f32 %v723, 1.442695
      %v945 = vpow.pop %v944
      %v946 = vmul.f32 %v728, 1.442695
      %v947 = vpow.pop %v946
      %v948 = vmul.f32 %v731, 1.442695
      %v949 = vpow.pop %v948
      %v950 = vmul.f32 %v736, 1.442695
      %v951 = vpow.pop %v950
      %v952 = vmul.f32 %v739, 1.442695
      %v953 = vpow.pop %v952
      %v954 = vmul.f32 %v744, 1.442695
      %v955 = vpow.pop %v954
      %v956 = vmul.f32 %v747, 1.442695
      %v957 = vpow.pop %v956
      %v958 = vmul.f32 %v752, 1.442695
      %v959 = vpow.pop %v958
      %v960 = vmul.f32 %v755, 1.442695
      %v961 = vpow.pop %v960
      %v962 = vmul.f32 %v760, 1.442695
      %v963 = vpow.pop %v962
      %v964 = vmul.f32 %v763, 1.442695
      %v965 = vpow.pop %v964
      %v966 = vmul.f32 %v768, 1.442695
      %v967 = vpow.pop %v966
      %v968 = vmul.f32 %v771, 1.442695
      %v969 = vpow.pop %v968
      %v970 = vmul.f32 %v776, 1.442695
      %v971 = vpow.pop %v970
      %v972 = vmul.f32 %v779, 1.442695
      %v973 = vpow.pop %v972
      %v974 = vsub.f32 %v847, 1.0
      %v975 = vsub.f32 %v849, 1.0
      %v976 = vsub.f32 %v851, 1.0
      %v977 = vsub.f32 %v853, 1.0
      %v978 = vsub.f32 %v855, 1.0
      %v979 = vsub.f32 %v857, 1.0
      %v980 = vsub.f32 %v859, 1.0
      %v981 = vsub.f32 %v861, 1.0
      %v982 = vsub.f32 %v863, 1.0
      %v983 = vsub.f32 %v865, 1.0
      %v984 = vsub.f32 %v867, 1.0
      %v985 = vsub.f32 %v869, 1.0
      %v986 = vsub.f32 %v871, 1.0
      %v987 = vsub.f32 %v873, 1.0
      %v988 = vsub.f32 %v875, 1.0
      %v989 = vsub.f32 %v877, 1.0
      %v990 = vsub.f32 %v879, 1.0
      %v991 = vsub.f32 %v881, 1.0
      %v992 = vsub.f32 %v883, 1.0
      %v993 = vsub.f32 %v885, 1.0
      %v994 = vsub.f32 %v887, 1.0
      %v995 = vsub.f32 %v889, 1.0
      %v996 = vsub.f32 %v891, 1.0
      %v997 = vsub.f32 %v893, 1.0
      %v998 = vsub.f32 %v895, 1.0
      %v999 = vsub.f32 %v897, 1.0
      %v1000 = vsub.f32 %v899, 1.0
      %v1001 = vsub.f32 %v901, 1.0
      %v1002 = vsub.f32 %v903, 1.0
      %v1003 = vsub.f32 %v905, 1.0
      %v1004 = vsub.f32 %v907, 1.0
      %v1005 = vsub.f32 %v909, 1.0
      %v1006 = vsub.f32 %v911, 1.0
      %v1007 = vsub.f32 %v913, 1.0
      %v1008 = vsub.f32 %v915, 1.0
      %v1009 = vsub.f32 %v917, 1.0
      %v1010 = vsub.f32 %v919, 1.0
      %v1011 = vsub.f32 %v921, 1.0
      %v1012 = vsub.f32 %v923, 1.0
      %v1013 = vsub.f32 %v925, 1.0
      %v1014 = vsub.f32 %v927, 1.0
      %v1015 = vsub.f32 %v929, 1.0
      %v1016 = vsub.f32 %v931, 1.0
      %v1017 = vsub.f32 %v933, 1.0
      %v1018 = vsub.f32 %v935, 1.0
      %v1019 = vsub.f32 %v937, 1.0
      %v1020 = vsub.f32 %v939, 1.0
      %v1021 = vsub.f32 %v941, 1.0
      %v1022 = vsub.f32 %v943, 1.0
      %v1023 = vsub.f32 %v945, 1.0
      %v1024 = vsub.f32 %v947, 1.0
      %v1025 = vsub.f32 %v949, 1.0
      %v1026 = vsub.f32 %v951, 1.0
      %v1027 = vsub.f32 %v953, 1.0
      %v1028 = vsub.f32 %v955, 1.0
      %v1029 = vsub.f32 %v957, 1.0
      %v1030 = vsub.f32 %v959, 1.0
      %v1031 = vsub.f32 %v961, 1.0
      %v1032 = vsub.f32 %v963, 1.0
      %v1033 = vsub.f32 %v965, 1.0
      %v1034 = vsub.f32 %v967, 1.0
      %v1035 = vsub.f32 %v969, 1.0
      %v1036 = vsub.f32 %v971, 1.0
      %v1037 = vsub.f32 %v973, 1.0
      %v1038 = vmul.f32 %v974, 0.2
      %v1039 = vmul.f32 %v975, 0.2
      %v1040 = vmul.f32 %v976, 0.2
      %v1041 = vmul.f32 %v977, 0.2
      %v1042 = vmul.f32 %v978, 0.2
      %v1043 = vmul.f32 %v979, 0.2
      %v1044 = vmul.f32 %v980, 0.2
      %v1045 = vmul.f32 %v981, 0.2
      %v1046 = vmul.f32 %v982, 0.2
      %v1047 = vmul.f32 %v983, 0.2
      %v1048 = vmul.f32 %v984, 0.2
      %v1049 = vmul.f32 %v985, 0.2
      %v1050 = vmul.f32 %v986, 0.2
      %v1051 = vmul.f32 %v987, 0.2
      %v1052 = vmul.f32 %v988, 0.2
      %v1053 = vmul.f32 %v989, 0.2
      %v1054 = vmul.f32 %v990, 0.2
      %v1055 = vmul.f32 %v991, 0.2
      %v1056 = vmul.f32 %v992, 0.2
      %v1057 = vmul.f32 %v993, 0.2
      %v1058 = vmul.f32 %v994, 0.2
      %v1059 = vmul.f32 %v995, 0.2
      %v1060 = vmul.f32 %v996, 0.2
      %v1061 = vmul.f32 %v997, 0.2
      %v1062 = vmul.f32 %v998, 0.2
      %v1063 = vmul.f32 %v999, 0.2
      %v1064 = vmul.f32 %v1000, 0.2
      %v1065 = vmul.f32 %v1001, 0.2
      %v1066 = vmul.f32 %v1002, 0.2
      %v1067 = vmul.f32 %v1003, 0.2
      %v1068 = vmul.f32 %v1004, 0.2
      %v1069 = vmul.f32 %v1005, 0.2
      %v1070 = vmul.f32 %v1006, 0.2
      %v1071 = vmul.f32 %v1007, 0.2
      %v1072 = vmul.f32 %v1008, 0.2
      %v1073 = vmul.f32 %v1009, 0.2
      %v1074 = vmul.f32 %v1010, 0.2
      %v1075 = vmul.f32 %v1011, 0.2
      %v1076 = vmul.f32 %v1012, 0.2
      %v1077 = vmul.f32 %v1013, 0.2
      %v1078 = vmul.f32 %v1014, 0.2
      %v1079 = vmul.f32 %v1015, 0.2
      %v1080 = vmul.f32 %v1016, 0.2
      %v1081 = vmul.f32 %v1017, 0.2
      %v1082 = vmul.f32 %v1018, 0.2
      %v1083 = vmul.f32 %v1019, 0.2
      %v1084 = vmul.f32 %v1020, 0.2
      %v1085 = vmul.f32 %v1021, 0.2
      %v1086 = vmul.f32 %v1022, 0.2
      %v1087 = vmul.f32 %v1023, 0.2
      %v1088 = vmul.f32 %v1024, 0.2
      %v1089 = vmul.f32 %v1025, 0.2
      %v1090 = vmul.f32 %v1026, 0.2
      %v1091 = vmul.f32 %v1027, 0.2
      %v1092 = vmul.f32 %v1028, 0.2
      %v1093 = vmul.f32 %v1029, 0.2
      %v1094 = vmul.f32 %v1030, 0.2
      %v1095 = vmul.f32 %v1031, 0.2
      %v1096 = vmul.f32 %v1032, 0.2
      %v1097 = vmul.f32 %v1033, 0.2
      %v1098 = vmul.f32 %v1034, 0.2
      %v1099 = vmul.f32 %v1035, 0.2
      %v1100 = vmul.f32 %v1036, 0.2
      %v1101 = vmul.f32 %v1037, 0.2
      %v1102 = vsel %vm782, %v528, %v1038
      %v1103 = vsel %vm783, %v531, %v1039
      %v1104 = vsel %vm784, %v536, %v1040
      %v1105 = vsel %vm785, %v539, %v1041
      %v1106 = vsel %vm786, %v544, %v1042
      %v1107 = vsel %vm787, %v547, %v1043
      %v1108 = vsel %vm788, %v552, %v1044
      %v1109 = vsel %vm789, %v555, %v1045
      %v1110 = vsel %vm790, %v560, %v1046
      %v1111 = vsel %vm791, %v563, %v1047
      %v1112 = vsel %vm792, %v568, %v1048
      %v1113 = vsel %vm793, %v571, %v1049
      %v1114 = vsel %vm794, %v576, %v1050
      %v1115 = vsel %vm795, %v579, %v1051
      %v1116 = vsel %vm796, %v584, %v1052
      %v1117 = vsel %vm797, %v587, %v1053
      %v1118 = vsel %vm798, %v592, %v1054
      %v1119 = vsel %vm799, %v595, %v1055
      %v1120 = vsel %vm800, %v600, %v1056
      %v1121 = vsel %vm801, %v603, %v1057
      %v1122 = vsel %vm802, %v608, %v1058
      %v1123 = vsel %vm803, %v611, %v1059
      %v1124 = vsel %vm804, %v616, %v1060
      %v1125 = vsel %vm805, %v619, %v1061
      %v1126 = vsel %vm806, %v624, %v1062
      %v1127 = vsel %vm807, %v627, %v1063
      %v1128 = vsel %vm808, %v632, %v1064
      %v1129 = vsel %vm809, %v635, %v1065
      %v1130 = vsel %vm810, %v640, %v1066
      %v1131 = vsel %vm811, %v643, %v1067
      %v1132 = vsel %vm812, %v648, %v1068
      %v1133 = vsel %vm813, %v651, %v1069
      %v1134 = vsel %vm814, %v656, %v1070
      %v1135 = vsel %vm815, %v659, %v1071
      %v1136 = vsel %vm816, %v664, %v1072
      %v1137 = vsel %vm817, %v667, %v1073
      %v1138 = vsel %vm818, %v672, %v1074
      %v1139 = vsel %vm819, %v675, %v1075
      %v1140 = vsel %vm820, %v680, %v1076
      %v1141 = vsel %vm821, %v683, %v1077
      %v1142 = vsel %vm822, %v688, %v1078
      %v1143 = vsel %vm823, %v691, %v1079
      %v1144 = vsel %vm824, %v696, %v1080
      %v1145 = vsel %vm825, %v699, %v1081
      %v1146 = vsel %vm826, %v704, %v1082
      %v1147 = vsel %vm827, %v707, %v1083
      %v1148 = vsel %vm828, %v712, %v1084
      %v1149 = vsel %vm829, %v715, %v1085
      %v1150 = vsel %vm830, %v720, %v1086
      %v1151 = vsel %vm831, %v723, %v1087
      %v1152 = vsel %vm832, %v728, %v1088
      %v1153 = vsel %vm833, %v731, %v1089
      %v1154 = vsel %vm834, %v736, %v1090
      %v1155 = vsel %vm835, %v739, %v1091
      %v1156 = vsel %vm836, %v744, %v1092
      %v1157 = vsel %vm837, %v747, %v1093
      %v1158 = vsel %vm838, %v752, %v1094
      %v1159 = vsel %vm839, %v755, %v1095
      %v1160 = vsel %vm840, %v760, %v1096
      %v1161 = vsel %vm841, %v763, %v1097
      %v1162 = vsel %vm842, %v768, %v1098
      %v1163 = vsel %vm843, %v771, %v1099
      %v1164 = vsel %vm844, %v776, %v1100
      %v1165 = vsel %vm845, %v779, %v1101
      %1166 = vst [vmem:[%s145] sm:$0xff] %v1102
      %1167 = vst [vmem:[%s145 + $0x8] sm:$0xff] %v1103
      %1168 = vst [vmem:[%s145 + $0x10] sm:$0xff] %v1104
      %1169 = vst [vmem:[%s145 + $0x18] sm:$0xff] %v1105
      %1170 = vst [vmem:[%s145 + $0x20] sm:$0xff] %v1106
      %1171 = vst [vmem:[%s145 + $0x28] sm:$0xff] %v1107
      %1172 = vst [vmem:[%s145 + $0x30] sm:$0xff] %v1108
      %1173 = vst [vmem:[%s145 + $0x38] sm:$0xff] %v1109
      %1174 = vst [vmem:[%s145 + $0x40] sm:$0xff] %v1110
      %1175 = vst [vmem:[%s145 + $0x48] sm:$0xff] %v1111
      %1176 = vst [vmem:[%s145 + $0x50] sm:$0xff] %v1112
      %1177 = vst [vmem:[%s145 + $0x58] sm:$0xff] %v1113
      %1178 = vst [vmem:[%s145 + $0x60] sm:$0xff] %v1114
      %1179 = vst [vmem:[%s145 + $0x68] sm:$0xff] %v1115
      %1180 = vst [vmem:[%s145 + $0x70] sm:$0xff] %v1116
      %1181 = vst [vmem:[%s145 + $0x78] sm:$0xff] %v1117
      %1182 = vst [vmem:[%s145 + $0x80] sm:$0xff] %v1118
      %1183 = vst [vmem:[%s145 + $0x88] sm:$0xff] %v1119
      %1184 = vst [vmem:[%s145 + $0x90] sm:$0xff] %v1120
      %1185 = vst [vmem:[%s145 + $0x98] sm:$0xff] %v1121
      %1186 = vst [vmem:[%s145 + $0xa0] sm:$0xff] %v1122
      %1187 = vst [vmem:[%s145 + $0xa8] sm:$0xff] %v1123
      %1188 = vst [vmem:[%s145 + $0xb0] sm:$0xff] %v1124
      %1189 = vst [vmem:[%s145 + $0xb8] sm:$0xff] %v1125
      %1190 = vst [vmem:[%s145 + $0xc0] sm:$0xff] %v1126
      %1191 = vst [vmem:[%s145 + $0xc8] sm:$0xff] %v1127
      %1192 = vst [vmem:[%s145 + $0xd0] sm:$0xff] %v1128
      %1193 = vst [vmem:[%s145 + $0xd8] sm:$0xff] %v1129
      %1194 = vst [vmem:[%s145 + $0xe0] sm:$0xff] %v1130
      %1195 = vst [vmem:[%s145 + $0xe8] sm:$0xff] %v1131
      %1196 = vst [vmem:[%s145 + $0xf0] sm:$0xff] %v1132
      %1197 = vst [vmem:[%s145 + $0xf8] sm:$0xff] %v1133
      %1198 = vst [vmem:[%s145 + $0x100] sm:$0xff] %v1134
      %1199 = vst [vmem:[%s145 + $0x108] sm:$0xff] %v1135
      %1200 = vst [vmem:[%s145 + $0x110] sm:$0xff] %v1136
      %1201 = vst [vmem:[%s145 + $0x118] sm:$0xff] %v1137
      %1202 = vst [vmem:[%s145 + $0x120] sm:$0xff] %v1138
      %1203 = vst [vmem:[%s145 + $0x128] sm:$0xff] %v1139
      %1204 = vst [vmem:[%s145 + $0x130] sm:$0xff] %v1140
      %1205 = vst [vmem:[%s145 + $0x138] sm:$0xff] %v1141
      %1206 = vst [vmem:[%s145 + $0x140] sm:$0xff] %v1142
      %1207 = vst [vmem:[%s145 + $0x148] sm:$0xff] %v1143
      %1208 = vst [vmem:[%s145 + $0x150] sm:$0xff] %v1144
      %1209 = vst [vmem:[%s145 + $0x158] sm:$0xff] %v1145
      %1210 = vst [vmem:[%s145 + $0x160] sm:$0xff] %v1146
      %1211 = vst [vmem:[%s145 + $0x168] sm:$0xff] %v1147
      %1212 = vst [vmem:[%s145 + $0x170] sm:$0xff] %v1148
      %1213 = vst [vmem:[%s145 + $0x178] sm:$0xff] %v1149
      %1214 = vst [vmem:[%s145 + $0x180] sm:$0xff] %v1150
      %1215 = vst [vmem:[%s145 + $0x188] sm:$0xff] %v1151
      %1216 = vst [vmem:[%s145 + $0x190] sm:$0xff] %v1152
      %1217 = vst [vmem:[%s145 + $0x198] sm:$0xff] %v1153
      %1218 = vst [vmem:[%s145 + $0x1a0] sm:$0xff] %v1154
      %1219 = vst [vmem:[%s145 + $0x1a8] sm:$0xff] %v1155
      %1220 = vst [vmem:[%s145 + $0x1b0] sm:$0xff] %v1156
      %1221 = vst [vmem:[%s145 + $0x1b8] sm:$0xff] %v1157
      %1222 = vst [vmem:[%s145 + $0x1c0] sm:$0xff] %v1158
      %1223 = vst [vmem:[%s145 + $0x1c8] sm:$0xff] %v1159
      %1224 = vst [vmem:[%s145 + $0x1d0] sm:$0xff] %v1160
      %1225 = vst [vmem:[%s145 + $0x1d8] sm:$0xff] %v1161
      %1226 = vst [vmem:[%s145 + $0x1e0] sm:$0xff] %v1162
      %1227 = vst [vmem:[%s145 + $0x1e8] sm:$0xff] %v1163
      %1228 = vst [vmem:[%s145 + $0x1f0] sm:$0xff] %v1164
      %1229 = vst [vmem:[%s145 + $0x1f8] sm:$0xff] %v1165
      %s1230 = smul.u32 64, %s13
      %p1231 = scmp.lt.s32.totalorder %s1230, 255
      %s1232 = scalar_select %p1231, %s1230, 255
      %s1233 = smul.addr %s1232, 8
      %s1234 = scalar_lea.vmem %s2, %s1233
      // Predicated region
      $region29: #{_lambda_.5} parent=27 // pred_check
        %p1235 = pneg %p78
      $region30: #{_lambda_.5} parent=27 // pred_check_branch
        %1237 = sbr.rel (%p1235) target = $region32
      $region31: #{_lambda_.5} parent=27 // pred_region
        %s1238 = smul.u32 64, %s13
      $region32: #{_lambda_.5} parent=27 // pred_fallthru
        _
    $region28: #{_lambda_.5} parent=5 // pred_fallthru
      _
    %p1239 = scmp.le.s32.totalorder 2, %s8
    // Predicated region
    $region33: #{_lambda_.5} parent=5 // pred_check
      %p1240 = pneg %p1239
    $region34: #{_lambda_.5} parent=5 // pred_check_branch
      %1242 = sbr.rel (%p1240) target = $region36
    $region35: #{_lambda_.5} parent=5 // pred_region
      %s1243 = ssub.s32 %s8, 2
      // Predicated region
      $region37: #{_lambda_.5} parent=35 // pred_check
        %p1244 = pneg %p84
      $region38: #{_lambda_.5} parent=35 // pred_check_branch
        %1246 = sbr.rel (%p1244) target = $region40
      $region39: #{_lambda_.5} parent=35 // pred_region
        %s1247 = smul.u32 64, %s14
        %p1248 = scmp.lt.s32.totalorder %s1247, 255
        %s1249 = scalar_select %p1248, %s1247, 255
        %s1250 = smul.addr %s1249, 8
        %s1251 = scalar_lea.vmem %s2, %s1250
      $region40: #{_lambda_.5} parent=35 // pred_fallthru
        _
    $region36: #{_lambda_.5} parent=5 // pred_fallthru
      _
  $region6: #{_lambda_.5} parent=0 // loop_footer
    %s12 = sadd.s32 1, %s8
  $region7: #{_lambda_.5} parent=0 // loop_footer_branch
    %7 = sbr.rel target = $region3
  $region8: #{_lambda_.5} parent=0 // loop_exit
    _

// kernel: _lambda_.6
$region0: #{_lambda_.6}
  #allocation0 [shape = 'u32[]', space=smem, size = 0x4, offset = 0x4, fixed_abs, tag = 'smem constant byte address 0x4 - core index']
  #allocation1 [shape = 'u32[144,128]{1,0:T(1,128)}', space=vmem, size = 0x12000, scoped, tag = 'internal scratch']
  %s0 = inlined_call_operand.vmem [shape: bf16[512,128], index: 0, kind: input, shape index: {}]
  %s1 = inlined_call_operand.vmem [shape: bf16[128,128], index: 1, kind: input, shape index: {}]
  %s2 = inlined_call_operand.vmem [shape: f32[512,128], index: 2, kind: output, shape index: {}]
  %s3 = sld [smem:[#allocation0]]
  $region22: #{_lambda_.6} parent=0
    _
  %s5 = ssub.s32 1, %s3
  %s6 = scalar_select 0, %s5, %s3
  // Predicated region
  $region2: #{_lambda_.6} parent=0 // pred_check
    _
  $region3: #{_lambda_.6} parent=0 // pred_check_branch
    %8 = sbr.rel (0) target = $region5
  $region4: #{_lambda_.6} parent=0 // pred_region
    _
  $region5: #{_lambda_.6} parent=0 // pred_fallthru
    _
  // Predicated region
  $region6: #{_lambda_.6} parent=0 // pred_check
    _
  $region7: #{_lambda_.6} parent=0 // pred_check_branch
    %10 = sbr.rel (0) target = $region9
  $region8: #{_lambda_.6} parent=0 // pred_region
    _
  $region9: #{_lambda_.6} parent=0 // pred_fallthru
    _
  %v12 = vld [vmem:[%s0] sm:$0xf]
  %v13 = vld [vmem:[%s0 + $0x4] sm:$0xf]
  %v14 = vld [vmem:[%s0 + $0x8] sm:$0xf]
  %v15 = vld [vmem:[%s0 + $0xc] sm:$0xf]
  %v16 = vld [vmem:[%s0 + $0x10] sm:$0xf]
  %v17 = vld [vmem:[%s0 + $0x14] sm:$0xf]
  %v18 = vld [vmem:[%s0 + $0x18] sm:$0xf]
  %v19 = vld [vmem:[%s0 + $0x1c] sm:$0xf]
  %v20 = vld [vmem:[%s0 + $0x20] sm:$0xf]
  %v21 = vld [vmem:[%s0 + $0x24] sm:$0xf]
  %v22 = vld [vmem:[%s0 + $0x28] sm:$0xf]
  %v23 = vld [vmem:[%s0 + $0x2c] sm:$0xf]
  %v24 = vld [vmem:[%s0 + $0x30] sm:$0xf]
  %v25 = vld [vmem:[%s0 + $0x34] sm:$0xf]
  %v26 = vld [vmem:[%s0 + $0x38] sm:$0xf]
  %v27 = vld [vmem:[%s0 + $0x3c] sm:$0xf]
  %v28 = vld [vmem:[%s0 + $0x40] sm:$0xf]
  %v29 = vld [vmem:[%s0 + $0x44] sm:$0xf]
  %v30 = vld [vmem:[%s0 + $0x48] sm:$0xf]
  %v31 = vld [vmem:[%s0 + $0x4c] sm:$0xf]
  %v32 = vld [vmem:[%s0 + $0x50] sm:$0xf]
  %v33 = vld [vmem:[%s0 + $0x54] sm:$0xf]
  %v34 = vld [vmem:[%s0 + $0x58] sm:$0xf]
  %v35 = vld [vmem:[%s0 + $0x5c] sm:$0xf]
  %v36 = vld [vmem:[%s0 + $0x60] sm:$0xf]
  %v37 = vld [vmem:[%s0 + $0x64] sm:$0xf]
  %v38 = vld [vmem:[%s0 + $0x68] sm:$0xf]
  %v39 = vld [vmem:[%s0 + $0x6c] sm:$0xf]
  %v40 = vld [vmem:[%s0 + $0x70] sm:$0xf]
  %v41 = vld [vmem:[%s0 + $0x74] sm:$0xf]
  %v42 = vld [vmem:[%s0 + $0x78] sm:$0xf]
  %v43 = vld [vmem:[%s0 + $0x7c] sm:$0xf]
  %v44 = vld [vmem:[%s0 + $0x80] sm:$0xf]
  %v45 = vld [vmem:[%s0 + $0x84] sm:$0xf]
  %v46 = vld [vmem:[%s0 + $0x88] sm:$0xf]
  %v47 = vld [vmem:[%s0 + $0x8c] sm:$0xf]
  %v48 = vld [vmem:[%s0 + $0x90] sm:$0xf]
  %v49 = vld [vmem:[%s0 + $0x94] sm:$0xf]
  %v50 = vld [vmem:[%s0 + $0x98] sm:$0xf]
  %v51 = vld [vmem:[%s0 + $0x9c] sm:$0xf]
  %v52 = vld [vmem:[%s0 + $0xa0] sm:$0xf]
  %v53 = vld [vmem:[%s0 + $0xa4] sm:$0xf]
  %v54 = vld [vmem:[%s0 + $0xa8] sm:$0xf]
  %v55 = vld [vmem:[%s0 + $0xac] sm:$0xf]
  %v56 = vld [vmem:[%s0 + $0xb0] sm:$0xf]
  %v57 = vld [vmem:[%s0 + $0xb4] sm:$0xf]
  %v58 = vld [vmem:[%s0 + $0xb8] sm:$0xf]
  %v59 = vld [vmem:[%s0 + $0xbc] sm:$0xf]
  %v60 = vld [vmem:[%s0 + $0xc0] sm:$0xf]
  %v61 = vld [vmem:[%s0 + $0xc4] sm:$0xf]
  %v62 = vld [vmem:[%s0 + $0xc8] sm:$0xf]
  %v63 = vld [vmem:[%s0 + $0xcc] sm:$0xf]
  %v64 = vld [vmem:[%s0 + $0xd0] sm:$0xf]
  %v65 = vld [vmem:[%s0 + $0xd4] sm:$0xf]
  %v66 = vld [vmem:[%s0 + $0xd8] sm:$0xf]
  %v67 = vld [vmem:[%s0 + $0xdc] sm:$0xf]
  %v68 = vld [vmem:[%s0 + $0xe0] sm:$0xf]
  %v69 = vld [vmem:[%s0 + $0xe4] sm:$0xf]
  %v70 = vld [vmem:[%s0 + $0xe8] sm:$0xf]
  %v71 = vld [vmem:[%s0 + $0xec] sm:$0xf]
  %v72 = vld [vmem:[%s0 + $0xf0] sm:$0xf]
  %v73 = vld [vmem:[%s0 + $0xf4] sm:$0xf]
  %v74 = vld [vmem:[%s0 + $0xf8] sm:$0xf]
  %v75 = vld [vmem:[%s0 + $0xfc] sm:$0xf]
  %v76 = vld [vmem:[%s1] sm:$0xf]
  %v77 = vld [vmem:[%s1 + $0x4] sm:$0xf]
  %v78 = vld [vmem:[%s1 + $0x8] sm:$0xf]
  %v79 = vld [vmem:[%s1 + $0xc] sm:$0xf]
  %v80 = vld [vmem:[%s1 + $0x10] sm:$0xf]
  %v81 = vld [vmem:[%s1 + $0x14] sm:$0xf]
  %v82 = vld [vmem:[%s1 + $0x18] sm:$0xf]
  %v83 = vld [vmem:[%s1 + $0x1c] sm:$0xf]
  %v84 = vld [vmem:[%s1 + $0x20] sm:$0xf]
  %v85 = vld [vmem:[%s1 + $0x24] sm:$0xf]
  %v86 = vld [vmem:[%s1 + $0x28] sm:$0xf]
  %v87 = vld [vmem:[%s1 + $0x2c] sm:$0xf]
  %v88 = vld [vmem:[%s1 + $0x30] sm:$0xf]
  %v89 = vld [vmem:[%s1 + $0x34] sm:$0xf]
  %v90 = vld [vmem:[%s1 + $0x38] sm:$0xf]
  %v91 = vld [vmem:[%s1 + $0x3c] sm:$0xf]
  %v156 = vunpack.c.l.b16 %v12
  %v157 = vunpack.c.l.b16 %v13
  %v158 = vunpack.c.l.b16 %v14
  %v159 = vunpack.c.l.b16 %v15
  %v160 = vunpack.c.l.b16 %v16
  %v161 = vunpack.c.l.b16 %v17
  %v162 = vunpack.c.l.b16 %v18
  %v163 = vunpack.c.l.b16 %v19
  %v164 = vunpack.c.l.b16 %v20
  %v165 = vunpack.c.l.b16 %v21
  %v166 = vunpack.c.l.b16 %v22
  %v167 = vunpack.c.l.b16 %v23
  %v168 = vunpack.c.l.b16 %v24
  %v169 = vunpack.c.l.b16 %v25
  %v170 = vunpack.c.l.b16 %v26
  %v171 = vunpack.c.l.b16 %v27
  %v172 = vunpack.c.l.b16 %v28
  %v173 = vunpack.c.l.b16 %v29
  %v174 = vunpack.c.l.b16 %v30
  %v175 = vunpack.c.l.b16 %v31
  %v176 = vunpack.c.l.b16 %v32
  %v177 = vunpack.c.l.b16 %v33
  %v178 = vunpack.c.l.b16 %v34
  %v179 = vunpack.c.l.b16 %v35
  %v180 = vunpack.c.l.b16 %v36
  %v181 = vunpack.c.l.b16 %v37
  %v182 = vunpack.c.l.b16 %v38
  %v183 = vunpack.c.l.b16 %v39
  %v184 = vunpack.c.l.b16 %v40
  %v185 = vunpack.c.l.b16 %v41
  %v186 = vunpack.c.l.b16 %v42
  %v187 = vunpack.c.l.b16 %v43
  %v188 = vunpack.c.l.b16 %v44
  %v189 = vunpack.c.l.b16 %v45
  %v190 = vunpack.c.l.b16 %v46
  %v191 = vunpack.c.l.b16 %v47
  %v192 = vunpack.c.l.b16 %v48
  %v193 = vunpack.c.l.b16 %v49
  %v194 = vunpack.c.l.b16 %v50
  %v195 = vunpack.c.l.b16 %v51
  %v196 = vunpack.c.l.b16 %v52
  %v197 = vunpack.c.l.b16 %v53
  %v198 = vunpack.c.l.b16 %v54
  %v199 = vunpack.c.l.b16 %v55
  %v200 = vunpack.c.l.b16 %v56
  %v201 = vunpack.c.l.b16 %v57
  %v202 = vunpack.c.l.b16 %v58
  %v203 = vunpack.c.l.b16 %v59
  %v204 = vunpack.c.l.b16 %v60
  %v205 = vunpack.c.l.b16 %v61
  %v206 = vunpack.c.l.b16 %v62
  %v207 = vunpack.c.l.b16 %v63
  %v208 = vunpack.c.l.b16 %v64
  %v209 = vunpack.c.l.b16 %v65
  %v210 = vunpack.c.l.b16 %v66
  %v211 = vunpack.c.l.b16 %v67
  %v212 = vunpack.c.l.b16 %v68
  %v213 = vunpack.c.l.b16 %v69
  %v214 = vunpack.c.l.b16 %v70
  %v215 = vunpack.c.l.b16 %v71
  %v216 = vunpack.c.l.b16 %v72
  %v217 = vunpack.c.l.b16 %v73
  %v218 = vunpack.c.l.b16 %v74
  %v219 = vunpack.c.l.b16 %v75
  %v220 = vpack.c.b16 %v157, %v156
  %v221 = vpack.c.b16 %v159, %v158
  %v222 = vpack.c.b16 %v161, %v160
  %v223 = vpack.c.b16 %v163, %v162
  %v224 = vpack.c.b16 %v165, %v164
  %v225 = vpack.c.b16 %v167, %v166
  %v226 = vpack.c.b16 %v169, %v168
  %v227 = vpack.c.b16 %v171, %v170
  %v228 = vpack.c.b16 %v173, %v172
  %v229 = vpack.c.b16 %v175, %v174
  %v230 = vpack.c.b16 %v177, %v176
  %v231 = vpack.c.b16 %v179, %v178
  %v232 = vpack.c.b16 %v181, %v180
  %v233 = vpack.c.b16 %v183, %v182
  %v234 = vpack.c.b16 %v185, %v184
  %v235 = vpack.c.b16 %v187, %v186
  %v236 = vpack.c.b16 %v189, %v188
  %v237 = vpack.c.b16 %v191, %v190
  %v238 = vpack.c.b16 %v193, %v192
  %v239 = vpack.c.b16 %v195, %v194
  %v240 = vpack.c.b16 %v197, %v196
  %v241 = vpack.c.b16 %v199, %v198
  %v242 = vpack.c.b16 %v201, %v200
  %v243 = vpack.c.b16 %v203, %v202
  %v244 = vpack.c.b16 %v205, %v204
  %v245 = vpack.c.b16 %v207, %v206
  %v246 = vpack.c.b16 %v209, %v208
  %v247 = vpack.c.b16 %v211, %v210
  %v248 = vpack.c.b16 %v213, %v212
  %v249 = vpack.c.b16 %v215, %v214
  %v250 = vpack.c.b16 %v217, %v216
  %v251 = vpack.c.b16 %v219, %v218
  %v300 = vunpack.c.l.b16 %v76
  %v301 = vunpack.c.l.b16 %v77
  %v302 = vunpack.c.l.b16 %v78
  %v303 = vunpack.c.l.b16 %v79
  %v304 = vunpack.c.l.b16 %v80
  %v305 = vunpack.c.l.b16 %v81
  %v306 = vunpack.c.l.b16 %v82
  %v307 = vunpack.c.l.b16 %v83
  %v308 = vunpack.c.l.b16 %v84
  %v309 = vunpack.c.l.b16 %v85
  %v310 = vunpack.c.l.b16 %v86
  %v311 = vunpack.c.l.b16 %v87
  %v312 = vunpack.c.l.b16 %v88
  %v313 = vunpack.c.l.b16 %v89
  %v314 = vunpack.c.l.b16 %v90
  %v315 = vunpack.c.l.b16 %v91
  %v316 = vpack.c.b16 %v301, %v300
  %v317 = vpack.c.b16 %v303, %v302
  %v318 = vpack.c.b16 %v305, %v304
  %v319 = vpack.c.b16 %v307, %v306
  %v320 = vpack.c.b16 %v309, %v308
  %v321 = vpack.c.b16 %v311, %v310
  %v322 = vpack.c.b16 %v313, %v312
  %v323 = vpack.c.b16 %v315, %v314
  %332 = vmatprep.subr.bf16.mxu0 0
  %333 = vmatpush1.bf16.msra.mxu0 %v323
  %334 = vmatprep.subr.bf16.mxu0 0
  %335 = vmatpush1.bf16.msra.mxu0 %v322
  %336 = vmatprep.subr.bf16.mxu0 0
  %337 = vmatpush1.bf16.msra.mxu0 %v321
  %338 = vmatprep.subr.bf16.mxu0 0
  %339 = vmatpush1.bf16.msra.mxu0 %v320
  %340 = vmatprep.subr.bf16.mxu0 0
  %341 = vmatpush1.bf16.msra.mxu0 %v319
  %342 = vmatprep.subr.bf16.mxu0 0
  %343 = vmatpush1.bf16.msra.mxu0 %v318
  %344 = vmatprep.subr.bf16.mxu0 0
  %345 = vmatpush1.bf16.msra.mxu0 %v317
  %346 = vmatprep.subr.bf16.mxu0 0
  %347 = vmatpush1.bf16.msra.mxu0 %v316
  %348 = vmatprep.subr.bf16.mxu0 0
  %349 = vmatpush2.bf16.msra.mxu0 0
  %350 = vmatprep.subr.bf16.mxu0 0
  %351 = vmatpush2.bf16.msra.mxu0 0
  %352 = vmatprep.subr.bf16.mxu0 0
  %353 = vmatpush2.bf16.msra.mxu0 0
  %354 = vmatprep.subr.bf16.mxu0 0
  %355 = vmatpush2.bf16.msra.mxu0 0
  %356 = vmatprep.subr.bf16.mxu0 0
  %357 = vmatpush2.bf16.msra.mxu0 0
  %358 = vmatprep.subr.bf16.mxu0 0
  %359 = vmatpush2.bf16.msra.mxu0 0
  %360 = vmatprep.subr.bf16.mxu0 0
  %361 = vmatpush2.bf16.msra.mxu0 0
  %362 = vmatprep.subr.bf16.mxu0 0
  %363 = vmatpush2.bf16.msra.mxu0 0
  %364 = vmatprep.mubr.bf16.mxu0 0
  %365 = vmatmul.mubr.bf16.gmra.mxu0 %v220
  %v366 = vpop.f32.mrf.mxu0
  %v367 = vadd.f32 0.0, %v366
  %v368 = vpop.f32.mrf.mxu0
  %v369 = vpop.f32.mrf.mxu0
  %v370 = vadd.f32 0.0, %v369
  %v371 = vpop.f32.mrf.mxu0
  %372 = vmatprep.mubr.bf16.mxu0 0
  %373 = vmatmul.mubr.bf16.gmra.mxu0 %v221
  %v374 = vpop.f32.mrf.mxu0
  %v375 = vadd.f32 0.0, %v374
  %v376 = vpop.f32.mrf.mxu0
  %v377 = vpop.f32.mrf.mxu0
  %v378 = vadd.f32 0.0, %v377
  %v379 = vpop.f32.mrf.mxu0
  %380 = vmatprep.mubr.bf16.mxu0 0
  %381 = vmatmul.mubr.bf16.gmra.mxu0 %v222
  %v382 = vpop.f32.mrf.mxu0
  %v383 = vadd.f32 0.0, %v382
  %v384 = vpop.f32.mrf.mxu0
  %v385 = vpop.f32.mrf.mxu0
  %v386 = vadd.f32 0.0, %v385
  %v387 = vpop.f32.mrf.mxu0
  %388 = vmatprep.mubr.bf16.mxu0 0
  %389 = vmatmul.mubr.bf16.gmra.mxu0 %v223
  %v390 = vpop.f32.mrf.mxu0
  %v391 = vadd.f32 0.0, %v390
  %v392 = vpop.f32.mrf.mxu0
  %v393 = vpop.f32.mrf.mxu0
  %v394 = vadd.f32 0.0, %v393
  %v395 = vpop.f32.mrf.mxu0
  %396 = vmatprep.mubr.bf16.mxu0 0
  %397 = vmatmul.mubr.bf16.gmra.mxu0 %v224
  %v398 = vpop.f32.mrf.mxu0
  %v399 = vadd.f32 0.0, %v398
  %v400 = vpop.f32.mrf.mxu0
  %v401 = vpop.f32.mrf.mxu0
  %v402 = vadd.f32 0.0, %v401
  %v403 = vpop.f32.mrf.mxu0
  %404 = vmatprep.mubr.bf16.mxu0 0
  %405 = vmatmul.mubr.bf16.gmra.mxu0 %v225
  %v406 = vpop.f32.mrf.mxu0
  %v407 = vadd.f32 0.0, %v406
  %v408 = vpop.f32.mrf.mxu0
  %v409 = vpop.f32.mrf.mxu0
  %v410 = vadd.f32 0.0, %v409
  %v411 = vpop.f32.mrf.mxu0
  %412 = vmatprep.mubr.bf16.mxu0 0
  %413 = vmatmul.mubr.bf16.gmra.mxu0 %v226
  %v414 = vpop.f32.mrf.mxu0
  %v415 = vadd.f32 0.0, %v414
  %v416 = vpop.f32.mrf.mxu0
  %v417 = vpop.f32.mrf.mxu0
  %v418 = vadd.f32 0.0, %v417
  %v419 = vpop.f32.mrf.mxu0
  %420 = vmatprep.mubr.bf16.mxu0 0
  %421 = vmatmul.mubr.bf16.gmra.mxu0 %v227
  %v422 = vpop.f32.mrf.mxu0
  %v423 = vadd.f32 0.0, %v422
  %v424 = vpop.f32.mrf.mxu0
  %v425 = vpop.f32.mrf.mxu0
  %v426 = vadd.f32 0.0, %v425
  %v427 = vpop.f32.mrf.mxu0
  %428 = vmatprep.mubr.bf16.mxu0 0
  %429 = vmatmul.mubr.bf16.gmra.mxu0 %v228
  %v430 = vpop.f32.mrf.mxu0
  %v431 = vadd.f32 0.0, %v430
  %v432 = vpop.f32.mrf.mxu0
  %v433 = vpop.f32.mrf.mxu0
  %v434 = vadd.f32 0.0, %v433
  %v435 = vpop.f32.mrf.mxu0
  %436 = vmatprep.mubr.bf16.mxu0 0
  %437 = vmatmul.mubr.bf16.gmra.mxu0 %v229
  %v438 = vpop.f32.mrf.mxu0
  %v439 = vadd.f32 0.0, %v438
  %v440 = vpop.f32.mrf.mxu0
  %v441 = vpop.f32.mrf.mxu0
  %v442 = vadd.f32 0.0, %v441
  %v443 = vpop.f32.mrf.mxu0
  %444 = vmatprep.mubr.bf16.mxu0 0
  %445 = vmatmul.mubr.bf16.gmra.mxu0 %v230
  %v446 = vpop.f32.mrf.mxu0
  %v447 = vadd.f32 0.0, %v446
  %v448 = vpop.f32.mrf.mxu0
  %v449 = vpop.f32.mrf.mxu0
  %v450 = vadd.f32 0.0, %v449
  %v451 = vpop.f32.mrf.mxu0
  %452 = vmatprep.mubr.bf16.mxu0 0
  %453 = vmatmul.mubr.bf16.gmra.mxu0 %v231
  %v454 = vpop.f32.mrf.mxu0
  %v455 = vadd.f32 0.0, %v454
  %v456 = vpop.f32.mrf.mxu0
  %v457 = vpop.f32.mrf.mxu0
  %v458 = vadd.f32 0.0, %v457
  %v459 = vpop.f32.mrf.mxu0
  %460 = vmatprep.mubr.bf16.mxu0 0
  %461 = vmatmul.mubr.bf16.gmra.mxu0 %v232
  %v462 = vpop.f32.mrf.mxu0
  %v463 = vadd.f32 0.0, %v462
  %v464 = vpop.f32.mrf.mxu0
  %v465 = vpop.f32.mrf.mxu0
  %v466 = vadd.f32 0.0, %v465
  %v467 = vpop.f32.mrf.mxu0
  %468 = vmatprep.mubr.bf16.mxu0 0
  %469 = vmatmul.mubr.bf16.gmra.mxu0 %v233
  %v470 = vpop.f32.mrf.mxu0
  %v471 = vadd.f32 0.0, %v470
  %v472 = vpop.f32.mrf.mxu0
  %v473 = vpop.f32.mrf.mxu0
  %v474 = vadd.f32 0.0, %v473
  %v475 = vpop.f32.mrf.mxu0
  %476 = vmatprep.mubr.bf16.mxu0 0
  %477 = vmatmul.mubr.bf16.gmra.mxu0 %v234
  %v478 = vpop.f32.mrf.mxu0
  %v479 = vadd.f32 0.0, %v478
  %v480 = vpop.f32.mrf.mxu0
  %v481 = vpop.f32.mrf.mxu0
  %v482 = vadd.f32 0.0, %v481
  %v483 = vpop.f32.mrf.mxu0
  %484 = vmatprep.mubr.bf16.mxu0 0
  %485 = vmatmul.mubr.bf16.gmra.mxu0 %v235
  %v486 = vpop.f32.mrf.mxu0
  %v487 = vadd.f32 0.0, %v486
  %v488 = vpop.f32.mrf.mxu0
  %v489 = vpop.f32.mrf.mxu0
  %v490 = vadd.f32 0.0, %v489
  %v491 = vpop.f32.mrf.mxu0
  %492 = vmatprep.mubr.bf16.mxu0 0
  %493 = vmatmul.mubr.bf16.gmra.mxu0 %v236
  %v494 = vpop.f32.mrf.mxu0
  %v495 = vadd.f32 0.0, %v494
  %v496 = vpop.f32.mrf.mxu0
  %v497 = vpop.f32.mrf.mxu0
  %v498 = vadd.f32 0.0, %v497
  %v499 = vpop.f32.mrf.mxu0
  %500 = vmatprep.mubr.bf16.mxu0 0
  %501 = vmatmul.mubr.bf16.gmra.mxu0 %v237
  %v502 = vpop.f32.mrf.mxu0
  %v503 = vadd.f32 0.0, %v502
  %v504 = vpop.f32.mrf.mxu0
  %v505 = vpop.f32.mrf.mxu0
  %v506 = vadd.f32 0.0, %v505
  %v507 = vpop.f32.mrf.mxu0
  %508 = vmatprep.mubr.bf16.mxu0 0
  %509 = vmatmul.mubr.bf16.gmra.mxu0 %v238
  %v510 = vpop.f32.mrf.mxu0
  %v511 = vadd.f32 0.0, %v510
  %v512 = vpop.f32.mrf.mxu0
  %v513 = vpop.f32.mrf.mxu0
  %v514 = vadd.f32 0.0, %v513
  %v515 = vpop.f32.mrf.mxu0
  %516 = vmatprep.mubr.bf16.mxu0 0
  %517 = vmatmul.mubr.bf16.gmra.mxu0 %v239
  %v518 = vpop.f32.mrf.mxu0
  %v519 = vadd.f32 0.0, %v518
  %v520 = vpop.f32.mrf.mxu0
  %v521 = vpop.f32.mrf.mxu0
  %v522 = vadd.f32 0.0, %v521
  %v523 = vpop.f32.mrf.mxu0
  %524 = vmatprep.mubr.bf16.mxu0 0
  %525 = vmatmul.mubr.bf16.gmra.mxu0 %v240
  %v526 = vpop.f32.mrf.mxu0
  %v527 = vadd.f32 0.0, %v526
  %v528 = vpop.f32.mrf.mxu0
  %v529 = vpop.f32.mrf.mxu0
  %v530 = vadd.f32 0.0, %v529
  %v531 = vpop.f32.mrf.mxu0
  %532 = vmatprep.mubr.bf16.mxu0 0
  %533 = vmatmul.mubr.bf16.gmra.mxu0 %v241
  %v534 = vpop.f32.mrf.mxu0
  %v535 = vadd.f32 0.0, %v534
  %v536 = vpop.f32.mrf.mxu0
  %v537 = vpop.f32.mrf.mxu0
  %v538 = vadd.f32 0.0, %v537
  %v539 = vpop.f32.mrf.mxu0
  %540 = vmatprep.mubr.bf16.mxu0 0
  %541 = vmatmul.mubr.bf16.gmra.mxu0 %v242
  %v542 = vpop.f32.mrf.mxu0
  %v543 = vadd.f32 0.0, %v542
  %v544 = vpop.f32.mrf.mxu0
  %v545 = vpop.f32.mrf.mxu0
  %v546 = vadd.f32 0.0, %v545
  %v547 = vpop.f32.mrf.mxu0
  %548 = vmatprep.mubr.bf16.mxu0 0
  %549 = vmatmul.mubr.bf16.gmra.mxu0 %v243
  %v550 = vpop.f32.mrf.mxu0
  %v551 = vadd.f32 0.0, %v550
  %v552 = vpop.f32.mrf.mxu0
  %v553 = vpop.f32.mrf.mxu0
  %v554 = vadd.f32 0.0, %v553
  %v555 = vpop.f32.mrf.mxu0
  %556 = vmatprep.mubr.bf16.mxu0 0
  %557 = vmatmul.mubr.bf16.gmra.mxu0 %v244
  %v558 = vpop.f32.mrf.mxu0
  %v559 = vadd.f32 0.0, %v558
  %v560 = vpop.f32.mrf.mxu0
  %v561 = vpop.f32.mrf.mxu0
  %v562 = vadd.f32 0.0, %v561
  %v563 = vpop.f32.mrf.mxu0
  %564 = vmatprep.mubr.bf16.mxu0 0
  %565 = vmatmul.mubr.bf16.gmra.mxu0 %v245
  %v566 = vpop.f32.mrf.mxu0
  %v567 = vadd.f32 0.0, %v566
  %v568 = vpop.f32.mrf.mxu0
  %v569 = vpop.f32.mrf.mxu0
  %v570 = vadd.f32 0.0, %v569
  %v571 = vpop.f32.mrf.mxu0
  %572 = vmatprep.mubr.bf16.mxu0 0
  %573 = vmatmul.mubr.bf16.gmra.mxu0 %v246
  %v574 = vpop.f32.mrf.mxu0
  %v575 = vadd.f32 0.0, %v574
  %v576 = vpop.f32.mrf.mxu0
  %v577 = vpop.f32.mrf.mxu0
  %v578 = vadd.f32 0.0, %v577
  %v579 = vpop.f32.mrf.mxu0
  %580 = vmatprep.mubr.bf16.mxu0 0
  %581 = vmatmul.mubr.bf16.gmra.mxu0 %v247
  %v582 = vpop.f32.mrf.mxu0
  %v583 = vadd.f32 0.0, %v582
  %v584 = vpop.f32.mrf.mxu0
  %v585 = vpop.f32.mrf.mxu0
  %v586 = vadd.f32 0.0, %v585
  %v587 = vpop.f32.mrf.mxu0
  %588 = vmatprep.mubr.bf16.mxu0 0
  %589 = vmatmul.mubr.bf16.gmra.mxu0 %v248
  %v590 = vpop.f32.mrf.mxu0
  %v591 = vadd.f32 0.0, %v590
  %v592 = vpop.f32.mrf.mxu0
  %v593 = vpop.f32.mrf.mxu0
  %v594 = vadd.f32 0.0, %v593
  %v595 = vpop.f32.mrf.mxu0
  %596 = vmatprep.mubr.bf16.mxu0 0
  %597 = vmatmul.mubr.bf16.gmra.mxu0 %v249
  %v598 = vpop.f32.mrf.mxu0
  %v599 = vadd.f32 0.0, %v598
  %v600 = vpop.f32.mrf.mxu0
  %v601 = vpop.f32.mrf.mxu0
  %v602 = vadd.f32 0.0, %v601
  %v603 = vpop.f32.mrf.mxu0
  %604 = vmatprep.mubr.bf16.mxu0 0
  %605 = vmatmul.mubr.bf16.gmra.mxu0 %v250
  %v606 = vpop.f32.mrf.mxu0
  %v607 = vadd.f32 0.0, %v606
  %v608 = vpop.f32.mrf.mxu0
  %v609 = vpop.f32.mrf.mxu0
  %v610 = vadd.f32 0.0, %v609
  %v611 = vpop.f32.mrf.mxu0
  %612 = vmatprep.mubr.bf16.mxu0 0
  %613 = vmatmul.mubr.bf16.gmra.mxu0 %v251
  %v614 = vpop.f32.mrf.mxu0
  %v615 = vadd.f32 0.0, %v614
  %v616 = vpop.f32.mrf.mxu0
  %v617 = vpop.f32.mrf.mxu0
  %v618 = vadd.f32 0.0, %v617
  %v619 = vpop.f32.mrf.mxu0
  %620 = vdwg.mxu0
  %s621 = smul.u32 0, 512
  %s622 = scalar_lea.vmem %s2, %s621
  %623 = vst [vmem:[%s622] sm:$0xff] %v367
  %624 = vst [vmem:[%s622 + $0x8] sm:$0xff] %v370
  %625 = vst [vmem:[%s622 + $0x10] sm:$0xff] %v375
  %626 = vst [vmem:[%s622 + $0x18] sm:$0xff] %v378
  %627 = vst [vmem:[%s622 + $0x20] sm:$0xff] %v383
  %628 = vst [vmem:[%s622 + $0x28] sm:$0xff] %v386
  %629 = vst [vmem:[%s622 + $0x30] sm:$0xff] %v391
  %630 = vst [vmem:[%s622 + $0x38] sm:$0xff] %v394
  %631 = vst [vmem:[%s622 + $0x40] sm:$0xff] %v399
  %632 = vst [vmem:[%s622 + $0x48] sm:$0xff] %v402
  %633 = vst [vmem:[%s622 + $0x50] sm:$0xff] %v407
  %634 = vst [vmem:[%s622 + $0x58] sm:$0xff] %v410
  %635 = vst [vmem:[%s622 + $0x60] sm:$0xff] %v415
  %636 = vst [vmem:[%s622 + $0x68] sm:$0xff] %v418
  %637 = vst [vmem:[%s622 + $0x70] sm:$0xff] %v423
  %638 = vst [vmem:[%s622 + $0x78] sm:$0xff] %v426
  %639 = vst [vmem:[%s622 + $0x80] sm:$0xff] %v431
  %640 = vst [vmem:[%s622 + $0x88] sm:$0xff] %v434
  %641 = vst [vmem:[%s622 + $0x90] sm:$0xff] %v439
  %642 = vst [vmem:[%s622 + $0x98] sm:$0xff] %v442
  %643 = vst [vmem:[%s622 + $0xa0] sm:$0xff] %v447
  %644 = vst [vmem:[%s622 + $0xa8] sm:$0xff] %v450
  %645 = vst [vmem:[%s622 + $0xb0] sm:$0xff] %v455
  %646 = vst [vmem:[%s622 + $0xb8] sm:$0xff] %v458
  %647 = vst [vmem:[%s622 + $0xc0] sm:$0xff] %v463
  %648 = vst [vmem:[%s622 + $0xc8] sm:$0xff] %v466
  %649 = vst [vmem:[%s622 + $0xd0] sm:$0xff] %v471
  %650 = vst [vmem:[%s622 + $0xd8] sm:$0xff] %v474
  %651 = vst [vmem:[%s622 + $0xe0] sm:$0xff] %v479
  %652 = vst [vmem:[%s622 + $0xe8] sm:$0xff] %v482
  %653 = vst [vmem:[%s622 + $0xf0] sm:$0xff] %v487
  %654 = vst [vmem:[%s622 + $0xf8] sm:$0xff] %v490
  %655 = vst [vmem:[%s622 + $0x100] sm:$0xff] %v495
  %656 = vst [vmem:[%s622 + $0x108] sm:$0xff] %v498
  %657 = vst [vmem:[%s622 + $0x110] sm:$0xff] %v503
  %658 = vst [vmem:[%s622 + $0x118] sm:$0xff] %v506
  %659 = vst [vmem:[%s622 + $0x120] sm:$0xff] %v511
  %660 = vst [vmem:[%s622 + $0x128] sm:$0xff] %v514
  %661 = vst [vmem:[%s622 + $0x130] sm:$0xff] %v519
  %662 = vst [vmem:[%s622 + $0x138] sm:$0xff] %v522
  %663 = vst [vmem:[%s622 + $0x140] sm:$0xff] %v527
  %664 = vst [vmem:[%s622 + $0x148] sm:$0xff] %v530
  %665 = vst [vmem:[%s622 + $0x150] sm:$0xff] %v535
  %666 = vst [vmem:[%s622 + $0x158] sm:$0xff] %v538
  %667 = vst [vmem:[%s622 + $0x160] sm:$0xff] %v543
  %668 = vst [vmem:[%s622 + $0x168] sm:$0xff] %v546
  %669 = vst [vmem:[%s622 + $0x170] sm:$0xff] %v551
  %670 = vst [vmem:[%s622 + $0x178] sm:$0xff] %v554
  %671 = vst [vmem:[%s622 + $0x180] sm:$0xff] %v559
  %672 = vst [vmem:[%s622 + $0x188] sm:$0xff] %v562
  %673 = vst [vmem:[%s622 + $0x190] sm:$0xff] %v567
  %674 = vst [vmem:[%s622 + $0x198] sm:$0xff] %v570
  %675 = vst [vmem:[%s622 + $0x1a0] sm:$0xff] %v575
  %676 = vst [vmem:[%s622 + $0x1a8] sm:$0xff] %v578
  %677 = vst [vmem:[%s622 + $0x1b0] sm:$0xff] %v583
  %678 = vst [vmem:[%s622 + $0x1b8] sm:$0xff] %v586
  %679 = vst [vmem:[%s622 + $0x1c0] sm:$0xff] %v591
  %680 = vst [vmem:[%s622 + $0x1c8] sm:$0xff] %v594
  %681 = vst [vmem:[%s622 + $0x1d0] sm:$0xff] %v599
  %682 = vst [vmem:[%s622 + $0x1d8] sm:$0xff] %v602
  %683 = vst [vmem:[%s622 + $0x1e0] sm:$0xff] %v607
  %684 = vst [vmem:[%s622 + $0x1e8] sm:$0xff] %v610
  %685 = vst [vmem:[%s622 + $0x1f0] sm:$0xff] %v615
  %686 = vst [vmem:[%s622 + $0x1f8] sm:$0xff] %v618
  %p687 = scmp.eq.s32.totalorder 0, 0
  // Predicated region
  $region10: #{_lambda_.6} parent=0 // pred_check
    %p688 = pneg %p687
  $region11: #{_lambda_.6} parent=0 // pred_check_branch
    %690 = sbr.rel (%p688) target = $region13
  $region12: #{_lambda_.6} parent=0 // pred_region
    %v691 = vld [vmem:[%s2] sm:$0xff]
    %v692 = vld [vmem:[%s2 + $0x8] sm:$0xff]
    %v693 = vld [vmem:[%s2 + $0x10] sm:$0xff]
    %v694 = vld [vmem:[%s2 + $0x18] sm:$0xff]
    %v695 = vld [vmem:[%s2 + $0x20] sm:$0xff]
    %v696 = vld [vmem:[%s2 + $0x28] sm:$0xff]
    %v697 = vld [vmem:[%s2 + $0x30] sm:$0xff]
    %v698 = vld [vmem:[%s2 + $0x38] sm:$0xff]
    %v699 = vld [vmem:[%s2 + $0x40] sm:$0xff]
    %v700 = vld [vmem:[%s2 + $0x48] sm:$0xff]
    %v701 = vld [vmem:[%s2 + $0x50] sm:$0xff]
    %v702 = vld [vmem:[%s2 + $0x58] sm:$0xff]
    %v703 = vld [vmem:[%s2 + $0x60] sm:$0xff]
    %v704 = vld [vmem:[%s2 + $0x68] sm:$0xff]
    %v705 = vld [vmem:[%s2 + $0x70] sm:$0xff]
    %v706 = vld [vmem:[%s2 + $0x78] sm:$0xff]
    %v707 = vld [vmem:[%s2 + $0x80] sm:$0xff]
    %v708 = vld [vmem:[%s2 + $0x88] sm:$0xff]
    %v709 = vld [vmem:[%s2 + $0x90] sm:$0xff]
    %v710 = vld [vmem:[%s2 + $0x98] sm:$0xff]
    %v711 = vld [vmem:[%s2 + $0xa0] sm:$0xff]
    %v712 = vld [vmem:[%s2 + $0xa8] sm:$0xff]
    %v713 = vld [vmem:[%s2 + $0xb0] sm:$0xff]
    %v714 = vld [vmem:[%s2 + $0xb8] sm:$0xff]
    %v715 = vld [vmem:[%s2 + $0xc0] sm:$0xff]
    %v716 = vld [vmem:[%s2 + $0xc8] sm:$0xff]
    %v717 = vld [vmem:[%s2 + $0xd0] sm:$0xff]
    %v718 = vld [vmem:[%s2 + $0xd8] sm:$0xff]
    %v719 = vld [vmem:[%s2 + $0xe0] sm:$0xff]
    %v720 = vld [vmem:[%s2 + $0xe8] sm:$0xff]
    %v721 = vld [vmem:[%s2 + $0xf0] sm:$0xff]
    %v722 = vld [vmem:[%s2 + $0xf8] sm:$0xff]
    %v723 = vld [vmem:[%s2 + $0x100] sm:$0xff]
    %v724 = vld [vmem:[%s2 + $0x108] sm:$0xff]
    %v725 = vld [vmem:[%s2 + $0x110] sm:$0xff]
    %v726 = vld [vmem:[%s2 + $0x118] sm:$0xff]
    %v727 = vld [vmem:[%s2 + $0x120] sm:$0xff]
    %v728 = vld [vmem:[%s2 + $0x128] sm:$0xff]
    %v729 = vld [vmem:[%s2 + $0x130] sm:$0xff]
    %v730 = vld [vmem:[%s2 + $0x138] sm:$0xff]
    %v731 = vld [vmem:[%s2 + $0x140] sm:$0xff]
    %v732 = vld [vmem:[%s2 + $0x148] sm:$0xff]
    %v733 = vld [vmem:[%s2 + $0x150] sm:$0xff]
    %v734 = vld [vmem:[%s2 + $0x158] sm:$0xff]
    %v735 = vld [vmem:[%s2 + $0x160] sm:$0xff]
    %v736 = vld [vmem:[%s2 + $0x168] sm:$0xff]
    %v737 = vld [vmem:[%s2 + $0x170] sm:$0xff]
    %v738 = vld [vmem:[%s2 + $0x178] sm:$0xff]
    %v739 = vld [vmem:[%s2 + $0x180] sm:$0xff]
    %v740 = vld [vmem:[%s2 + $0x188] sm:$0xff]
    %v741 = vld [vmem:[%s2 + $0x190] sm:$0xff]
    %v742 = vld [vmem:[%s2 + $0x198] sm:$0xff]
    %v743 = vld [vmem:[%s2 + $0x1a0] sm:$0xff]
    %v744 = vld [vmem:[%s2 + $0x1a8] sm:$0xff]
    %v745 = vld [vmem:[%s2 + $0x1b0] sm:$0xff]
    %v746 = vld [vmem:[%s2 + $0x1b8] sm:$0xff]
    %v747 = vld [vmem:[%s2 + $0x1c0] sm:$0xff]
    %v748 = vld [vmem:[%s2 + $0x1c8] sm:$0xff]
    %v749 = vld [vmem:[%s2 + $0x1d0] sm:$0xff]
    %v750 = vld [vmem:[%s2 + $0x1d8] sm:$0xff]
    %v751 = vld [vmem:[%s2 + $0x1e0] sm:$0xff]
    %v752 = vld [vmem:[%s2 + $0x1e8] sm:$0xff]
    %v753 = vld [vmem:[%s2 + $0x1f0] sm:$0xff]
    %v754 = vld [vmem:[%s2 + $0x1f8] sm:$0xff]
    %v755 = vadd.f32 %v691, %v692
    %v756 = vadd.f32 %v755, %v693
    %v757 = vadd.f32 %v756, %v694
    %v758 = vadd.f32 %v757, %v695
    %v759 = vadd.f32 %v758, %v696
    %v760 = vadd.f32 %v759, %v697
    %v761 = vadd.f32 %v760, %v698
    %v762 = vadd.f32 %v761, %v699
    %v763 = vadd.f32 %v762, %v700
    %v764 = vadd.f32 %v763, %v701
    %v765 = vadd.f32 %v764, %v702
    %v766 = vadd.f32 %v765, %v703
    %v767 = vadd.f32 %v766, %v704
    %v768 = vadd.f32 %v767, %v705
    %v769 = vadd.f32 %v768, %v706
    %v770 = vadd.f32 %v769, %v707
    %v771 = vadd.f32 %v770, %v708
    %v772 = vadd.f32 %v771, %v709
    %v773 = vadd.f32 %v772, %v710
    %v774 = vadd.f32 %v773, %v711
    %v775 = vadd.f32 %v774, %v712
    %v776 = vadd.f32 %v775, %v713
    %v777 = vadd.f32 %v776, %v714
    %v778 = vadd.f32 %v777, %v715
    %v779 = vadd.f32 %v778, %v716
    %v780 = vadd.f32 %v779, %v717
    %v781 = vadd.f32 %v780, %v718
    %v782 = vadd.f32 %v781, %v719
    %v783 = vadd.f32 %v782, %v720
    %v784 = vadd.f32 %v783, %v721
    %v785 = vadd.f32 %v784, %v722
    %v786 = vadd.f32 %v785, %v723
    %v787 = vadd.f32 %v786, %v724
    %v788 = vadd.f32 %v787, %v725
    %v789 = vadd.f32 %v788, %v726
    %v790 = vadd.f32 %v789, %v727
    %v791 = vadd.f32 %v790, %v728
    %v792 = vadd.f32 %v791, %v729
    %v793 = vadd.f32 %v792, %v730
    %v794 = vadd.f32 %v793, %v731
    %v795 = vadd.f32 %v794, %v732
    %v796 = vadd.f32 %v795, %v733
    %v797 = vadd.f32 %v796, %v734
    %v798 = vadd.f32 %v797, %v735
    %v799 = vadd.f32 %v798, %v736
    %v800 = vadd.f32 %v799, %v737
    %v801 = vadd.f32 %v800, %v738
    %v802 = vadd.f32 %v801, %v739
    %v803 = vadd.f32 %v802, %v740
    %v804 = vadd.f32 %v803, %v741
    %v805 = vadd.f32 %v804, %v742
    %v806 = vadd.f32 %v805, %v743
    %v807 = vadd.f32 %v806, %v744
    %v808 = vadd.f32 %v807, %v745
    %v809 = vadd.f32 %v808, %v746
    %v810 = vadd.f32 %v809, %v747
    %v811 = vadd.f32 %v810, %v748
    %v812 = vadd.f32 %v811, %v749
    %v813 = vadd.f32 %v812, %v750
    %v814 = vadd.f32 %v813, %v751
    %v815 = vadd.f32 %v814, %v752
    %v816 = vadd.f32 %v815, %v753
    %v817 = vadd.f32 %v816, %v754
    %v818 = vrot.slane %v817, 4
    %v819 = vadd.f32 %v817, %v818
    %v820 = vrot.slane %v819, 2
    %v821 = vadd.f32 %v819, %v820
    %v822 = vrot.slane %v821, 1
    %v823 = vadd.f32 %v821, %v822
    %v824 = vrcp.pop 512.0
    %v825 = vmul.f32 %v823, %v824
    %v826 = vsub.f32 %v691, %v825
    %v827 = vsub.f32 %v692, %v825
    %v828 = vsub.f32 %v693, %v825
    %v829 = vsub.f32 %v694, %v825
    %v830 = vsub.f32 %v695, %v825
    %v831 = vsub.f32 %v696, %v825
    %v832 = vsub.f32 %v697, %v825
    %v833 = vsub.f32 %v698, %v825
    %v834 = vsub.f32 %v699, %v825
    %v835 = vsub.f32 %v700, %v825
    %v836 = vsub.f32 %v701, %v825
    %v837 = vsub.f32 %v702, %v825
    %v838 = vsub.f32 %v703, %v825
    %v839 = vsub.f32 %v704, %v825
    %v840 = vsub.f32 %v705, %v825
    %v841 = vsub.f32 %v706, %v825
    %v842 = vsub.f32 %v707, %v825
    %v843 = vsub.f32 %v708, %v825
    %v844 = vsub.f32 %v709, %v825
    %v845 = vsub.f32 %v710, %v825
    %v846 = vsub.f32 %v711, %v825
    %v847 = vsub.f32 %v712, %v825
    %v848 = vsub.f32 %v713, %v825
    %v849 = vsub.f32 %v714, %v825
    %v850 = vsub.f32 %v715, %v825
    %v851 = vsub.f32 %v716, %v825
    %v852 = vsub.f32 %v717, %v825
    %v853 = vsub.f32 %v718, %v825
    %v854 = vsub.f32 %v719, %v825
    %v855 = vsub.f32 %v720, %v825
    %v856 = vsub.f32 %v721, %v825
    %v857 = vsub.f32 %v722, %v825
    %v858 = vsub.f32 %v723, %v825
    %v859 = vsub.f32 %v724, %v825
    %v860 = vsub.f32 %v725, %v825
    %v861 = vsub.f32 %v726, %v825
    %v862 = vsub.f32 %v727, %v825
    %v863 = vsub.f32 %v728, %v825
    %v864 = vsub.f32 %v729, %v825
    %v865 = vsub.f32 %v730, %v825
    %v866 = vsub.f32 %v731, %v825
    %v867 = vsub.f32 %v732, %v825
    %v868 = vsub.f32 %v733, %v825
    %v869 = vsub.f32 %v734, %v825
    %v870 = vsub.f32 %v735, %v825
    %v871 = vsub.f32 %v736, %v825
    %v872 = vsub.f32 %v737, %v825
    %v873 = vsub.f32 %v738, %v825
    %v874 = vsub.f32 %v739, %v825
    %v875 = vsub.f32 %v740, %v825
    %v876 = vsub.f32 %v741, %v825
    %v877 = vsub.f32 %v742, %v825
    %v878 = vsub.f32 %v743, %v825
    %v879 = vsub.f32 %v744, %v825
    %v880 = vsub.f32 %v745, %v825
    %v881 = vsub.f32 %v746, %v825
    %v882 = vsub.f32 %v747, %v825
    %v883 = vsub.f32 %v748, %v825
    %v884 = vsub.f32 %v749, %v825
    %v885 = vsub.f32 %v750, %v825
    %v886 = vsub.f32 %v751, %v825
    %v887 = vsub.f32 %v752, %v825
    %v888 = vsub.f32 %v753, %v825
    %v889 = vsub.f32 %v754, %v825
    %v890 = vmul.f32 %v826, %v826
    %v891 = vmul.f32 %v827, %v827
    %v892 = vmul.f32 %v828, %v828
    %v893 = vmul.f32 %v829, %v829
    %v894 = vmul.f32 %v830, %v830
    %v895 = vmul.f32 %v831, %v831
    %v896 = vmul.f32 %v832, %v832
    %v897 = vmul.f32 %v833, %v833
    %v898 = vmul.f32 %v834, %v834
    %v899 = vmul.f32 %v835, %v835
    %v900 = vmul.f32 %v836, %v836
    %v901 = vmul.f32 %v837, %v837
    %v902 = vmul.f32 %v838, %v838
    %v903 = vmul.f32 %v839, %v839
    %v904 = vmul.f32 %v840, %v840
    %v905 = vmul.f32 %v841, %v841
    %v906 = vmul.f32 %v842, %v842
    %v907 = vmul.f32 %v843, %v843
    %v908 = vmul.f32 %v844, %v844
    %v909 = vmul.f32 %v845, %v845
    %v910 = vmul.f32 %v846, %v846
    %v911 = vmul.f32 %v847, %v847
    %v912 = vmul.f32 %v848, %v848
    %v913 = vmul.f32 %v849, %v849
    %v914 = vmul.f32 %v850, %v850
    %v915 = vmul.f32 %v851, %v851
    %v916 = vmul.f32 %v852, %v852
    %v917 = vmul.f32 %v853, %v853
    %v918 = vmul.f32 %v854, %v854
    %v919 = vmul.f32 %v855, %v855
    %v920 = vmul.f32 %v856, %v856
    %v921 = vmul.f32 %v857, %v857
    %v922 = vmul.f32 %v858, %v858
    %v923 = vmul.f32 %v859, %v859
    %v924 = vmul.f32 %v860, %v860
    %v925 = vmul.f32 %v861, %v861
    %v926 = vmul.f32 %v862, %v862
    %v927 = vmul.f32 %v863, %v863
    %v928 = vmul.f32 %v864, %v864
    %v929 = vmul.f32 %v865, %v865
    %v930 = vmul.f32 %v866, %v866
    %v931 = vmul.f32 %v867, %v867
    %v932 = vmul.f32 %v868, %v868
    %v933 = vmul.f32 %v869, %v869
    %v934 = vmul.f32 %v870, %v870
    %v935 = vmul.f32 %v871, %v871
    %v936 = vmul.f32 %v872, %v872
    %v937 = vmul.f32 %v873, %v873
    %v938 = vmul.f32 %v874, %v874
    %v939 = vmul.f32 %v875, %v875
    %v940 = vmul.f32 %v876, %v876
    %v941 = vmul.f32 %v877, %v877
    %v942 = vmul.f32 %v878, %v878
    %v943 = vmul.f32 %v879, %v879
    %v944 = vmul.f32 %v880, %v880
    %v945 = vmul.f32 %v881, %v881
    %v946 = vmul.f32 %v882, %v882
    %v947 = vmul.f32 %v883, %v883
    %v948 = vmul.f32 %v884, %v884
    %v949 = vmul.f32 %v885, %v885
    %v950 = vmul.f32 %v886, %v886
    %v951 = vmul.f32 %v887, %v887
    %v952 = vmul.f32 %v888, %v888
    %v953 = vmul.f32 %v889, %v889
    %v954 = vadd.f32 %v890, %v891
    %v955 = vadd.f32 %v954, %v892
    %v956 = vadd.f32 %v955, %v893
    %v957 = vadd.f32 %v956, %v894
    %v958 = vadd.f32 %v957, %v895
    %v959 = vadd.f32 %v958, %v896
    %v960 = vadd.f32 %v959, %v897
    %v961 = vadd.f32 %v960, %v898
    %v962 = vadd.f32 %v961, %v899
    %v963 = vadd.f32 %v962, %v900
    %v964 = vadd.f32 %v963, %v901
    %v965 = vadd.f32 %v964, %v902
    %v966 = vadd.f32 %v965, %v903
    %v967 = vadd.f32 %v966, %v904
    %v968 = vadd.f32 %v967, %v905
    %v969 = vadd.f32 %v968, %v906
    %v970 = vadd.f32 %v969, %v907
    %v971 = vadd.f32 %v970, %v908
    %v972 = vadd.f32 %v971, %v909
    %v973 = vadd.f32 %v972, %v910
    %v974 = vadd.f32 %v973, %v911
    %v975 = vadd.f32 %v974, %v912
    %v976 = vadd.f32 %v975, %v913
    %v977 = vadd.f32 %v976, %v914
    %v978 = vadd.f32 %v977, %v915
    %v979 = vadd.f32 %v978, %v916
    %v980 = vadd.f32 %v979, %v917
    %v981 = vadd.f32 %v980, %v918
    %v982 = vadd.f32 %v981, %v919
    %v983 = vadd.f32 %v982, %v920
    %v984 = vadd.f32 %v983, %v921
    %v985 = vadd.f32 %v984, %v922
    %v986 = vadd.f32 %v985, %v923
    %v987 = vadd.f32 %v986, %v924
    %v988 = vadd.f32 %v987, %v925
    %v989 = vadd.f32 %v988, %v926
    %v990 = vadd.f32 %v989, %v927
    %v991 = vadd.f32 %v990, %v928
    %v992 = vadd.f32 %v991, %v929
    %v993 = vadd.f32 %v992, %v930
    %v994 = vadd.f32 %v993, %v931
    %v995 = vadd.f32 %v994, %v932
    %v996 = vadd.f32 %v995, %v933
    %v997 = vadd.f32 %v996, %v934
    %v998 = vadd.f32 %v997, %v935
    %v999 = vadd.f32 %v998, %v936
    %v1000 = vadd.f32 %v999, %v937
    %v1001 = vadd.f32 %v1000, %v938
    %v1002 = vadd.f32 %v1001, %v939
    %v1003 = vadd.f32 %v1002, %v940
    %v1004 = vadd.f32 %v1003, %v941
    %v1005 = vadd.f32 %v1004, %v942
    %v1006 = vadd.f32 %v1005, %v943
    %v1007 = vadd.f32 %v1006, %v944
    %v1008 = vadd.f32 %v1007, %v945
    %v1009 = vadd.f32 %v1008, %v946
    %v1010 = vadd.f32 %v1009, %v947
    %v1011 = vadd.f32 %v1010, %v948
    %v1012 = vadd.f32 %v1011, %v949
    %v1013 = vadd.f32 %v1012, %v950
    %v1014 = vadd.f32 %v1013, %v951
    %v1015 = vadd.f32 %v1014, %v952
    %v1016 = vadd.f32 %v1015, %v953
    %v1017 = vrot.slane %v1016, 4
    %v1018 = vadd.f32 %v1016, %v1017
    %v1019 = vrot.slane %v1018, 2
    %v1020 = vadd.f32 %v1018, %v1019
    %v1021 = vrot.slane %v1020, 1
    %v1022 = vadd.f32 %v1020, %v1021
    %v1023 = vmul.f32 %v1022, %v824
    %v1024 = vadd.f32 %v1023, 1e-05
    %v1025 = vrsqrt.pop %v1024
    %v1026 = vmul.f32 %v826, %v1025
    %v1027 = vmul.f32 %v827, %v1025
    %v1028 = vmul.f32 %v828, %v1025
    %v1029 = vmul.f32 %v829, %v1025
    %v1030 = vmul.f32 %v830, %v1025
    %v1031 = vmul.f32 %v831, %v1025
    %v1032 = vmul.f32 %v832, %v1025
    %v1033 = vmul.f32 %v833, %v1025
    %v1034 = vmul.f32 %v834, %v1025
    %v1035 = vmul.f32 %v835, %v1025
    %v1036 = vmul.f32 %v836, %v1025
    %v1037 = vmul.f32 %v837, %v1025
    %v1038 = vmul.f32 %v838, %v1025
    %v1039 = vmul.f32 %v839, %v1025
    %v1040 = vmul.f32 %v840, %v1025
    %v1041 = vmul.f32 %v841, %v1025
    %v1042 = vmul.f32 %v842, %v1025
    %v1043 = vmul.f32 %v843, %v1025
    %v1044 = vmul.f32 %v844, %v1025
    %v1045 = vmul.f32 %v845, %v1025
    %v1046 = vmul.f32 %v846, %v1025
    %v1047 = vmul.f32 %v847, %v1025
    %v1048 = vmul.f32 %v848, %v1025
    %v1049 = vmul.f32 %v849, %v1025
    %v1050 = vmul.f32 %v850, %v1025
    %v1051 = vmul.f32 %v851, %v1025
    %v1052 = vmul.f32 %v852, %v1025
    %v1053 = vmul.f32 %v853, %v1025
    %v1054 = vmul.f32 %v854, %v1025
    %v1055 = vmul.f32 %v855, %v1025
    %v1056 = vmul.f32 %v856, %v1025
    %v1057 = vmul.f32 %v857, %v1025
    %v1058 = vmul.f32 %v858, %v1025
    %v1059 = vmul.f32 %v859, %v1025
    %v1060 = vmul.f32 %v860, %v1025
    %v1061 = vmul.f32 %v861, %v1025
    %v1062 = vmul.f32 %v862, %v1025
    %v1063 = vmul.f32 %v863, %v1025
    %v1064 = vmul.f32 %v864, %v1025
    %v1065 = vmul.f32 %v865, %v1025
    %v1066 = vmul.f32 %v866, %v1025
    %v1067 = vmul.f32 %v867, %v1025
    %v1068 = vmul.f32 %v868, %v1025
    %v1069 = vmul.f32 %v869, %v1025
    %v1070 = vmul.f32 %v870, %v1025
    %v1071 = vmul.f32 %v871, %v1025
    %v1072 = vmul.f32 %v872, %v1025
    %v1073 = vmul.f32 %v873, %v1025
    %v1074 = vmul.f32 %v874, %v1025
    %v1075 = vmul.f32 %v875, %v1025
    %v1076 = vmul.f32 %v876, %v1025
    %v1077 = vmul.f32 %v877, %v1025
    %v1078 = vmul.f32 %v878, %v1025
    %v1079 = vmul.f32 %v879, %v1025
    %v1080 = vmul.f32 %v880, %v1025
    %v1081 = vmul.f32 %v881, %v1025
    %v1082 = vmul.f32 %v882, %v1025
    %v1083 = vmul.f32 %v883, %v1025
    %v1084 = vmul.f32 %v884, %v1025
    %v1085 = vmul.f32 %v885, %v1025
    %v1086 = vmul.f32 %v886, %v1025
    %v1087 = vmul.f32 %v887, %v1025
    %v1088 = vmul.f32 %v888, %v1025
    %v1089 = vmul.f32 %v889, %v1025
    %vm1090 = vcmp.gt.f32.partialorder %v1026, 0.0
    %vm1091 = vcmp.gt.f32.partialorder %v1027, 0.0
    %vm1092 = vcmp.gt.f32.partialorder %v1028, 0.0
    %vm1093 = vcmp.gt.f32.partialorder %v1029, 0.0
    %vm1094 = vcmp.gt.f32.partialorder %v1030, 0.0
    %vm1095 = vcmp.gt.f32.partialorder %v1031, 0.0
    %vm1096 = vcmp.gt.f32.partialorder %v1032, 0.0
    %vm1097 = vcmp.gt.f32.partialorder %v1033, 0.0
    %vm1098 = vcmp.gt.f32.partialorder %v1034, 0.0
    %vm1099 = vcmp.gt.f32.partialorder %v1035, 0.0
    %vm1100 = vcmp.gt.f32.partialorder %v1036, 0.0
    %vm1101 = vcmp.gt.f32.partialorder %v1037, 0.0
    %vm1102 = vcmp.gt.f32.partialorder %v1038, 0.0
    %vm1103 = vcmp.gt.f32.partialorder %v1039, 0.0
    %vm1104 = vcmp.gt.f32.partialorder %v1040, 0.0
    %vm1105 = vcmp.gt.f32.partialorder %v1041, 0.0
    %vm1106 = vcmp.gt.f32.partialorder %v1042, 0.0
    %vm1107 = vcmp.gt.f32.partialorder %v1043, 0.0
    %vm1108 = vcmp.gt.f32.partialorder %v1044, 0.0
    %vm1109 = vcmp.gt.f32.partialorder %v1045, 0.0
    %vm1110 = vcmp.gt.f32.partialorder %v1046, 0.0
    %vm1111 = vcmp.gt.f32.partialorder %v1047, 0.0
    %vm1112 = vcmp.gt.f32.partialorder %v1048, 0.0
    %vm1113 = vcmp.gt.f32.partialorder %v1049, 0.0
    %vm1114 = vcmp.gt.f32.partialorder %v1050, 0.0
    %vm1115 = vcmp.gt.f32.partialorder %v1051, 0.0
    %vm1116 = vcmp.gt.f32.partialorder %v1052, 0.0
    %vm1117 = vcmp.gt.f32.partialorder %v1053, 0.0
    %vm1118 = vcmp.gt.f32.partialorder %v1054, 0.0
    %vm1119 = vcmp.gt.f32.partialorder %v1055, 0.0
    %vm1120 = vcmp.gt.f32.partialorder %v1056, 0.0
    %vm1121 = vcmp.gt.f32.partialorder %v1057, 0.0
    %vm1122 = vcmp.gt.f32.partialorder %v1058, 0.0
    %vm1123 = vcmp.gt.f32.partialorder %v1059, 0.0
    %vm1124 = vcmp.gt.f32.partialorder %v1060, 0.0
    %vm1125 = vcmp.gt.f32.partialorder %v1061, 0.0
    %vm1126 = vcmp.gt.f32.partialorder %v1062, 0.0
    %vm1127 = vcmp.gt.f32.partialorder %v1063, 0.0
    %vm1128 = vcmp.gt.f32.partialorder %v1064, 0.0
    %vm1129 = vcmp.gt.f32.partialorder %v1065, 0.0
    %vm1130 = vcmp.gt.f32.partialorder %v1066, 0.0
    %vm1131 = vcmp.gt.f32.partialorder %v1067, 0.0
    %vm1132 = vcmp.gt.f32.partialorder %v1068, 0.0
    %vm1133 = vcmp.gt.f32.partialorder %v1069, 0.0
    %vm1134 = vcmp.gt.f32.partialorder %v1070, 0.0
    %vm1135 = vcmp.gt.f32.partialorder %v1071, 0.0
    %vm1136 = vcmp.gt.f32.partialorder %v1072, 0.0
    %vm1137 = vcmp.gt.f32.partialorder %v1073, 0.0
    %vm1138 = vcmp.gt.f32.partialorder %v1074, 0.0
    %vm1139 = vcmp.gt.f32.partialorder %v1075, 0.0
    %vm1140 = vcmp.gt.f32.partialorder %v1076, 0.0
    %vm1141 = vcmp.gt.f32.partialorder %v1077, 0.0
    %vm1142 = vcmp.gt.f32.partialorder %v1078, 0.0
    %vm1143 = vcmp.gt.f32.partialorder %v1079, 0.0
    %vm1144 = vcmp.gt.f32.partialorder %v1080, 0.0
    %vm1145 = vcmp.gt.f32.partialorder %v1081, 0.0
    %vm1146 = vcmp.gt.f32.partialorder %v1082, 0.0
    %vm1147 = vcmp.gt.f32.partialorder %v1083, 0.0
    %vm1148 = vcmp.gt.f32.partialorder %v1084, 0.0
    %vm1149 = vcmp.gt.f32.partialorder %v1085, 0.0
    %vm1150 = vcmp.gt.f32.partialorder %v1086, 0.0
    %vm1151 = vcmp.gt.f32.partialorder %v1087, 0.0
    %vm1152 = vcmp.gt.f32.partialorder %v1088, 0.0
    %vm1153 = vcmp.gt.f32.partialorder %v1089, 0.0
    %v1154 = vmul.f32 %v1026, 1.442695
    %v1155 = vpow.pop %v1154
    %v1156 = vmul.f32 %v1027, 1.442695
    %v1157 = vpow.pop %v1156
    %v1158 = vmul.f32 %v1028, 1.442695
    %v1159 = vpow.pop %v1158
    %v1160 = vmul.f32 %v1029, 1.442695
    %v1161 = vpow.pop %v1160
    %v1162 = vmul.f32 %v1030, 1.442695
    %v1163 = vpow.pop %v1162
    %v1164 = vmul.f32 %v1031, 1.442695
    %v1165 = vpow.pop %v1164
    %v1166 = vmul.f32 %v1032, 1.442695
    %v1167 = vpow.pop %v1166
    %v1168 = vmul.f32 %v1033, 1.442695
    %v1169 = vpow.pop %v1168
    %v1170 = vmul.f32 %v1034, 1.442695
    %v1171 = vpow.pop %v1170
    %v1172 = vmul.f32 %v1035, 1.442695
    %v1173 = vpow.pop %v1172
    %v1174 = vmul.f32 %v1036, 1.442695
    %v1175 = vpow.pop %v1174
    %v1176 = vmul.f32 %v1037, 1.442695
    %v1177 = vpow.pop %v1176
    %v1178 = vmul.f32 %v1038, 1.442695
    %v1179 = vpow.pop %v1178
    %v1180 = vmul.f32 %v1039, 1.442695
    %v1181 = vpow.pop %v1180
    %v1182 = vmul.f32 %v1040, 1.442695
    %v1183 = vpow.pop %v1182
    %v1184 = vmul.f32 %v1041, 1.442695
    %v1185 = vpow.pop %v1184
    %v1186 = vmul.f32 %v1042, 1.442695
    %v1187 = vpow.pop %v1186
    %v1188 = vmul.f32 %v1043, 1.442695
    %v1189 = vpow.pop %v1188
    %v1190 = vmul.f32 %v1044, 1.442695
    %v1191 = vpow.pop %v1190
    %v1192 = vmul.f32 %v1045, 1.442695
    %v1193 = vpow.pop %v1192
    %v1194 = vmul.f32 %v1046, 1.442695
    %v1195 = vpow.pop %v1194
    %v1196 = vmul.f32 %v1047, 1.442695
    %v1197 = vpow.pop %v1196
    %v1198 = vmul.f32 %v1048, 1.442695
    %v1199 = vpow.pop %v1198
    %v1200 = vmul.f32 %v1049, 1.442695
    %v1201 = vpow.pop %v1200
    %v1202 = vmul.f32 %v1050, 1.442695
    %v1203 = vpow.pop %v1202
    %v1204 = vmul.f32 %v1051, 1.442695
    %v1205 = vpow.pop %v1204
    %v1206 = vmul.f32 %v1052, 1.442695
    %v1207 = vpow.pop %v1206
    %v1208 = vmul.f32 %v1053, 1.442695
    %v1209 = vpow.pop %v1208
    %v1210 = vmul.f32 %v1054, 1.442695
    %v1211 = vpow.pop %v1210
    %v1212 = vmul.f32 %v1055, 1.442695
    %v1213 = vpow.pop %v1212
    %v1214 = vmul.f32 %v1056, 1.442695
    %v1215 = vpow.pop %v1214
    %v1216 = vmul.f32 %v1057, 1.442695
    %v1217 = vpow.pop %v1216
    %v1218 = vmul.f32 %v1058, 1.442695
    %v1219 = vpow.pop %v1218
    %v1220 = vmul.f32 %v1059, 1.442695
    %v1221 = vpow.pop %v1220
    %v1222 = vmul.f32 %v1060, 1.442695
    %v1223 = vpow.pop %v1222
    %v1224 = vmul.f32 %v1061, 1.442695
    %v1225 = vpow.pop %v1224
    %v1226 = vmul.f32 %v1062, 1.442695
    %v1227 = vpow.pop %v1226
    %v1228 = vmul.f32 %v1063, 1.442695
    %v1229 = vpow.pop %v1228
    %v1230 = vmul.f32 %v1064, 1.442695
    %v1231 = vpow.pop %v1230
    %v1232 = vmul.f32 %v1065, 1.442695
    %v1233 = vpow.pop %v1232
    %v1234 = vmul.f32 %v1066, 1.442695
    %v1235 = vpow.pop %v1234
    %v1236 = vmul.f32 %v1067, 1.442695
    %v1237 = vpow.pop %v1236
    %v1238 = vmul.f32 %v1068, 1.442695
    %v1239 = vpow.pop %v1238
    %v1240 = vmul.f32 %v1069, 1.442695
    %v1241 = vpow.pop %v1240
    %v1242 = vmul.f32 %v1070, 1.442695
    %v1243 = vpow.pop %v1242
    %v1244 = vmul.f32 %v1071, 1.442695
    %v1245 = vpow.pop %v1244
    %v1246 = vmul.f32 %v1072, 1.442695
    %v1247 = vpow.pop %v1246
    %v1248 = vmul.f32 %v1073, 1.442695
    %v1249 = vpow.pop %v1248
    %v1250 = vmul.f32 %v1074, 1.442695
    %v1251 = vpow.pop %v1250
    %v1252 = vmul.f32 %v1075, 1.442695
    %v1253 = vpow.pop %v1252
    %v1254 = vmul.f32 %v1076, 1.442695
    %v1255 = vpow.pop %v1254
    %v1256 = vmul.f32 %v1077, 1.442695
    %v1257 = vpow.pop %v1256
    %v1258 = vmul.f32 %v1078, 1.442695
    %v1259 = vpow.pop %v1258
    %v1260 = vmul.f32 %v1079, 1.442695
    %v1261 = vpow.pop %v1260
    %v1262 = vmul.f32 %v1080, 1.442695
    %v1263 = vpow.pop %v1262
    %v1264 = vmul.f32 %v1081, 1.442695
    %v1265 = vpow.pop %v1264
    %v1266 = vmul.f32 %v1082, 1.442695
    %v1267 = vpow.pop %v1266
    %v1268 = vmul.f32 %v1083, 1.442695
    %v1269 = vpow.pop %v1268
    %v1270 = vmul.f32 %v1084, 1.442695
    %v1271 = vpow.pop %v1270
    %v1272 = vmul.f32 %v1085, 1.442695
    %v1273 = vpow.pop %v1272
    %v1274 = vmul.f32 %v1086, 1.442695
    %v1275 = vpow.pop %v1274
    %v1276 = vmul.f32 %v1087, 1.442695
    %v1277 = vpow.pop %v1276
    %v1278 = vmul.f32 %v1088, 1.442695
    %v1279 = vpow.pop %v1278
    %v1280 = vmul.f32 %v1089, 1.442695
    %v1281 = vpow.pop %v1280
    %v1282 = vsub.f32 %v1155, 1.0
    %v1283 = vsub.f32 %v1157, 1.0
    %v1284 = vsub.f32 %v1159, 1.0
    %v1285 = vsub.f32 %v1161, 1.0
    %v1286 = vsub.f32 %v1163, 1.0
    %v1287 = vsub.f32 %v1165, 1.0
    %v1288 = vsub.f32 %v1167, 1.0
    %v1289 = vsub.f32 %v1169, 1.0
    %v1290 = vsub.f32 %v1171, 1.0
    %v1291 = vsub.f32 %v1173, 1.0
    %v1292 = vsub.f32 %v1175, 1.0
    %v1293 = vsub.f32 %v1177, 1.0
    %v1294 = vsub.f32 %v1179, 1.0
    %v1295 = vsub.f32 %v1181, 1.0
    %v1296 = vsub.f32 %v1183, 1.0
    %v1297 = vsub.f32 %v1185, 1.0
    %v1298 = vsub.f32 %v1187, 1.0
    %v1299 = vsub.f32 %v1189, 1.0
    %v1300 = vsub.f32 %v1191, 1.0
    %v1301 = vsub.f32 %v1193, 1.0
    %v1302 = vsub.f32 %v1195, 1.0
    %v1303 = vsub.f32 %v1197, 1.0
    %v1304 = vsub.f32 %v1199, 1.0
    %v1305 = vsub.f32 %v1201, 1.0
    %v1306 = vsub.f32 %v1203, 1.0
    %v1307 = vsub.f32 %v1205, 1.0
    %v1308 = vsub.f32 %v1207, 1.0
    %v1309 = vsub.f32 %v1209, 1.0
    %v1310 = vsub.f32 %v1211, 1.0
    %v1311 = vsub.f32 %v1213, 1.0
    %v1312 = vsub.f32 %v1215, 1.0
    %v1313 = vsub.f32 %v1217, 1.0
    %v1314 = vsub.f32 %v1219, 1.0
    %v1315 = vsub.f32 %v1221, 1.0
    %v1316 = vsub.f32 %v1223, 1.0
    %v1317 = vsub.f32 %v1225, 1.0
    %v1318 = vsub.f32 %v1227, 1.0
    %v1319 = vsub.f32 %v1229, 1.0
    %v1320 = vsub.f32 %v1231, 1.0
    %v1321 = vsub.f32 %v1233, 1.0
    %v1322 = vsub.f32 %v1235, 1.0
    %v1323 = vsub.f32 %v1237, 1.0
    %v1324 = vsub.f32 %v1239, 1.0
    %v1325 = vsub.f32 %v1241, 1.0
    %v1326 = vsub.f32 %v1243, 1.0
    %v1327 = vsub.f32 %v1245, 1.0
    %v1328 = vsub.f32 %v1247, 1.0
    %v1329 = vsub.f32 %v1249, 1.0
    %v1330 = vsub.f32 %v1251, 1.0
    %v1331 = vsub.f32 %v1253, 1.0
    %v1332 = vsub.f32 %v1255, 1.0
    %v1333 = vsub.f32 %v1257, 1.0
    %v1334 = vsub.f32 %v1259, 1.0
    %v1335 = vsub.f32 %v1261, 1.0
    %v1336 = vsub.f32 %v1263, 1.0
    %v1337 = vsub.f32 %v1265, 1.0
    %v1338 = vsub.f32 %v1267, 1.0
    %v1339 = vsub.f32 %v1269, 1.0
    %v1340 = vsub.f32 %v1271, 1.0
    %v1341 = vsub.f32 %v1273, 1.0
    %v1342 = vsub.f32 %v1275, 1.0
    %v1343 = vsub.f32 %v1277, 1.0
    %v1344 = vsub.f32 %v1279, 1.0
    %v1345 = vsub.f32 %v1281, 1.0
    %v1346 = vmul.f32 %v1282, 0.2
    %v1347 = vmul.f32 %v1283, 0.2
    %v1348 = vmul.f32 %v1284, 0.2
    %v1349 = vmul.f32 %v1285, 0.2
    %v1350 = vmul.f32 %v1286, 0.2
    %v1351 = vmul.f32 %v1287, 0.2
    %v1352 = vmul.f32 %v1288, 0.2
    %v1353 = vmul.f32 %v1289, 0.2
    %v1354 = vmul.f32 %v1290, 0.2
    %v1355 = vmul.f32 %v1291, 0.2
    %v1356 = vmul.f32 %v1292, 0.2
    %v1357 = vmul.f32 %v1293, 0.2
    %v1358 = vmul.f32 %v1294, 0.2
    %v1359 = vmul.f32 %v1295, 0.2
    %v1360 = vmul.f32 %v1296, 0.2
    %v1361 = vmul.f32 %v1297, 0.2
    %v1362 = vmul.f32 %v1298, 0.2
    %v1363 = vmul.f32 %v1299, 0.2
    %v1364 = vmul.f32 %v1300, 0.2
    %v1365 = vmul.f32 %v1301, 0.2
    %v1366 = vmul.f32 %v1302, 0.2
    %v1367 = vmul.f32 %v1303, 0.2
    %v1368 = vmul.f32 %v1304, 0.2
    %v1369 = vmul.f32 %v1305, 0.2
    %v1370 = vmul.f32 %v1306, 0.2
    %v1371 = vmul.f32 %v1307, 0.2
    %v1372 = vmul.f32 %v1308, 0.2
    %v1373 = vmul.f32 %v1309, 0.2
    %v1374 = vmul.f32 %v1310, 0.2
    %v1375 = vmul.f32 %v1311, 0.2
    %v1376 = vmul.f32 %v1312, 0.2
    %v1377 = vmul.f32 %v1313, 0.2
    %v1378 = vmul.f32 %v1314, 0.2
    %v1379 = vmul.f32 %v1315, 0.2
    %v1380 = vmul.f32 %v1316, 0.2
    %v1381 = vmul.f32 %v1317, 0.2
    %v1382 = vmul.f32 %v1318, 0.2
    %v1383 = vmul.f32 %v1319, 0.2
    %v1384 = vmul.f32 %v1320, 0.2
    %v1385 = vmul.f32 %v1321, 0.2
    %v1386 = vmul.f32 %v1322, 0.2
    %v1387 = vmul.f32 %v1323, 0.2
    %v1388 = vmul.f32 %v1324, 0.2
    %v1389 = vmul.f32 %v1325, 0.2
    %v1390 = vmul.f32 %v1326, 0.2
    %v1391 = vmul.f32 %v1327, 0.2
    %v1392 = vmul.f32 %v1328, 0.2
    %v1393 = vmul.f32 %v1329, 0.2
    %v1394 = vmul.f32 %v1330, 0.2
    %v1395 = vmul.f32 %v1331, 0.2
    %v1396 = vmul.f32 %v1332, 0.2
    %v1397 = vmul.f32 %v1333, 0.2
    %v1398 = vmul.f32 %v1334, 0.2
    %v1399 = vmul.f32 %v1335, 0.2
    %v1400 = vmul.f32 %v1336, 0.2
    %v1401 = vmul.f32 %v1337, 0.2
    %v1402 = vmul.f32 %v1338, 0.2
    %v1403 = vmul.f32 %v1339, 0.2
    %v1404 = vmul.f32 %v1340, 0.2
    %v1405 = vmul.f32 %v1341, 0.2
    %v1406 = vmul.f32 %v1342, 0.2
    %v1407 = vmul.f32 %v1343, 0.2
    %v1408 = vmul.f32 %v1344, 0.2
    %v1409 = vmul.f32 %v1345, 0.2
    %v1410 = vsel %vm1090, %v1026, %v1346
    %v1411 = vsel %vm1091, %v1027, %v1347
    %v1412 = vsel %vm1092, %v1028, %v1348
    %v1413 = vsel %vm1093, %v1029, %v1349
    %v1414 = vsel %vm1094, %v1030, %v1350
    %v1415 = vsel %vm1095, %v1031, %v1351
    %v1416 = vsel %vm1096, %v1032, %v1352
    %v1417 = vsel %vm1097, %v1033, %v1353
    %v1418 = vsel %vm1098, %v1034, %v1354
    %v1419 = vsel %vm1099, %v1035, %v1355
    %v1420 = vsel %vm1100, %v1036, %v1356
    %v1421 = vsel %vm1101, %v1037, %v1357
    %v1422 = vsel %vm1102, %v1038, %v1358
    %v1423 = vsel %vm1103, %v1039, %v1359
    %v1424 = vsel %vm1104, %v1040, %v1360
    %v1425 = vsel %vm1105, %v1041, %v1361
    %v1426 = vsel %vm1106, %v1042, %v1362
    %v1427 = vsel %vm1107, %v1043, %v1363
    %v1428 = vsel %vm1108, %v1044, %v1364
    %v1429 = vsel %vm1109, %v1045, %v1365
    %v1430 = vsel %vm1110, %v1046, %v1366
    %v1431 = vsel %vm1111, %v1047, %v1367
    %v1432 = vsel %vm1112, %v1048, %v1368
    %v1433 = vsel %vm1113, %v1049, %v1369
    %v1434 = vsel %vm1114, %v1050, %v1370
    %v1435 = vsel %vm1115, %v1051, %v1371
    %v1436 = vsel %vm1116, %v1052, %v1372
    %v1437 = vsel %vm1117, %v1053, %v1373
    %v1438 = vsel %vm1118, %v1054, %v1374
    %v1439 = vsel %vm1119, %v1055, %v1375
    %v1440 = vsel %vm1120, %v1056, %v1376
    %v1441 = vsel %vm1121, %v1057, %v1377
    %v1442 = vsel %vm1122, %v1058, %v1378
    %v1443 = vsel %vm1123, %v1059, %v1379
    %v1444 = vsel %vm1124, %v1060, %v1380
    %v1445 = vsel %vm1125, %v1061, %v1381
    %v1446 = vsel %vm1126, %v1062, %v1382
    %v1447 = vsel %vm1127, %v1063, %v1383
    %v1448 = vsel %vm1128, %v1064, %v1384
    %v1449 = vsel %vm1129, %v1065, %v1385
    %v1450 = vsel %vm1130, %v1066, %v1386
    %v1451 = vsel %vm1131, %v1067, %v1387
    %v1452 = vsel %vm1132, %v1068, %v1388
    %v1453 = vsel %vm1133, %v1069, %v1389
    %v1454 = vsel %vm1134, %v1070, %v1390
    %v1455 = vsel %vm1135, %v1071, %v1391
    %v1456 = vsel %vm1136, %v1072, %v1392
    %v1457 = vsel %vm1137, %v1073, %v1393
    %v1458 = vsel %vm1138, %v1074, %v1394
    %v1459 = vsel %vm1139, %v1075, %v1395
    %v1460 = vsel %vm1140, %v1076, %v1396
    %v1461 = vsel %vm1141, %v1077, %v1397
    %v1462 = vsel %vm1142, %v1078, %v1398
    %v1463 = vsel %vm1143, %v1079, %v1399
    %v1464 = vsel %vm1144, %v1080, %v1400
    %v1465 = vsel %vm1145, %v1081, %v1401
    %v1466 = vsel %vm1146, %v1082, %v1402
    %v1467 = vsel %vm1147, %v1083, %v1403
    %v1468 = vsel %vm1148, %v1084, %v1404
    %v1469 = vsel %vm1149, %v1085, %v1405
    %v1470 = vsel %vm1150, %v1086, %v1406
    %v1471 = vsel %vm1151, %v1087, %v1407
    %v1472 = vsel %vm1152, %v1088, %v1408
    %v1473 = vsel %vm1153, %v1089, %v1409
    %1474 = vst [vmem:[%s2] sm:$0xff] %v1410
    %1475 = vst [vmem:[%s2 + $0x8] sm:$0xff] %v1411
    %1476 = vst [vmem:[%s2 + $0x10] sm:$0xff] %v1412
    %1477 = vst [vmem:[%s2 + $0x18] sm:$0xff] %v1413
    %1478 = vst [vmem:[%s2 + $0x20] sm:$0xff] %v1414
    %1479 = vst [vmem:[%s2 + $0x28] sm:$0xff] %v1415
    %1480 = vst [vmem:[%s2 + $0x30] sm:$0xff] %v1416
    %1481 = vst [vmem:[%s2 + $0x38] sm:$0xff] %v1417
    %1482 = vst [vmem:[%s2 + $0x40] sm:$0xff] %v1418
    %1483 = vst [vmem:[%s2 + $0x48] sm:$0xff] %v1419
    %1484 = vst [vmem:[%s2 + $0x50] sm:$0xff] %v1420
    %1485 = vst [vmem:[%s2 + $0x58] sm:$0xff] %v1421
    %1486 = vst [vmem:[%s2 + $0x60] sm:$0xff] %v1422
    %1487 = vst [vmem:[%s2 + $0x68] sm:$0xff] %v1423
    %1488 = vst [vmem:[%s2 + $0x70] sm:$0xff] %v1424
    %1489 = vst [vmem:[%s2 + $0x78] sm:$0xff] %v1425
    %1490 = vst [vmem:[%s2 + $0x80] sm:$0xff] %v1426
    %1491 = vst [vmem:[%s2 + $0x88] sm:$0xff] %v1427
    %1492 = vst [vmem:[%s2 + $0x90] sm:$0xff] %v1428
    %1493 = vst [vmem:[%s2 + $0x98] sm:$0xff] %v1429
    %1494 = vst [vmem:[%s2 + $0xa0] sm:$0xff] %v1430
    %1495 = vst [vmem:[%s2 + $0xa8] sm:$0xff] %v1431
    %1496 = vst [vmem:[%s2 + $0xb0] sm:$0xff] %v1432
    %1497 = vst [vmem:[%s2 + $0xb8] sm:$0xff] %v1433
    %1498 = vst [vmem:[%s2 + $0xc0] sm:$0xff] %v1434
    %1499 = vst [vmem:[%s2 + $0xc8] sm:$0xff] %v1435
    %1500 = vst [vmem:[%s2 + $0xd0] sm:$0xff] %v1436
    %1501 = vst [vmem:[%s2 + $0xd8] sm:$0xff] %v1437
    %1502 = vst [vmem:[%s2 + $0xe0] sm:$0xff] %v1438
    %1503 = vst [vmem:[%s2 + $0xe8] sm:$0xff] %v1439
    %1504 = vst [vmem:[%s2 + $0xf0] sm:$0xff] %v1440
    %1505 = vst [vmem:[%s2 + $0xf8] sm:$0xff] %v1441
    %1506 = vst [vmem:[%s2 + $0x100] sm:$0xff] %v1442
    %1507 = vst [vmem:[%s2 + $0x108] sm:$0xff] %v1443
    %1508 = vst [vmem:[%s2 + $0x110] sm:$0xff] %v1444
    %1509 = vst [vmem:[%s2 + $0x118] sm:$0xff] %v1445
    %1510 = vst [vmem:[%s2 + $0x120] sm:$0xff] %v1446
    %1511 = vst [vmem:[%s2 + $0x128] sm:$0xff] %v1447
    %1512 = vst [vmem:[%s2 + $0x130] sm:$0xff] %v1448
    %1513 = vst [vmem:[%s2 + $0x138] sm:$0xff] %v1449
    %1514 = vst [vmem:[%s2 + $0x140] sm:$0xff] %v1450
    %1515 = vst [vmem:[%s2 + $0x148] sm:$0xff] %v1451
    %1516 = vst [vmem:[%s2 + $0x150] sm:$0xff] %v1452
    %1517 = vst [vmem:[%s2 + $0x158] sm:$0xff] %v1453
    %1518 = vst [vmem:[%s2 + $0x160] sm:$0xff] %v1454
    %1519 = vst [vmem:[%s2 + $0x168] sm:$0xff] %v1455
    %1520 = vst [vmem:[%s2 + $0x170] sm:$0xff] %v1456
    %1521 = vst [vmem:[%s2 + $0x178] sm:$0xff] %v1457
    %1522 = vst [vmem:[%s2 + $0x180] sm:$0xff] %v1458
    %1523 = vst [vmem:[%s2 + $0x188] sm:$0xff] %v1459
    %1524 = vst [vmem:[%s2 + $0x190] sm:$0xff] %v1460
    %1525 = vst [vmem:[%s2 + $0x198] sm:$0xff] %v1461
    %1526 = vst [vmem:[%s2 + $0x1a0] sm:$0xff] %v1462
    %1527 = vst [vmem:[%s2 + $0x1a8] sm:$0xff] %v1463
    %1528 = vst [vmem:[%s2 + $0x1b0] sm:$0xff] %v1464
    %1529 = vst [vmem:[%s2 + $0x1b8] sm:$0xff] %v1465
    %1530 = vst [vmem:[%s2 + $0x1c0] sm:$0xff] %v1466
    %1531 = vst [vmem:[%s2 + $0x1c8] sm:$0xff] %v1467
    %1532 = vst [vmem:[%s2 + $0x1d0] sm:$0xff] %v1468
    %1533 = vst [vmem:[%s2 + $0x1d8] sm:$0xff] %v1469
    %1534 = vst [vmem:[%s2 + $0x1e0] sm:$0xff] %v1470
    %1535 = vst [vmem:[%s2 + $0x1e8] sm:$0xff] %v1471
    %1536 = vst [vmem:[%s2 + $0x1f0] sm:$0xff] %v1472
    %1537 = vst [vmem:[%s2 + $0x1f8] sm:$0xff] %v1473
  $region13: #{_lambda_.6} parent=0 // pred_fallthru
    _
  // Predicated region
  $region14: #{_lambda_.6} parent=0 // pred_check
    _
  $region15: #{_lambda_.6} parent=0 // pred_check_branch
    %1539 = sbr.rel (0) target = $region17
  $region16: #{_lambda_.6} parent=0 // pred_region
    _
  $region17: #{_lambda_.6} parent=0 // pred_fallthru
    _
  // Predicated region
  $region18: #{_lambda_.6} parent=0 // pred_check
    _
  $region19: #{_lambda_.6} parent=0 // pred_check_branch
    %1541 = sbr.rel (0) target = $region21
  $region20: #{_lambda_.6} parent=0 // pred_region
    _
  $region21: #{_lambda_.6} parent=0 // pred_fallthru
    _

// kernel: _lambda_.7
$region0: #{_lambda_.7}
  #allocation0 [shape = 'u32[]', space=smem, size = 0x4, offset = 0x4, fixed_abs, tag = 'smem constant byte address 0x4 - core index']
  #allocation1 [shape = 'u32[144,128]{1,0:T(1,128)}', space=vmem, size = 0x12000, scoped, tag = 'internal scratch']
  %s0 = inlined_call_operand.vmem [shape: bf16[128,256], index: 0, kind: input, shape index: {}]
  %s1 = inlined_call_operand.vmem [shape: bf16[256,128], index: 1, kind: input, shape index: {}]
  %s2 = inlined_call_operand.vmem [shape: f32[128,128], index: 2, kind: output, shape index: {}]
  %s3 = sld [smem:[#allocation0]]
  $region22: #{_lambda_.7} parent=0
    _
  %s5 = ssub.s32 1, %s3
  %s6 = scalar_select 0, %s5, %s3
  // Predicated region
  $region2: #{_lambda_.7} parent=0 // pred_check
    _
  $region3: #{_lambda_.7} parent=0 // pred_check_branch
    %8 = sbr.rel (0) target = $region5
  $region4: #{_lambda_.7} parent=0 // pred_region
    _
  $region5: #{_lambda_.7} parent=0 // pred_fallthru
    _
  // Predicated region
  $region6: #{_lambda_.7} parent=0 // pred_check
    _
  $region7: #{_lambda_.7} parent=0 // pred_check_branch
    %10 = sbr.rel (0) target = $region9
  $region8: #{_lambda_.7} parent=0 // pred_region
    _
  $region9: #{_lambda_.7} parent=0 // pred_fallthru
    _
  %v12 = vld [vmem:[%s0] sm:$0xff]
  %v13 = vld [vmem:[%s0 + $0x8] sm:$0xff]
  %v14 = vld [vmem:[%s0 + $0x10] sm:$0xff]
  %v15 = vld [vmem:[%s0 + $0x18] sm:$0xff]
  %v16 = vld [vmem:[%s0 + $0x20] sm:$0xff]
  %v17 = vld [vmem:[%s0 + $0x28] sm:$0xff]
  %v18 = vld [vmem:[%s0 + $0x30] sm:$0xff]
  %v19 = vld [vmem:[%s0 + $0x38] sm:$0xff]
  %v20 = vld [vmem:[%s0 + $0x40] sm:$0xff]
  %v21 = vld [vmem:[%s0 + $0x48] sm:$0xff]
  %v22 = vld [vmem:[%s0 + $0x50] sm:$0xff]
  %v23 = vld [vmem:[%s0 + $0x58] sm:$0xff]
  %v24 = vld [vmem:[%s0 + $0x60] sm:$0xff]
  %v25 = vld [vmem:[%s0 + $0x68] sm:$0xff]
  %v26 = vld [vmem:[%s0 + $0x70] sm:$0xff]
  %v27 = vld [vmem:[%s0 + $0x78] sm:$0xff]
  %v28 = vld [vmem:[%s1] sm:$0xf]
  %v29 = vld [vmem:[%s1 + $0x4] sm:$0xf]
  %v30 = vld [vmem:[%s1 + $0x8] sm:$0xf]
  %v31 = vld [vmem:[%s1 + $0xc] sm:$0xf]
  %v32 = vld [vmem:[%s1 + $0x10] sm:$0xf]
  %v33 = vld [vmem:[%s1 + $0x14] sm:$0xf]
  %v34 = vld [vmem:[%s1 + $0x18] sm:$0xf]
  %v35 = vld [vmem:[%s1 + $0x1c] sm:$0xf]
  %v36 = vld [vmem:[%s1 + $0x20] sm:$0xf]
  %v37 = vld [vmem:[%s1 + $0x24] sm:$0xf]
  %v38 = vld [vmem:[%s1 + $0x28] sm:$0xf]
  %v39 = vld [vmem:[%s1 + $0x2c] sm:$0xf]
  %v40 = vld [vmem:[%s1 + $0x30] sm:$0xf]
  %v41 = vld [vmem:[%s1 + $0x34] sm:$0xf]
  %v42 = vld [vmem:[%s1 + $0x38] sm:$0xf]
  %v43 = vld [vmem:[%s1 + $0x3c] sm:$0xf]
  %v44 = vld [vmem:[%s1 + $0x40] sm:$0xf]
  %v45 = vld [vmem:[%s1 + $0x44] sm:$0xf]
  %v46 = vld [vmem:[%s1 + $0x48] sm:$0xf]
  %v47 = vld [vmem:[%s1 + $0x4c] sm:$0xf]
  %v48 = vld [vmem:[%s1 + $0x50] sm:$0xf]
  %v49 = vld [vmem:[%s1 + $0x54] sm:$0xf]
  %v50 = vld [vmem:[%s1 + $0x58] sm:$0xf]
  %v51 = vld [vmem:[%s1 + $0x5c] sm:$0xf]
  %v52 = vld [vmem:[%s1 + $0x60] sm:$0xf]
  %v53 = vld [vmem:[%s1 + $0x64] sm:$0xf]
  %v54 = vld [vmem:[%s1 + $0x68] sm:$0xf]
  %v55 = vld [vmem:[%s1 + $0x6c] sm:$0xf]
  %v56 = vld [vmem:[%s1 + $0x70] sm:$0xf]
  %v57 = vld [vmem:[%s1 + $0x74] sm:$0xf]
  %v58 = vld [vmem:[%s1 + $0x78] sm:$0xf]
  %v59 = vld [vmem:[%s1 + $0x7c] sm:$0xf]
  %v76 = vunpack.c.l.b16 %v12
  %v77 = vunpack.c.h.b16 %v12
  %v78 = vunpack.c.l.b16 %v13
  %v79 = vunpack.c.h.b16 %v13
  %v80 = vunpack.c.l.b16 %v14
  %v81 = vunpack.c.h.b16 %v14
  %v82 = vunpack.c.l.b16 %v15
  %v83 = vunpack.c.h.b16 %v15
  %v84 = vunpack.c.l.b16 %v16
  %v85 = vunpack.c.h.b16 %v16
  %v86 = vunpack.c.l.b16 %v17
  %v87 = vunpack.c.h.b16 %v17
  %v88 = vunpack.c.l.b16 %v18
  %v89 = vunpack.c.h.b16 %v18
  %v90 = vunpack.c.l.b16 %v19
  %v91 = vunpack.c.h.b16 %v19
  %v92 = vunpack.c.l.b16 %v20
  %v93 = vunpack.c.h.b16 %v20
  %v94 = vunpack.c.l.b16 %v21
  %v95 = vunpack.c.h.b16 %v21
  %v96 = vunpack.c.l.b16 %v22
  %v97 = vunpack.c.h.b16 %v22
  %v98 = vunpack.c.l.b16 %v23
  %v99 = vunpack.c.h.b16 %v23
  %v100 = vunpack.c.l.b16 %v24
  %v101 = vunpack.c.h.b16 %v24
  %v102 = vunpack.c.l.b16 %v25
  %v103 = vunpack.c.h.b16 %v25
  %v104 = vunpack.c.l.b16 %v26
  %v105 = vunpack.c.h.b16 %v26
  %v106 = vunpack.c.l.b16 %v27
  %v107 = vunpack.c.h.b16 %v27
  %v108 = vpack.c.b16 %v78, %v76
  %v109 = vpack.c.b16 %v79, %v77
  %v110 = vpack.c.b16 %v82, %v80
  %v111 = vpack.c.b16 %v83, %v81
  %v112 = vpack.c.b16 %v86, %v84
  %v113 = vpack.c.b16 %v87, %v85
  %v114 = vpack.c.b16 %v90, %v88
  %v115 = vpack.c.b16 %v91, %v89
  %v116 = vpack.c.b16 %v94, %v92
  %v117 = vpack.c.b16 %v95, %v93
  %v118 = vpack.c.b16 %v98, %v96
  %v119 = vpack.c.b16 %v99, %v97
  %v120 = vpack.c.b16 %v102, %v100
  %v121 = vpack.c.b16 %v103, %v101
  %v122 = vpack.c.b16 %v106, %v104
  %v123 = vpack.c.b16 %v107, %v105
  %v172 = vunpack.c.l.b16 %v28
  %v173 = vunpack.c.l.b16 %v29
  %v174 = vunpack.c.l.b16 %v30
  %v175 = vunpack.c.l.b16 %v31
  %v176 = vunpack.c.l.b16 %v32
  %v177 = vunpack.c.l.b16 %v33
  %v178 = vunpack.c.l.b16 %v34
  %v179 = vunpack.c.l.b16 %v35
  %v180 = vunpack.c.l.b16 %v36
  %v181 = vunpack.c.l.b16 %v37
  %v182 = vunpack.c.l.b16 %v38
  %v183 = vunpack.c.l.b16 %v39
  %v184 = vunpack.c.l.b16 %v40
  %v185 = vunpack.c.l.b16 %v41
  %v186 = vunpack.c.l.b16 %v42
  %v187 = vunpack.c.l.b16 %v43
  %v188 = vunpack.c.l.b16 %v44
  %v189 = vunpack.c.l.b16 %v45
  %v190 = vunpack.c.l.b16 %v46
  %v191 = vunpack.c.l.b16 %v47
  %v192 = vunpack.c.l.b16 %v48
  %v193 = vunpack.c.l.b16 %v49
  %v194 = vunpack.c.l.b16 %v50
  %v195 = vunpack.c.l.b16 %v51
  %v196 = vunpack.c.l.b16 %v52
  %v197 = vunpack.c.l.b16 %v53
  %v198 = vunpack.c.l.b16 %v54
  %v199 = vunpack.c.l.b16 %v55
  %v200 = vunpack.c.l.b16 %v56
  %v201 = vunpack.c.l.b16 %v57
  %v202 = vunpack.c.l.b16 %v58
  %v203 = vunpack.c.l.b16 %v59
  %v204 = vpack.c.b16 %v173, %v172
  %v205 = vpack.c.b16 %v175, %v174
  %v206 = vpack.c.b16 %v177, %v176
  %v207 = vpack.c.b16 %v179, %v178
  %v208 = vpack.c.b16 %v181, %v180
  %v209 = vpack.c.b16 %v183, %v182
  %v210 = vpack.c.b16 %v185, %v184
  %v211 = vpack.c.b16 %v187, %v186
  %v212 = vpack.c.b16 %v189, %v188
  %v213 = vpack.c.b16 %v191, %v190
  %v214 = vpack.c.b16 %v193, %v192
  %v215 = vpack.c.b16 %v195, %v194
  %v216 = vpack.c.b16 %v197, %v196
  %v217 = vpack.c.b16 %v199, %v198
  %v218 = vpack.c.b16 %v201, %v200
  %v219 = vpack.c.b16 %v203, %v202
  %236 = vmatprep.subr.bf16.mxu0 0
  %237 = vmatpush1.bf16.msra.mxu0 %v211
  %238 = vmatprep.subr.bf16.mxu0 0
  %239 = vmatpush1.bf16.msra.mxu0 %v210
  %240 = vmatprep.subr.bf16.mxu0 0
  %241 = vmatpush1.bf16.msra.mxu0 %v209
  %242 = vmatprep.subr.bf16.mxu0 0
  %243 = vmatpush1.bf16.msra.mxu0 %v208
  %244 = vmatprep.subr.bf16.mxu0 0
  %245 = vmatpush1.bf16.msra.mxu0 %v207
  %246 = vmatprep.subr.bf16.mxu0 0
  %247 = vmatpush1.bf16.msra.mxu0 %v206
  %248 = vmatprep.subr.bf16.mxu0 0
  %249 = vmatpush1.bf16.msra.mxu0 %v205
  %250 = vmatprep.subr.bf16.mxu0 0
  %251 = vmatpush1.bf16.msra.mxu0 %v204
  %252 = vmatprep.subr.bf16.mxu0 0
  %253 = vmatpush2.bf16.msra.mxu0 %v219
  %254 = vmatprep.subr.bf16.mxu0 0
  %255 = vmatpush2.bf16.msra.mxu0 %v218
  %256 = vmatprep.subr.bf16.mxu0 0
  %257 = vmatpush2.bf16.msra.mxu0 %v217
  %258 = vmatprep.subr.bf16.mxu0 0
  %259 = vmatpush2.bf16.msra.mxu0 %v216
  %260 = vmatprep.subr.bf16.mxu0 0
  %261 = vmatpush2.bf16.msra.mxu0 %v215
  %262 = vmatprep.subr.bf16.mxu0 0
  %263 = vmatpush2.bf16.msra.mxu0 %v214
  %264 = vmatprep.subr.bf16.mxu0 0
  %265 = vmatpush2.bf16.msra.mxu0 %v213
  %266 = vmatprep.subr.bf16.mxu0 0
  %267 = vmatpush2.bf16.msra.mxu0 %v212
  %268 = vmatprep.mubr.bf16.mxu0 %v109
  %269 = vmatmul.mubr.bf16.gmra.mxu0 %v108
  %v270 = vpop.f32.mrf.mxu0
  %v271 = vadd.f32 0.0, %v270
  %v272 = vpop.f32.mrf.mxu0
  %v273 = vpop.f32.mrf.mxu0
  %v274 = vadd.f32 0.0, %v273
  %v275 = vpop.f32.mrf.mxu0
  %276 = vmatprep.mubr.bf16.mxu0 %v111
  %277 = vmatmul.mubr.bf16.gmra.mxu0 %v110
  %v278 = vpop.f32.mrf.mxu0
  %v279 = vadd.f32 0.0, %v278
  %v280 = vpop.f32.mrf.mxu0
  %v281 = vpop.f32.mrf.mxu0
  %v282 = vadd.f32 0.0, %v281
  %v283 = vpop.f32.mrf.mxu0
  %284 = vmatprep.mubr.bf16.mxu0 %v113
  %285 = vmatmul.mubr.bf16.gmra.mxu0 %v112
  %v286 = vpop.f32.mrf.mxu0
  %v287 = vadd.f32 0.0, %v286
  %v288 = vpop.f32.mrf.mxu0
  %v289 = vpop.f32.mrf.mxu0
  %v290 = vadd.f32 0.0, %v289
  %v291 = vpop.f32.mrf.mxu0
  %292 = vmatprep.mubr.bf16.mxu0 %v115
  %293 = vmatmul.mubr.bf16.gmra.mxu0 %v114
  %v294 = vpop.f32.mrf.mxu0
  %v295 = vadd.f32 0.0, %v294
  %v296 = vpop.f32.mrf.mxu0
  %v297 = vpop.f32.mrf.mxu0
  %v298 = vadd.f32 0.0, %v297
  %v299 = vpop.f32.mrf.mxu0
  %300 = vmatprep.mubr.bf16.mxu0 %v117
  %301 = vmatmul.mubr.bf16.gmra.mxu0 %v116
  %v302 = vpop.f32.mrf.mxu0
  %v303 = vadd.f32 0.0, %v302
  %v304 = vpop.f32.mrf.mxu0
  %v305 = vpop.f32.mrf.mxu0
  %v306 = vadd.f32 0.0, %v305
  %v307 = vpop.f32.mrf.mxu0
  %308 = vmatprep.mubr.bf16.mxu0 %v119
  %309 = vmatmul.mubr.bf16.gmra.mxu0 %v118
  %v310 = vpop.f32.mrf.mxu0
  %v311 = vadd.f32 0.0, %v310
  %v312 = vpop.f32.mrf.mxu0
  %v313 = vpop.f32.mrf.mxu0
  %v314 = vadd.f32 0.0, %v313
  %v315 = vpop.f32.mrf.mxu0
  %316 = vmatprep.mubr.bf16.mxu0 %v121
  %317 = vmatmul.mubr.bf16.gmra.mxu0 %v120
  %v318 = vpop.f32.mrf.mxu0
  %v319 = vadd.f32 0.0, %v318
  %v320 = vpop.f32.mrf.mxu0
  %v321 = vpop.f32.mrf.mxu0
  %v322 = vadd.f32 0.0, %v321
  %v323 = vpop.f32.mrf.mxu0
  %324 = vmatprep.mubr.bf16.mxu0 %v123
  %325 = vmatmul.mubr.bf16.gmra.mxu0 %v122
  %v326 = vpop.f32.mrf.mxu0
  %v327 = vadd.f32 0.0, %v326
  %v328 = vpop.f32.mrf.mxu0
  %v329 = vpop.f32.mrf.mxu0
  %v330 = vadd.f32 0.0, %v329
  %v331 = vpop.f32.mrf.mxu0
  %332 = vdwg.mxu0
  %s333 = smul.u32 0, 128
  %s334 = scalar_lea.vmem %s2, %s333
  %335 = vst [vmem:[%s334] sm:$0xff] %v271
  %336 = vst [vmem:[%s334 + $0x8] sm:$0xff] %v274
  %337 = vst [vmem:[%s334 + $0x10] sm:$0xff] %v279
  %338 = vst [vmem:[%s334 + $0x18] sm:$0xff] %v282
  %339 = vst [vmem:[%s334 + $0x20] sm:$0xff] %v287
  %340 = vst [vmem:[%s334 + $0x28] sm:$0xff] %v290
  %341 = vst [vmem:[%s334 + $0x30] sm:$0xff] %v295
  %342 = vst [vmem:[%s334 + $0x38] sm:$0xff] %v298
  %343 = vst [vmem:[%s334 + $0x40] sm:$0xff] %v303
  %344 = vst [vmem:[%s334 + $0x48] sm:$0xff] %v306
  %345 = vst [vmem:[%s334 + $0x50] sm:$0xff] %v311
  %346 = vst [vmem:[%s334 + $0x58] sm:$0xff] %v314
  %347 = vst [vmem:[%s334 + $0x60] sm:$0xff] %v319
  %348 = vst [vmem:[%s334 + $0x68] sm:$0xff] %v322
  %349 = vst [vmem:[%s334 + $0x70] sm:$0xff] %v327
  %350 = vst [vmem:[%s334 + $0x78] sm:$0xff] %v330
  %p351 = scmp.eq.s32.totalorder 0, 0
  // Predicated region
  $region10: #{_lambda_.7} parent=0 // pred_check
    %p352 = pneg %p351
  $region11: #{_lambda_.7} parent=0 // pred_check_branch
    %354 = sbr.rel (%p352) target = $region13
  $region12: #{_lambda_.7} parent=0 // pred_region
    %v355 = vld [vmem:[%s2] sm:$0xff]
    %v356 = vld [vmem:[%s2 + $0x8] sm:$0xff]
    %v357 = vld [vmem:[%s2 + $0x10] sm:$0xff]
    %v358 = vld [vmem:[%s2 + $0x18] sm:$0xff]
    %v359 = vld [vmem:[%s2 + $0x20] sm:$0xff]
    %v360 = vld [vmem:[%s2 + $0x28] sm:$0xff]
    %v361 = vld [vmem:[%s2 + $0x30] sm:$0xff]
    %v362 = vld [vmem:[%s2 + $0x38] sm:$0xff]
    %v363 = vld [vmem:[%s2 + $0x40] sm:$0xff]
    %v364 = vld [vmem:[%s2 + $0x48] sm:$0xff]
    %v365 = vld [vmem:[%s2 + $0x50] sm:$0xff]
    %v366 = vld [vmem:[%s2 + $0x58] sm:$0xff]
    %v367 = vld [vmem:[%s2 + $0x60] sm:$0xff]
    %v368 = vld [vmem:[%s2 + $0x68] sm:$0xff]
    %v369 = vld [vmem:[%s2 + $0x70] sm:$0xff]
    %v370 = vld [vmem:[%s2 + $0x78] sm:$0xff]
    %v371 = vadd.f32 %v355, %v356
    %v372 = vadd.f32 %v371, %v357
    %v373 = vadd.f32 %v372, %v358
    %v374 = vadd.f32 %v373, %v359
    %v375 = vadd.f32 %v374, %v360
    %v376 = vadd.f32 %v375, %v361
    %v377 = vadd.f32 %v376, %v362
    %v378 = vadd.f32 %v377, %v363
    %v379 = vadd.f32 %v378, %v364
    %v380 = vadd.f32 %v379, %v365
    %v381 = vadd.f32 %v380, %v366
    %v382 = vadd.f32 %v381, %v367
    %v383 = vadd.f32 %v382, %v368
    %v384 = vadd.f32 %v383, %v369
    %v385 = vadd.f32 %v384, %v370
    %v386 = vrot.slane %v385, 4
    %v387 = vadd.f32 %v385, %v386
    %v388 = vrot.slane %v387, 2
    %v389 = vadd.f32 %v387, %v388
    %v390 = vrot.slane %v389, 1
    %v391 = vadd.f32 %v389, %v390
    %v392 = vrcp.pop 128.0
    %v393 = vmul.f32 %v391, %v392
    %v394 = vsub.f32 %v355, %v393
    %v395 = vsub.f32 %v356, %v393
    %v396 = vsub.f32 %v357, %v393
    %v397 = vsub.f32 %v358, %v393
    %v398 = vsub.f32 %v359, %v393
    %v399 = vsub.f32 %v360, %v393
    %v400 = vsub.f32 %v361, %v393
    %v401 = vsub.f32 %v362, %v393
    %v402 = vsub.f32 %v363, %v393
    %v403 = vsub.f32 %v364, %v393
    %v404 = vsub.f32 %v365, %v393
    %v405 = vsub.f32 %v366, %v393
    %v406 = vsub.f32 %v367, %v393
    %v407 = vsub.f32 %v368, %v393
    %v408 = vsub.f32 %v369, %v393
    %v409 = vsub.f32 %v370, %v393
    %v410 = vmul.f32 %v394, %v394
    %v411 = vmul.f32 %v395, %v395
    %v412 = vmul.f32 %v396, %v396
    %v413 = vmul.f32 %v397, %v397
    %v414 = vmul.f32 %v398, %v398
    %v415 = vmul.f32 %v399, %v399
    %v416 = vmul.f32 %v400, %v400
    %v417 = vmul.f32 %v401, %v401
    %v418 = vmul.f32 %v402, %v402
    %v419 = vmul.f32 %v403, %v403
    %v420 = vmul.f32 %v404, %v404
    %v421 = vmul.f32 %v405, %v405
    %v422 = vmul.f32 %v406, %v406
    %v423 = vmul.f32 %v407, %v407
    %v424 = vmul.f32 %v408, %v408
    %v425 = vmul.f32 %v409, %v409
    %v426 = vadd.f32 %v410, %v411
    %v427 = vadd.f32 %v426, %v412
    %v428 = vadd.f32 %v427, %v413
    %v429 = vadd.f32 %v428, %v414
    %v430 = vadd.f32 %v429, %v415
    %v431 = vadd.f32 %v430, %v416
    %v432 = vadd.f32 %v431, %v417
    %v433 = vadd.f32 %v432, %v418
    %v434 = vadd.f32 %v433, %v419
    %v435 = vadd.f32 %v434, %v420
    %v436 = vadd.f32 %v435, %v421
    %v437 = vadd.f32 %v436, %v422
    %v438 = vadd.f32 %v437, %v423
    %v439 = vadd.f32 %v438, %v424
    %v440 = vadd.f32 %v439, %v425
    %v441 = vrot.slane %v440, 4
    %v442 = vadd.f32 %v440, %v441
    %v443 = vrot.slane %v442, 2
    %v444 = vadd.f32 %v442, %v443
    %v445 = vrot.slane %v444, 1
    %v446 = vadd.f32 %v444, %v445
    %v447 = vmul.f32 %v446, %v392
    %v448 = vadd.f32 %v447, 1e-05
    %v449 = vrsqrt.pop %v448
    %v450 = vmul.f32 %v394, %v449
    %v451 = vmul.f32 %v395, %v449
    %v452 = vmul.f32 %v396, %v449
    %v453 = vmul.f32 %v397, %v449
    %v454 = vmul.f32 %v398, %v449
    %v455 = vmul.f32 %v399, %v449
    %v456 = vmul.f32 %v400, %v449
    %v457 = vmul.f32 %v401, %v449
    %v458 = vmul.f32 %v402, %v449
    %v459 = vmul.f32 %v403, %v449
    %v460 = vmul.f32 %v404, %v449
    %v461 = vmul.f32 %v405, %v449
    %v462 = vmul.f32 %v406, %v449
    %v463 = vmul.f32 %v407, %v449
    %v464 = vmul.f32 %v408, %v449
    %v465 = vmul.f32 %v409, %v449
    %vm466 = vcmp.gt.f32.partialorder %v450, 0.0
    %vm467 = vcmp.gt.f32.partialorder %v451, 0.0
    %vm468 = vcmp.gt.f32.partialorder %v452, 0.0
    %vm469 = vcmp.gt.f32.partialorder %v453, 0.0
    %vm470 = vcmp.gt.f32.partialorder %v454, 0.0
    %vm471 = vcmp.gt.f32.partialorder %v455, 0.0
    %vm472 = vcmp.gt.f32.partialorder %v456, 0.0
    %vm473 = vcmp.gt.f32.partialorder %v457, 0.0
    %vm474 = vcmp.gt.f32.partialorder %v458, 0.0
    %vm475 = vcmp.gt.f32.partialorder %v459, 0.0
    %vm476 = vcmp.gt.f32.partialorder %v460, 0.0
    %vm477 = vcmp.gt.f32.partialorder %v461, 0.0
    %vm478 = vcmp.gt.f32.partialorder %v462, 0.0
    %vm479 = vcmp.gt.f32.partialorder %v463, 0.0
    %vm480 = vcmp.gt.f32.partialorder %v464, 0.0
    %vm481 = vcmp.gt.f32.partialorder %v465, 0.0
    %v482 = vmul.f32 %v450, 1.442695
    %v483 = vpow.pop %v482
    %v484 = vmul.f32 %v451, 1.442695
    %v485 = vpow.pop %v484
    %v486 = vmul.f32 %v452, 1.442695
    %v487 = vpow.pop %v486
    %v488 = vmul.f32 %v453, 1.442695
    %v489 = vpow.pop %v488
    %v490 = vmul.f32 %v454, 1.442695
    %v491 = vpow.pop %v490
    %v492 = vmul.f32 %v455, 1.442695
    %v493 = vpow.pop %v492
    %v494 = vmul.f32 %v456, 1.442695
    %v495 = vpow.pop %v494
    %v496 = vmul.f32 %v457, 1.442695
    %v497 = vpow.pop %v496
    %v498 = vmul.f32 %v458, 1.442695
    %v499 = vpow.pop %v498
    %v500 = vmul.f32 %v459, 1.442695
    %v501 = vpow.pop %v500
    %v502 = vmul.f32 %v460, 1.442695
    %v503 = vpow.pop %v502
    %v504 = vmul.f32 %v461, 1.442695
    %v505 = vpow.pop %v504
    %v506 = vmul.f32 %v462, 1.442695
    %v507 = vpow.pop %v506
    %v508 = vmul.f32 %v463, 1.442695
    %v509 = vpow.pop %v508
    %v510 = vmul.f32 %v464, 1.442695
    %v511 = vpow.pop %v510
    %v512 = vmul.f32 %v465, 1.442695
    %v513 = vpow.pop %v512
    %v514 = vsub.f32 %v483, 1.0
    %v515 = vsub.f32 %v485, 1.0
    %v516 = vsub.f32 %v487, 1.0
    %v517 = vsub.f32 %v489, 1.0
    %v518 = vsub.f32 %v491, 1.0
    %v519 = vsub.f32 %v493, 1.0
    %v520 = vsub.f32 %v495, 1.0
    %v521 = vsub.f32 %v497, 1.0
    %v522 = vsub.f32 %v499, 1.0
    %v523 = vsub.f32 %v501, 1.0
    %v524 = vsub.f32 %v503, 1.0
    %v525 = vsub.f32 %v505, 1.0
    %v526 = vsub.f32 %v507, 1.0
    %v527 = vsub.f32 %v509, 1.0
    %v528 = vsub.f32 %v511, 1.0
    %v529 = vsub.f32 %v513, 1.0
    %v530 = vmul.f32 %v514, 0.2
    %v531 = vmul.f32 %v515, 0.2
    %v532 = vmul.f32 %v516, 0.2
    %v533 = vmul.f32 %v517, 0.2
    %v534 = vmul.f32 %v518, 0.2
    %v535 = vmul.f32 %v519, 0.2
    %v536 = vmul.f32 %v520, 0.2
    %v537 = vmul.f32 %v521, 0.2
    %v538 = vmul.f32 %v522, 0.2
    %v539 = vmul.f32 %v523, 0.2
    %v540 = vmul.f32 %v524, 0.2
    %v541 = vmul.f32 %v525, 0.2
    %v542 = vmul.f32 %v526, 0.2
    %v543 = vmul.f32 %v527, 0.2
    %v544 = vmul.f32 %v528, 0.2
    %v545 = vmul.f32 %v529, 0.2
    %v546 = vsel %vm466, %v450, %v530
    %v547 = vsel %vm467, %v451, %v531
    %v548 = vsel %vm468, %v452, %v532
    %v549 = vsel %vm469, %v453, %v533
    %v550 = vsel %vm470, %v454, %v534
    %v551 = vsel %vm471, %v455, %v535
    %v552 = vsel %vm472, %v456, %v536
    %v553 = vsel %vm473, %v457, %v537
    %v554 = vsel %vm474, %v458, %v538
    %v555 = vsel %vm475, %v459, %v539
    %v556 = vsel %vm476, %v460, %v540
    %v557 = vsel %vm477, %v461, %v541
    %v558 = vsel %vm478, %v462, %v542
    %v559 = vsel %vm479, %v463, %v543
    %v560 = vsel %vm480, %v464, %v544
    %v561 = vsel %vm481, %v465, %v545
    %562 = vst [vmem:[%s2] sm:$0xff] %v546
    %563 = vst [vmem:[%s2 + $0x8] sm:$0xff] %v547
    %564 = vst [vmem:[%s2 + $0x10] sm:$0xff] %v548
    %565 = vst [vmem:[%s2 + $0x18] sm:$0xff] %v549
    %566 = vst [vmem:[%s2 + $0x20] sm:$0xff] %v550
    %567 = vst [vmem:[%s2 + $0x28] sm:$0xff] %v551
    %568 = vst [vmem:[%s2 + $0x30] sm:$0xff] %v552
    %569 = vst [vmem:[%s2 + $0x38] sm:$0xff] %v553
    %570 = vst [vmem:[%s2 + $0x40] sm:$0xff] %v554
    %571 = vst [vmem:[%s2 + $0x48] sm:$0xff] %v555
    %572 = vst [vmem:[%s2 + $0x50] sm:$0xff] %v556
    %573 = vst [vmem:[%s2 + $0x58] sm:$0xff] %v557
    %574 = vst [vmem:[%s2 + $0x60] sm:$0xff] %v558
    %575 = vst [vmem:[%s2 + $0x68] sm:$0xff] %v559
    %576 = vst [vmem:[%s2 + $0x70] sm:$0xff] %v560
    %577 = vst [vmem:[%s2 + $0x78] sm:$0xff] %v561
  $region13: #{_lambda_.7} parent=0 // pred_fallthru
    _
  // Predicated region
  $region14: #{_lambda_.7} parent=0 // pred_check
    _
  $region15: #{_lambda_.7} parent=0 // pred_check_branch
    %579 = sbr.rel (0) target = $region17
  $region16: #{_lambda_.7} parent=0 // pred_region
    _
  $region17: #{_lambda_.7} parent=0 // pred_fallthru
    _
  // Predicated region
  $region18: #{_lambda_.7} parent=0 // pred_check
    _
  $region19: #{_lambda_.7} parent=0 // pred_check_branch
    %581 = sbr.rel (0) target = $region21
  $region20: #{_lambda_.7} parent=0 // pred_region
    _
  $region21: #{_lambda_.7} parent=0 // pred_fallthru
    _

// kernel: _lambda_.8
$region0: #{_lambda_.8}
  #allocation0 [shape = 'u32[]', space=smem, size = 0x4, offset = 0x4, fixed_abs, tag = 'smem constant byte address 0x4 - core index']
  #allocation1 [shape = 'u32[144,128]{1,0:T(1,128)}', space=vmem, size = 0x12000, scoped, tag = 'internal scratch']
  %s0 = inlined_call_operand.vmem [shape: bf16[32,512], index: 0, kind: input, shape index: {}]
  %s1 = inlined_call_operand.vmem [shape: bf16[512,128], index: 1, kind: input, shape index: {}]
  %s2 = inlined_call_operand.vmem [shape: f32[32,128], index: 2, kind: output, shape index: {}]
  %s3 = sld [smem:[#allocation0]]
  $region22: #{_lambda_.8} parent=0
    _
  %s5 = ssub.s32 1, %s3
  %s6 = scalar_select 0, %s5, %s3
  // Predicated region
  $region2: #{_lambda_.8} parent=0 // pred_check
    _
  $region3: #{_lambda_.8} parent=0 // pred_check_branch
    %8 = sbr.rel (0) target = $region5
  $region4: #{_lambda_.8} parent=0 // pred_region
    _
  $region5: #{_lambda_.8} parent=0 // pred_fallthru
    _
  // Predicated region
  $region6: #{_lambda_.8} parent=0 // pred_check
    _
  $region7: #{_lambda_.8} parent=0 // pred_check_branch
    %10 = sbr.rel (0) target = $region9
  $region8: #{_lambda_.8} parent=0 // pred_region
    _
  $region9: #{_lambda_.8} parent=0 // pred_fallthru
    _
  %v12 = vld [vmem:[%s0] sm:$0xff]
  %v13 = vld [vmem:[%s0 + $0x8] sm:$0xff]
  %v14 = vld [vmem:[%s0 + $0x10] sm:$0xff]
  %v15 = vld [vmem:[%s0 + $0x18] sm:$0xff]
  %v16 = vld [vmem:[%s0 + $0x20] sm:$0xff]
  %v17 = vld [vmem:[%s0 + $0x28] sm:$0xff]
  %v18 = vld [vmem:[%s0 + $0x30] sm:$0xff]
  %v19 = vld [vmem:[%s0 + $0x38] sm:$0xff]
  %v20 = vld [vmem:[%s1] sm:$0xf]
  %v21 = vld [vmem:[%s1 + $0x4] sm:$0xf]
  %v22 = vld [vmem:[%s1 + $0x8] sm:$0xf]
  %v23 = vld [vmem:[%s1 + $0xc] sm:$0xf]
  %v24 = vld [vmem:[%s1 + $0x10] sm:$0xf]
  %v25 = vld [vmem:[%s1 + $0x14] sm:$0xf]
  %v26 = vld [vmem:[%s1 + $0x18] sm:$0xf]
  %v27 = vld [vmem:[%s1 + $0x1c] sm:$0xf]
  %v28 = vld [vmem:[%s1 + $0x20] sm:$0xf]
  %v29 = vld [vmem:[%s1 + $0x24] sm:$0xf]
  %v30 = vld [vmem:[%s1 + $0x28] sm:$0xf]
  %v31 = vld [vmem:[%s1 + $0x2c] sm:$0xf]
  %v32 = vld [vmem:[%s1 + $0x30] sm:$0xf]
  %v33 = vld [vmem:[%s1 + $0x34] sm:$0xf]
  %v34 = vld [vmem:[%s1 + $0x38] sm:$0xf]
  %v35 = vld [vmem:[%s1 + $0x3c] sm:$0xf]
  %v36 = vld [vmem:[%s1 + $0x40] sm:$0xf]
  %v37 = vld [vmem:[%s1 + $0x44] sm:$0xf]
  %v38 = vld [vmem:[%s1 + $0x48] sm:$0xf]
  %v39 = vld [vmem:[%s1 + $0x4c] sm:$0xf]
  %v40 = vld [vmem:[%s1 + $0x50] sm:$0xf]
  %v41 = vld [vmem:[%s1 + $0x54] sm:$0xf]
  %v42 = vld [vmem:[%s1 + $0x58] sm:$0xf]
  %v43 = vld [vmem:[%s1 + $0x5c] sm:$0xf]
  %v44 = vld [vmem:[%s1 + $0x60] sm:$0xf]
  %v45 = vld [vmem:[%s1 + $0x64] sm:$0xf]
  %v46 = vld [vmem:[%s1 + $0x68] sm:$0xf]
  %v47 = vld [vmem:[%s1 + $0x6c] sm:$0xf]
  %v48 = vld [vmem:[%s1 + $0x70] sm:$0xf]
  %v49 = vld [vmem:[%s1 + $0x74] sm:$0xf]
  %v50 = vld [vmem:[%s1 + $0x78] sm:$0xf]
  %v51 = vld [vmem:[%s1 + $0x7c] sm:$0xf]
  %v52 = vld [vmem:[%s1 + $0x80] sm:$0xf]
  %v53 = vld [vmem:[%s1 + $0x84] sm:$0xf]
  %v54 = vld [vmem:[%s1 + $0x88] sm:$0xf]
  %v55 = vld [vmem:[%s1 + $0x8c] sm:$0xf]
  %v56 = vld [vmem:[%s1 + $0x90] sm:$0xf]
  %v57 = vld [vmem:[%s1 + $0x94] sm:$0xf]
  %v58 = vld [vmem:[%s1 + $0x98] sm:$0xf]
  %v59 = vld [vmem:[%s1 + $0x9c] sm:$0xf]
  %v60 = vld [vmem:[%s1 + $0xa0] sm:$0xf]
  %v61 = vld [vmem:[%s1 + $0xa4] sm:$0xf]
  %v62 = vld [vmem:[%s1 + $0xa8] sm:$0xf]
  %v63 = vld [vmem:[%s1 + $0xac] sm:$0xf]
  %v64 = vld [vmem:[%s1 + $0xb0] sm:$0xf]
  %v65 = vld [vmem:[%s1 + $0xb4] sm:$0xf]
  %v66 = vld [vmem:[%s1 + $0xb8] sm:$0xf]
  %v67 = vld [vmem:[%s1 + $0xbc] sm:$0xf]
  %v68 = vld [vmem:[%s1 + $0xc0] sm:$0xf]
  %v69 = vld [vmem:[%s1 + $0xc4] sm:$0xf]
  %v70 = vld [vmem:[%s1 + $0xc8] sm:$0xf]
  %v71 = vld [vmem:[%s1 + $0xcc] sm:$0xf]
  %v72 = vld [vmem:[%s1 + $0xd0] sm:$0xf]
  %v73 = vld [vmem:[%s1 + $0xd4] sm:$0xf]
  %v74 = vld [vmem:[%s1 + $0xd8] sm:$0xf]
  %v75 = vld [vmem:[%s1 + $0xdc] sm:$0xf]
  %v76 = vld [vmem:[%s1 + $0xe0] sm:$0xf]
  %v77 = vld [vmem:[%s1 + $0xe4] sm:$0xf]
  %v78 = vld [vmem:[%s1 + $0xe8] sm:$0xf]
  %v79 = vld [vmem:[%s1 + $0xec] sm:$0xf]
  %v80 = vld [vmem:[%s1 + $0xf0] sm:$0xf]
  %v81 = vld [vmem:[%s1 + $0xf4] sm:$0xf]
  %v82 = vld [vmem:[%s1 + $0xf8] sm:$0xf]
  %v83 = vld [vmem:[%s1 + $0xfc] sm:$0xf]
  %v92 = vunpack.c.l.b16 %v12
  %v93 = vunpack.c.h.b16 %v12
  %v94 = vunpack.c.l.b16 %v13
  %v95 = vunpack.c.h.b16 %v13
  %v96 = vunpack.c.l.b16 %v14
  %v97 = vunpack.c.h.b16 %v14
  %v98 = vunpack.c.l.b16 %v15
  %v99 = vunpack.c.h.b16 %v15
  %v100 = vunpack.c.l.b16 %v16
  %v101 = vunpack.c.h.b16 %v16
  %v102 = vunpack.c.l.b16 %v17
  %v103 = vunpack.c.h.b16 %v17
  %v104 = vunpack.c.l.b16 %v18
  %v105 = vunpack.c.h.b16 %v18
  %v106 = vunpack.c.l.b16 %v19
  %v107 = vunpack.c.h.b16 %v19
  %v108 = vpack.c.b16 %v96, %v92
  %v109 = vpack.c.b16 %v97, %v93
  %v110 = vpack.c.b16 %v98, %v94
  %v111 = vpack.c.b16 %v99, %v95
  %v112 = vpack.c.b16 %v104, %v100
  %v113 = vpack.c.b16 %v105, %v101
  %v114 = vpack.c.b16 %v106, %v102
  %v115 = vpack.c.b16 %v107, %v103
  %v188 = vunpack.c.l.b16 %v20
  %v189 = vunpack.c.l.b16 %v21
  %v190 = vunpack.c.l.b16 %v22
  %v191 = vunpack.c.l.b16 %v23
  %v192 = vunpack.c.l.b16 %v24
  %v193 = vunpack.c.l.b16 %v25
  %v194 = vunpack.c.l.b16 %v26
  %v195 = vunpack.c.l.b16 %v27
  %v196 = vunpack.c.l.b16 %v28
  %v197 = vunpack.c.l.b16 %v29
  %v198 = vunpack.c.l.b16 %v30
  %v199 = vunpack.c.l.b16 %v31
  %v200 = vunpack.c.l.b16 %v32
  %v201 = vunpack.c.l.b16 %v33
  %v202 = vunpack.c.l.b16 %v34
  %v203 = vunpack.c.l.b16 %v35
  %v204 = vunpack.c.l.b16 %v36
  %v205 = vunpack.c.l.b16 %v37
  %v206 = vunpack.c.l.b16 %v38
  %v207 = vunpack.c.l.b16 %v39
  %v208 = vunpack.c.l.b16 %v40
  %v209 = vunpack.c.l.b16 %v41
  %v210 = vunpack.c.l.b16 %v42
  %v211 = vunpack.c.l.b16 %v43
  %v212 = vunpack.c.l.b16 %v44
  %v213 = vunpack.c.l.b16 %v45
  %v214 = vunpack.c.l.b16 %v46
  %v215 = vunpack.c.l.b16 %v47
  %v216 = vunpack.c.l.b16 %v48
  %v217 = vunpack.c.l.b16 %v49
  %v218 = vunpack.c.l.b16 %v50
  %v219 = vunpack.c.l.b16 %v51
  %v220 = vunpack.c.l.b16 %v52
  %v221 = vunpack.c.l.b16 %v53
  %v222 = vunpack.c.l.b16 %v54
  %v223 = vunpack.c.l.b16 %v55
  %v224 = vunpack.c.l.b16 %v56
  %v225 = vunpack.c.l.b16 %v57
  %v226 = vunpack.c.l.b16 %v58
  %v227 = vunpack.c.l.b16 %v59
  %v228 = vunpack.c.l.b16 %v60
  %v229 = vunpack.c.l.b16 %v61
  %v230 = vunpack.c.l.b16 %v62
  %v231 = vunpack.c.l.b16 %v63
  %v232 = vunpack.c.l.b16 %v64
  %v233 = vunpack.c.l.b16 %v65
  %v234 = vunpack.c.l.b16 %v66
  %v235 = vunpack.c.l.b16 %v67
  %v236 = vunpack.c.l.b16 %v68
  %v237 = vunpack.c.l.b16 %v69
  %v238 = vunpack.c.l.b16 %v70
  %v239 = vunpack.c.l.b16 %v71
  %v240 = vunpack.c.l.b16 %v72
  %v241 = vunpack.c.l.b16 %v73
  %v242 = vunpack.c.l.b16 %v74
  %v243 = vunpack.c.l.b16 %v75
  %v244 = vunpack.c.l.b16 %v76
  %v245 = vunpack.c.l.b16 %v77
  %v246 = vunpack.c.l.b16 %v78
  %v247 = vunpack.c.l.b16 %v79
  %v248 = vunpack.c.l.b16 %v80
  %v249 = vunpack.c.l.b16 %v81
  %v250 = vunpack.c.l.b16 %v82
  %v251 = vunpack.c.l.b16 %v83
  %v252 = vpack.c.b16 %v189, %v188
  %v253 = vpack.c.b16 %v191, %v190
  %v254 = vpack.c.b16 %v193, %v192
  %v255 = vpack.c.b16 %v195, %v194
  %v256 = vpack.c.b16 %v197, %v196
  %v257 = vpack.c.b16 %v199, %v198
  %v258 = vpack.c.b16 %v201, %v200
  %v259 = vpack.c.b16 %v203, %v202
  %v260 = vpack.c.b16 %v205, %v204
  %v261 = vpack.c.b16 %v207, %v206
  %v262 = vpack.c.b16 %v209, %v208
  %v263 = vpack.c.b16 %v211, %v210
  %v264 = vpack.c.b16 %v213, %v212
  %v265 = vpack.c.b16 %v215, %v214
  %v266 = vpack.c.b16 %v217, %v216
  %v267 = vpack.c.b16 %v219, %v218
  %v268 = vpack.c.b16 %v221, %v220
  %v269 = vpack.c.b16 %v223, %v222
  %v270 = vpack.c.b16 %v225, %v224
  %v271 = vpack.c.b16 %v227, %v226
  %v272 = vpack.c.b16 %v229, %v228
  %v273 = vpack.c.b16 %v231, %v230
  %v274 = vpack.c.b16 %v233, %v232
  %v275 = vpack.c.b16 %v235, %v234
  %v276 = vpack.c.b16 %v237, %v236
  %v277 = vpack.c.b16 %v239, %v238
  %v278 = vpack.c.b16 %v241, %v240
  %v279 = vpack.c.b16 %v243, %v242
  %v280 = vpack.c.b16 %v245, %v244
  %v281 = vpack.c.b16 %v247, %v246
  %v282 = vpack.c.b16 %v249, %v248
  %v283 = vpack.c.b16 %v251, %v250
  %316 = vmatprep.subr.bf16.mxu0 0
  %317 = vmatpush1.bf16.msra.mxu0 %v259
  %318 = vmatprep.subr.bf16.mxu0 0
  %319 = vmatpush1.bf16.msra.mxu0 %v258
  %320 = vmatprep.subr.bf16.mxu0 0
  %321 = vmatpush1.bf16.msra.mxu0 %v257
  %322 = vmatprep.subr.bf16.mxu0 0
  %323 = vmatpush1.bf16.msra.mxu0 %v256
  %324 = vmatprep.subr.bf16.mxu0 0
  %325 = vmatpush1.bf16.msra.mxu0 %v255
  %326 = vmatprep.subr.bf16.mxu0 0
  %327 = vmatpush1.bf16.msra.mxu0 %v254
  %328 = vmatprep.subr.bf16.mxu0 0
  %329 = vmatpush1.bf16.msra.mxu0 %v253
  %330 = vmatprep.subr.bf16.mxu0 0
  %331 = vmatpush1.bf16.msra.mxu0 %v252
  %332 = vmatprep.subr.bf16.mxu0 0
  %333 = vmatpush2.bf16.msra.mxu0 %v267
  %334 = vmatprep.subr.bf16.mxu0 0
  %335 = vmatpush2.bf16.msra.mxu0 %v266
  %336 = vmatprep.subr.bf16.mxu0 0
  %337 = vmatpush2.bf16.msra.mxu0 %v265
  %338 = vmatprep.subr.bf16.mxu0 0
  %339 = vmatpush2.bf16.msra.mxu0 %v264
  %340 = vmatprep.subr.bf16.mxu0 0
  %341 = vmatpush2.bf16.msra.mxu0 %v263
  %342 = vmatprep.subr.bf16.mxu0 0
  %343 = vmatpush2.bf16.msra.mxu0 %v262
  %344 = vmatprep.subr.bf16.mxu0 0
  %345 = vmatpush2.bf16.msra.mxu0 %v261
  %346 = vmatprep.subr.bf16.mxu0 0
  %347 = vmatpush2.bf16.msra.mxu0 %v260
  %348 = vmatprep.mubr.bf16.mxu0 %v109
  %349 = vmatmul.mubr.bf16.gmra.mxu0 %v108
  %v350 = vpop.f32.mrf.mxu0
  %v351 = vadd.f32 0.0, %v350
  %v352 = vpop.f32.mrf.mxu0
  %v353 = vpop.f32.mrf.mxu0
  %v354 = vadd.f32 0.0, %v353
  %v355 = vpop.f32.mrf.mxu0
  %356 = vmatprep.mubr.bf16.mxu0 %v113
  %357 = vmatmul.mubr.bf16.gmra.mxu0 %v112
  %v358 = vpop.f32.mrf.mxu0
  %v359 = vadd.f32 0.0, %v358
  %v360 = vpop.f32.mrf.mxu0
  %v361 = vpop.f32.mrf.mxu0
  %v362 = vadd.f32 0.0, %v361
  %v363 = vpop.f32.mrf.mxu0
  %364 = vdwg.mxu0
  %365 = vmatprep.subr.bf16.mxu0 0
  %366 = vmatpush1.bf16.msra.mxu0 %v275
  %367 = vmatprep.subr.bf16.mxu0 0
  %368 = vmatpush1.bf16.msra.mxu0 %v274
  %369 = vmatprep.subr.bf16.mxu0 0
  %370 = vmatpush1.bf16.msra.mxu0 %v273
  %371 = vmatprep.subr.bf16.mxu0 0
  %372 = vmatpush1.bf16.msra.mxu0 %v272
  %373 = vmatprep.subr.bf16.mxu0 0
  %374 = vmatpush1.bf16.msra.mxu0 %v271
  %375 = vmatprep.subr.bf16.mxu0 0
  %376 = vmatpush1.bf16.msra.mxu0 %v270
  %377 = vmatprep.subr.bf16.mxu0 0
  %378 = vmatpush1.bf16.msra.mxu0 %v269
  %379 = vmatprep.subr.bf16.mxu0 0
  %380 = vmatpush1.bf16.msra.mxu0 %v268
  %381 = vmatprep.subr.bf16.mxu0 0
  %382 = vmatpush2.bf16.msra.mxu0 %v283
  %383 = vmatprep.subr.bf16.mxu0 0
  %384 = vmatpush2.bf16.msra.mxu0 %v282
  %385 = vmatprep.subr.bf16.mxu0 0
  %386 = vmatpush2.bf16.msra.mxu0 %v281
  %387 = vmatprep.subr.bf16.mxu0 0
  %388 = vmatpush2.bf16.msra.mxu0 %v280
  %389 = vmatprep.subr.bf16.mxu0 0
  %390 = vmatpush2.bf16.msra.mxu0 %v279
  %391 = vmatprep.subr.bf16.mxu0 0
  %392 = vmatpush2.bf16.msra.mxu0 %v278
  %393 = vmatprep.subr.bf16.mxu0 0
  %394 = vmatpush2.bf16.msra.mxu0 %v277
  %395 = vmatprep.subr.bf16.mxu0 0
  %396 = vmatpush2.bf16.msra.mxu0 %v276
  %397 = vmatprep.mubr.bf16.mxu0 %v111
  %398 = vmatmul.mubr.bf16.gmra.mxu0 %v110
  %v399 = vpop.f32.mrf.mxu0
  %v400 = vadd.f32 %v351, %v399
  %v401 = vpop.f32.mrf.mxu0
  %v402 = vpop.f32.mrf.mxu0
  %v403 = vadd.f32 %v354, %v402
  %v404 = vpop.f32.mrf.mxu0
  %405 = vmatprep.mubr.bf16.mxu0 %v115
  %406 = vmatmul.mubr.bf16.gmra.mxu0 %v114
  %v407 = vpop.f32.mrf.mxu0
  %v408 = vadd.f32 %v359, %v407
  %v409 = vpop.f32.mrf.mxu0
  %v410 = vpop.f32.mrf.mxu0
  %v411 = vadd.f32 %v362, %v410
  %v412 = vpop.f32.mrf.mxu0
  %413 = vdwg.mxu0
  %s414 = smul.u32 0, 32
  %s415 = scalar_lea.vmem %s2, %s414
  %416 = vst [vmem:[%s415] sm:$0xff] %v400
  %417 = vst [vmem:[%s415 + $0x8] sm:$0xff] %v403
  %418 = vst [vmem:[%s415 + $0x10] sm:$0xff] %v408
  %419 = vst [vmem:[%s415 + $0x18] sm:$0xff] %v411
  %p420 = scmp.eq.s32.totalorder 0, 0
  // Predicated region
  $region10: #{_lambda_.8} parent=0 // pred_check
    %p421 = pneg %p420
  $region11: #{_lambda_.8} parent=0 // pred_check_branch
    %423 = sbr.rel (%p421) target = $region13
  $region12: #{_lambda_.8} parent=0 // pred_region
    %v424 = vld [vmem:[%s2] sm:$0xff]
    %v425 = vld [vmem:[%s2 + $0x8] sm:$0xff]
    %v426 = vld [vmem:[%s2 + $0x10] sm:$0xff]
    %v427 = vld [vmem:[%s2 + $0x18] sm:$0xff]
    %v428 = vadd.f32 %v424, %v425
    %v429 = vadd.f32 %v428, %v426
    %v430 = vadd.f32 %v429, %v427
    %v431 = vrot.slane %v430, 4
    %v432 = vadd.f32 %v430, %v431
    %v433 = vrot.slane %v432, 2
    %v434 = vadd.f32 %v432, %v433
    %v435 = vrot.slane %v434, 1
    %v436 = vadd.f32 %v434, %v435
    %v437 = vrcp.pop 32.0
    %v438 = vmul.f32 %v436, %v437
    %v439 = vsub.f32 %v424, %v438
    %v440 = vsub.f32 %v425, %v438
    %v441 = vsub.f32 %v426, %v438
    %v442 = vsub.f32 %v427, %v438
    %v443 = vmul.f32 %v439, %v439
    %v444 = vmul.f32 %v440, %v440
    %v445 = vmul.f32 %v441, %v441
    %v446 = vmul.f32 %v442, %v442
    %v447 = vadd.f32 %v443, %v444
    %v448 = vadd.f32 %v447, %v445
    %v449 = vadd.f32 %v448, %v446
    %v450 = vrot.slane %v449, 4
    %v451 = vadd.f32 %v449, %v450
    %v452 = vrot.slane %v451, 2
    %v453 = vadd.f32 %v451, %v452
    %v454 = vrot.slane %v453, 1
    %v455 = vadd.f32 %v453, %v454
    %v456 = vmul.f32 %v455, %v437
    %v457 = vadd.f32 %v456, 1e-05
    %v458 = vrsqrt.pop %v457
    %v459 = vmul.f32 %v439, %v458
    %v460 = vmul.f32 %v440, %v458
    %v461 = vmul.f32 %v441, %v458
    %v462 = vmul.f32 %v442, %v458
    %vm463 = vcmp.gt.f32.partialorder %v459, 0.0
    %vm464 = vcmp.gt.f32.partialorder %v460, 0.0
    %vm465 = vcmp.gt.f32.partialorder %v461, 0.0
    %vm466 = vcmp.gt.f32.partialorder %v462, 0.0
    %v467 = vmul.f32 %v459, 1.442695
    %v468 = vpow.pop %v467
    %v469 = vmul.f32 %v460, 1.442695
    %v470 = vpow.pop %v469
    %v471 = vmul.f32 %v461, 1.442695
    %v472 = vpow.pop %v471
    %v473 = vmul.f32 %v462, 1.442695
    %v474 = vpow.pop %v473
    %v475 = vsub.f32 %v468, 1.0
    %v476 = vsub.f32 %v470, 1.0
    %v477 = vsub.f32 %v472, 1.0
    %v478 = vsub.f32 %v474, 1.0
    %v479 = vmul.f32 %v475, 0.2
    %v480 = vmul.f32 %v476, 0.2
    %v481 = vmul.f32 %v477, 0.2
    %v482 = vmul.f32 %v478, 0.2
    %v483 = vsel %vm463, %v459, %v479
    %v484 = vsel %vm464, %v460, %v480
    %v485 = vsel %vm465, %v461, %v481
    %v486 = vsel %vm466, %v462, %v482
    %487 = vst [vmem:[%s2] sm:$0xff] %v483
    %488 = vst [vmem:[%s2 + $0x8] sm:$0xff] %v484
    %489 = vst [vmem:[%s2 + $0x10] sm:$0xff] %v485
    %490 = vst [vmem:[%s2 + $0x18] sm:$0xff] %v486
  $region13: #{_lambda_.8} parent=0 // pred_fallthru
    _
  // Predicated region
  $region14: #{_lambda_.8} parent=0 // pred_check
    _
  $region15: #{_lambda_.8} parent=0 // pred_check_branch
    %492 = sbr.rel (0) target = $region17
  $region16: #{_lambda_.8} parent=0 // pred_region
    _
  $region17: #{_lambda_.8} parent=0 // pred_fallthru
    _
  // Predicated region
  $region18: #{_lambda_.8} parent=0 // pred_check
    _
  $region19: #{_lambda_.8} parent=0 // pred_check_branch
    %494 = sbr.rel (0) target = $region21
  $region20: #{_lambda_.8} parent=0 // pred_region
    _
  $region21: #{_lambda_.8} parent=0 // pred_fallthru
    _

// kernel: _lambda_.9
$region0: #{_lambda_.9}
  #allocation0 [shape = 'u32[]', space=smem, size = 0x4, offset = 0x4, fixed_abs, tag = 'smem constant byte address 0x4 - core index']
  #allocation1 [shape = 'u32[144,128]{1,0:T(1,128)}', space=vmem, size = 0x12000, scoped, tag = 'internal scratch']
  %s0 = inlined_call_operand.vmem [shape: bf16[2,1024], index: 0, kind: input, shape index: {}]
  %s1 = inlined_call_operand.vmem [shape: bf16[1024,128], index: 1, kind: input, shape index: {}]
  %s2 = inlined_call_operand.vmem [shape: f32[2,128], index: 2, kind: output, shape index: {}]
  %s3 = sld [smem:[#allocation0]]
  $region18: #{_lambda_.9} parent=0
    _
  %s5 = ssub.s32 1, %s3
  %s6 = scalar_select 0, %s5, %s3
  // Predicated region
  $region2: #{_lambda_.9} parent=0 // pred_check
    _
  $region3: #{_lambda_.9} parent=0 // pred_check_branch
    %8 = sbr.rel (0) target = $region5
  $region4: #{_lambda_.9} parent=0 // pred_region
    _
  $region5: #{_lambda_.9} parent=0 // pred_fallthru
    _
  // Predicated region
  $region6: #{_lambda_.9} parent=0 // pred_check
    _
  $region7: #{_lambda_.9} parent=0 // pred_check_branch
    %10 = sbr.rel (0) target = $region9
  $region8: #{_lambda_.9} parent=0 // pred_region
    _
  $region9: #{_lambda_.9} parent=0 // pred_fallthru
    _
  %v12 = vld [vmem:[%s0] sm:$0xff]
  %v13 = vld [vmem:[%s1] sm:$0xf]
  %v14 = vld [vmem:[%s1 + $0x4] sm:$0xf]
  %v15 = vld [vmem:[%s1 + $0x8] sm:$0xf]
  %v16 = vld [vmem:[%s1 + $0xc] sm:$0xf]
  %v17 = vld [vmem:[%s1 + $0x10] sm:$0xf]
  %v18 = vld [vmem:[%s1 + $0x14] sm:$0xf]
  %v19 = vld [vmem:[%s1 + $0x18] sm:$0xf]
  %v20 = vld [vmem:[%s1 + $0x1c] sm:$0xf]
  %v21 = vld [vmem:[%s1 + $0x20] sm:$0xf]
  %v22 = vld [vmem:[%s1 + $0x24] sm:$0xf]
  %v23 = vld [vmem:[%s1 + $0x28] sm:$0xf]
  %v24 = vld [vmem:[%s1 + $0x2c] sm:$0xf]
  %v25 = vld [vmem:[%s1 + $0x30] sm:$0xf]
  %v26 = vld [vmem:[%s1 + $0x34] sm:$0xf]
  %v27 = vld [vmem:[%s1 + $0x38] sm:$0xf]
  %v28 = vld [vmem:[%s1 + $0x3c] sm:$0xf]
  %v29 = vld [vmem:[%s1 + $0x40] sm:$0xf]
  %v30 = vld [vmem:[%s1 + $0x44] sm:$0xf]
  %v31 = vld [vmem:[%s1 + $0x48] sm:$0xf]
  %v32 = vld [vmem:[%s1 + $0x4c] sm:$0xf]
  %v33 = vld [vmem:[%s1 + $0x50] sm:$0xf]
  %v34 = vld [vmem:[%s1 + $0x54] sm:$0xf]
  %v35 = vld [vmem:[%s1 + $0x58] sm:$0xf]
  %v36 = vld [vmem:[%s1 + $0x5c] sm:$0xf]
  %v37 = vld [vmem:[%s1 + $0x60] sm:$0xf]
  %v38 = vld [vmem:[%s1 + $0x64] sm:$0xf]
  %v39 = vld [vmem:[%s1 + $0x68] sm:$0xf]
  %v40 = vld [vmem:[%s1 + $0x6c] sm:$0xf]
  %v41 = vld [vmem:[%s1 + $0x70] sm:$0xf]
  %v42 = vld [vmem:[%s1 + $0x74] sm:$0xf]
  %v43 = vld [vmem:[%s1 + $0x78] sm:$0xf]
  %v44 = vld [vmem:[%s1 + $0x7c] sm:$0xf]
  %v45 = vld [vmem:[%s1 + $0x80] sm:$0xf]
  %v46 = vld [vmem:[%s1 + $0x84] sm:$0xf]
  %v47 = vld [vmem:[%s1 + $0x88] sm:$0xf]
  %v48 = vld [vmem:[%s1 + $0x8c] sm:$0xf]
  %v49 = vld [vmem:[%s1 + $0x90] sm:$0xf]
  %v50 = vld [vmem:[%s1 + $0x94] sm:$0xf]
  %v51 = vld [vmem:[%s1 + $0x98] sm:$0xf]
  %v52 = vld [vmem:[%s1 + $0x9c] sm:$0xf]
  %v53 = vld [vmem:[%s1 + $0xa0] sm:$0xf]
  %v54 = vld [vmem:[%s1 + $0xa4] sm:$0xf]
  %v55 = vld [vmem:[%s1 + $0xa8] sm:$0xf]
  %v56 = vld [vmem:[%s1 + $0xac] sm:$0xf]
  %v57 = vld [vmem:[%s1 + $0xb0] sm:$0xf]
  %v58 = vld [vmem:[%s1 + $0xb4] sm:$0xf]
  %v59 = vld [vmem:[%s1 + $0xb8] sm:$0xf]
  %v60 = vld [vmem:[%s1 + $0xbc] sm:$0xf]
  %v61 = vld [vmem:[%s1 + $0xc0] sm:$0xf]
  %v62 = vld [vmem:[%s1 + $0xc4] sm:$0xf]
  %v63 = vld [vmem:[%s1 + $0xc8] sm:$0xf]
  %v64 = vld [vmem:[%s1 + $0xcc] sm:$0xf]
  %v65 = vld [vmem:[%s1 + $0xd0] sm:$0xf]
  %v66 = vld [vmem:[%s1 + $0xd4] sm:$0xf]
  %v67 = vld [vmem:[%s1 + $0xd8] sm:$0xf]
  %v68 = vld [vmem:[%s1 + $0xdc] sm:$0xf]
  %v69 = vld [vmem:[%s1 + $0xe0] sm:$0xf]
  %v70 = vld [vmem:[%s1 + $0xe4] sm:$0xf]
  %v71 = vld [vmem:[%s1 + $0xe8] sm:$0xf]
  %v72 = vld [vmem:[%s1 + $0xec] sm:$0xf]
  %v73 = vld [vmem:[%s1 + $0xf0] sm:$0xf]
  %v74 = vld [vmem:[%s1 + $0xf4] sm:$0xf]
  %v75 = vld [vmem:[%s1 + $0xf8] sm:$0xf]
  %v76 = vld [vmem:[%s1 + $0xfc] sm:$0xf]
  %v77 = vld [vmem:[%s1 + $0x100] sm:$0xf]
  %v78 = vld [vmem:[%s1 + $0x104] sm:$0xf]
  %v79 = vld [vmem:[%s1 + $0x108] sm:$0xf]
  %v80 = vld [vmem:[%s1 + $0x10c] sm:$0xf]
  %v81 = vld [vmem:[%s1 + $0x110] sm:$0xf]
  %v82 = vld [vmem:[%s1 + $0x114] sm:$0xf]
  %v83 = vld [vmem:[%s1 + $0x118] sm:$0xf]
  %v84 = vld [vmem:[%s1 + $0x11c] sm:$0xf]
  %v85 = vld [vmem:[%s1 + $0x120] sm:$0xf]
  %v86 = vld [vmem:[%s1 + $0x124] sm:$0xf]
  %v87 = vld [vmem:[%s1 + $0x128] sm:$0xf]
  %v88 = vld [vmem:[%s1 + $0x12c] sm:$0xf]
  %v89 = vld [vmem:[%s1 + $0x130] sm:$0xf]
  %v90 = vld [vmem:[%s1 + $0x134] sm:$0xf]
  %v91 = vld [vmem:[%s1 + $0x138] sm:$0xf]
  %v92 = vld [vmem:[%s1 + $0x13c] sm:$0xf]
  %v93 = vld [vmem:[%s1 + $0x140] sm:$0xf]
  %v94 = vld [vmem:[%s1 + $0x144] sm:$0xf]
  %v95 = vld [vmem:[%s1 + $0x148] sm:$0xf]
  %v96 = vld [vmem:[%s1 + $0x14c] sm:$0xf]
  %v97 = vld [vmem:[%s1 + $0x150] sm:$0xf]
  %v98 = vld [vmem:[%s1 + $0x154] sm:$0xf]
  %v99 = vld [vmem:[%s1 + $0x158] sm:$0xf]
  %v100 = vld [vmem:[%s1 + $0x15c] sm:$0xf]
  %v101 = vld [vmem:[%s1 + $0x160] sm:$0xf]
  %v102 = vld [vmem:[%s1 + $0x164] sm:$0xf]
  %v103 = vld [vmem:[%s1 + $0x168] sm:$0xf]
  %v104 = vld [vmem:[%s1 + $0x16c] sm:$0xf]
  %v105 = vld [vmem:[%s1 + $0x170] sm:$0xf]
  %v106 = vld [vmem:[%s1 + $0x174] sm:$0xf]
  %v107 = vld [vmem:[%s1 + $0x178] sm:$0xf]
  %v108 = vld [vmem:[%s1 + $0x17c] sm:$0xf]
  %v109 = vld [vmem:[%s1 + $0x180] sm:$0xf]
  %v110 = vld [vmem:[%s1 + $0x184] sm:$0xf]
  %v111 = vld [vmem:[%s1 + $0x188] sm:$0xf]
  %v112 = vld [vmem:[%s1 + $0x18c] sm:$0xf]
  %v113 = vld [vmem:[%s1 + $0x190] sm:$0xf]
  %v114 = vld [vmem:[%s1 + $0x194] sm:$0xf]
  %v115 = vld [vmem:[%s1 + $0x198] sm:$0xf]
  %v116 = vld [vmem:[%s1 + $0x19c] sm:$0xf]
  %v117 = vld [vmem:[%s1 + $0x1a0] sm:$0xf]
  %v118 = vld [vmem:[%s1 + $0x1a4] sm:$0xf]
  %v119 = vld [vmem:[%s1 + $0x1a8] sm:$0xf]
  %v120 = vld [vmem:[%s1 + $0x1ac] sm:$0xf]
  %v121 = vld [vmem:[%s1 + $0x1b0] sm:$0xf]
  %v122 = vld [vmem:[%s1 + $0x1b4] sm:$0xf]
  %v123 = vld [vmem:[%s1 + $0x1b8] sm:$0xf]
  %v124 = vld [vmem:[%s1 + $0x1bc] sm:$0xf]
  %v125 = vld [vmem:[%s1 + $0x1c0] sm:$0xf]
  %v126 = vld [vmem:[%s1 + $0x1c4] sm:$0xf]
  %v127 = vld [vmem:[%s1 + $0x1c8] sm:$0xf]
  %v128 = vld [vmem:[%s1 + $0x1cc] sm:$0xf]
  %v129 = vld [vmem:[%s1 + $0x1d0] sm:$0xf]
  %v130 = vld [vmem:[%s1 + $0x1d4] sm:$0xf]
  %v131 = vld [vmem:[%s1 + $0x1d8] sm:$0xf]
  %v132 = vld [vmem:[%s1 + $0x1dc] sm:$0xf]
  %v133 = vld [vmem:[%s1 + $0x1e0] sm:$0xf]
  %v134 = vld [vmem:[%s1 + $0x1e4] sm:$0xf]
  %v135 = vld [vmem:[%s1 + $0x1e8] sm:$0xf]
  %v136 = vld [vmem:[%s1 + $0x1ec] sm:$0xf]
  %v137 = vld [vmem:[%s1 + $0x1f0] sm:$0xf]
  %v138 = vld [vmem:[%s1 + $0x1f4] sm:$0xf]
  %v139 = vld [vmem:[%s1 + $0x1f8] sm:$0xf]
  %v140 = vld [vmem:[%s1 + $0x1fc] sm:$0xf]
  %v142 = vcombine.high %v12, %v12
  %v144 = vunpack.c.l.s4 1966171168
  %v145 = vunpack.c.0.s8 %v144
  %v146 = vlaneseq
  %v147 = vshrl.u32 %v146, 7
  %v148 = vsub.s32 %v145, %v147
  %v149 = vrot.slane %v12, %v148
  %v151 = vunpack.c.l.s4 1966171168
  %v152 = vunpack.c.0.s8 %v151
  %v153 = vlaneseq
  %v154 = vshrl.u32 %v153, 7
  %v155 = vsub.s32 %v152, %v154
  %v156 = vrot.slane %v142, %v155
  %v157 = vcombine.high %v149, %v149
  %v158 = vcombine.high %v156, %v156
  %v160 = vunpack.c.l.s4 1966171168
  %v161 = vunpack.c.0.s8 %v160
  %v162 = vlaneseq
  %v163 = vshrl.u32 %v162, 7
  %v164 = vsub.s32 %v161, %v163
  %v165 = vrot.slane %v149, %v164
  %v167 = vunpack.c.l.s4 1966171168
  %v168 = vunpack.c.0.s8 %v167
  %v169 = vlaneseq
  %v170 = vshrl.u32 %v169, 7
  %v171 = vsub.s32 %v168, %v170
  %v172 = vrot.slane %v156, %v171
  %v174 = vunpack.c.l.s4 1966171168
  %v175 = vunpack.c.0.s8 %v174
  %v176 = vlaneseq
  %v177 = vshrl.u32 %v176, 7
  %v178 = vsub.s32 %v175, %v177
  %v179 = vrot.slane %v157, %v178
  %v181 = vunpack.c.l.s4 1966171168
  %v182 = vunpack.c.0.s8 %v181
  %v183 = vlaneseq
  %v184 = vshrl.u32 %v183, 7
  %v185 = vsub.s32 %v182, %v184
  %v186 = vrot.slane %v158, %v185
  %v187 = vcombine.high %v165, %v165
  %v188 = vcombine.high %v172, %v172
  %v189 = vcombine.high %v179, %v179
  %v190 = vcombine.high %v186, %v186
  %v327 = vunpack.c.l.b16 %v13
  %v328 = vunpack.c.l.b16 %v14
  %v329 = vunpack.c.l.b16 %v15
  %v330 = vunpack.c.l.b16 %v16
  %v331 = vunpack.c.l.b16 %v17
  %v332 = vunpack.c.l.b16 %v18
  %v333 = vunpack.c.l.b16 %v19
  %v334 = vunpack.c.l.b16 %v20
  %v335 = vunpack.c.l.b16 %v21
  %v336 = vunpack.c.l.b16 %v22
  %v337 = vunpack.c.l.b16 %v23
  %v338 = vunpack.c.l.b16 %v24
  %v339 = vunpack.c.l.b16 %v25
  %v340 = vunpack.c.l.b16 %v26
  %v341 = vunpack.c.l.b16 %v27
  %v342 = vunpack.c.l.b16 %v28
  %v343 = vunpack.c.l.b16 %v29
  %v344 = vunpack.c.l.b16 %v30
  %v345 = vunpack.c.l.b16 %v31
  %v346 = vunpack.c.l.b16 %v32
  %v347 = vunpack.c.l.b16 %v33
  %v348 = vunpack.c.l.b16 %v34
  %v349 = vunpack.c.l.b16 %v35
  %v350 = vunpack.c.l.b16 %v36
  %v351 = vunpack.c.l.b16 %v37
  %v352 = vunpack.c.l.b16 %v38
  %v353 = vunpack.c.l.b16 %v39
  %v354 = vunpack.c.l.b16 %v40
  %v355 = vunpack.c.l.b16 %v41
  %v356 = vunpack.c.l.b16 %v42
  %v357 = vunpack.c.l.b16 %v43
  %v358 = vunpack.c.l.b16 %v44
  %v359 = vunpack.c.l.b16 %v45
  %v360 = vunpack.c.l.b16 %v46
  %v361 = vunpack.c.l.b16 %v47
  %v362 = vunpack.c.l.b16 %v48
  %v363 = vunpack.c.l.b16 %v49
  %v364 = vunpack.c.l.b16 %v50
  %v365 = vunpack.c.l.b16 %v51
  %v366 = vunpack.c.l.b16 %v52
  %v367 = vunpack.c.l.b16 %v53
  %v368 = vunpack.c.l.b16 %v54
  %v369 = vunpack.c.l.b16 %v55
  %v370 = vunpack.c.l.b16 %v56
  %v371 = vunpack.c.l.b16 %v57
  %v372 = vunpack.c.l.b16 %v58
  %v373 = vunpack.c.l.b16 %v59
  %v374 = vunpack.c.l.b16 %v60
  %v375 = vunpack.c.l.b16 %v61
  %v376 = vunpack.c.l.b16 %v62
  %v377 = vunpack.c.l.b16 %v63
  %v378 = vunpack.c.l.b16 %v64
  %v379 = vunpack.c.l.b16 %v65
  %v380 = vunpack.c.l.b16 %v66
  %v381 = vunpack.c.l.b16 %v67
  %v382 = vunpack.c.l.b16 %v68
  %v383 = vunpack.c.l.b16 %v69
  %v384 = vunpack.c.l.b16 %v70
  %v385 = vunpack.c.l.b16 %v71
  %v386 = vunpack.c.l.b16 %v72
  %v387 = vunpack.c.l.b16 %v73
  %v388 = vunpack.c.l.b16 %v74
  %v389 = vunpack.c.l.b16 %v75
  %v390 = vunpack.c.l.b16 %v76
  %v391 = vunpack.c.l.b16 %v77
  %v392 = vunpack.c.l.b16 %v78
  %v393 = vunpack.c.l.b16 %v79
  %v394 = vunpack.c.l.b16 %v80
  %v395 = vunpack.c.l.b16 %v81
  %v396 = vunpack.c.l.b16 %v82
  %v397 = vunpack.c.l.b16 %v83
  %v398 = vunpack.c.l.b16 %v84
  %v399 = vunpack.c.l.b16 %v85
  %v400 = vunpack.c.l.b16 %v86
  %v401 = vunpack.c.l.b16 %v87
  %v402 = vunpack.c.l.b16 %v88
  %v403 = vunpack.c.l.b16 %v89
  %v404 = vunpack.c.l.b16 %v90
  %v405 = vunpack.c.l.b16 %v91
  %v406 = vunpack.c.l.b16 %v92
  %v407 = vunpack.c.l.b16 %v93
  %v408 = vunpack.c.l.b16 %v94
  %v409 = vunpack.c.l.b16 %v95
  %v410 = vunpack.c.l.b16 %v96
  %v411 = vunpack.c.l.b16 %v97
  %v412 = vunpack.c.l.b16 %v98
  %v413 = vunpack.c.l.b16 %v99
  %v414 = vunpack.c.l.b16 %v100
  %v415 = vunpack.c.l.b16 %v101
  %v416 = vunpack.c.l.b16 %v102
  %v417 = vunpack.c.l.b16 %v103
  %v418 = vunpack.c.l.b16 %v104
  %v419 = vunpack.c.l.b16 %v105
  %v420 = vunpack.c.l.b16 %v106
  %v421 = vunpack.c.l.b16 %v107
  %v422 = vunpack.c.l.b16 %v108
  %v423 = vunpack.c.l.b16 %v109
  %v424 = vunpack.c.l.b16 %v110
  %v425 = vunpack.c.l.b16 %v111
  %v426 = vunpack.c.l.b16 %v112
  %v427 = vunpack.c.l.b16 %v113
  %v428 = vunpack.c.l.b16 %v114
  %v429 = vunpack.c.l.b16 %v115
  %v430 = vunpack.c.l.b16 %v116
  %v431 = vunpack.c.l.b16 %v117
  %v432 = vunpack.c.l.b16 %v118
  %v433 = vunpack.c.l.b16 %v119
  %v434 = vunpack.c.l.b16 %v120
  %v435 = vunpack.c.l.b16 %v121
  %v436 = vunpack.c.l.b16 %v122
  %v437 = vunpack.c.l.b16 %v123
  %v438 = vunpack.c.l.b16 %v124
  %v439 = vunpack.c.l.b16 %v125
  %v440 = vunpack.c.l.b16 %v126
  %v441 = vunpack.c.l.b16 %v127
  %v442 = vunpack.c.l.b16 %v128
  %v443 = vunpack.c.l.b16 %v129
  %v444 = vunpack.c.l.b16 %v130
  %v445 = vunpack.c.l.b16 %v131
  %v446 = vunpack.c.l.b16 %v132
  %v447 = vunpack.c.l.b16 %v133
  %v448 = vunpack.c.l.b16 %v134
  %v449 = vunpack.c.l.b16 %v135
  %v450 = vunpack.c.l.b16 %v136
  %v451 = vunpack.c.l.b16 %v137
  %v452 = vunpack.c.l.b16 %v138
  %v453 = vunpack.c.l.b16 %v139
  %v454 = vunpack.c.l.b16 %v140
  %v455 = vpack.c.b16 %v328, %v327
  %v456 = vpack.c.b16 %v330, %v329
  %v457 = vpack.c.b16 %v332, %v331
  %v458 = vpack.c.b16 %v334, %v333
  %v459 = vpack.c.b16 %v336, %v335
  %v460 = vpack.c.b16 %v338, %v337
  %v461 = vpack.c.b16 %v340, %v339
  %v462 = vpack.c.b16 %v342, %v341
  %v463 = vpack.c.b16 %v344, %v343
  %v464 = vpack.c.b16 %v346, %v345
  %v465 = vpack.c.b16 %v348, %v347
  %v466 = vpack.c.b16 %v350, %v349
  %v467 = vpack.c.b16 %v352, %v351
  %v468 = vpack.c.b16 %v354, %v353
  %v469 = vpack.c.b16 %v356, %v355
  %v470 = vpack.c.b16 %v358, %v357
  %v471 = vpack.c.b16 %v360, %v359
  %v472 = vpack.c.b16 %v362, %v361
  %v473 = vpack.c.b16 %v364, %v363
  %v474 = vpack.c.b16 %v366, %v365
  %v475 = vpack.c.b16 %v368, %v367
  %v476 = vpack.c.b16 %v370, %v369
  %v477 = vpack.c.b16 %v372, %v371
  %v478 = vpack.c.b16 %v374, %v373
  %v479 = vpack.c.b16 %v376, %v375
  %v480 = vpack.c.b16 %v378, %v377
  %v481 = vpack.c.b16 %v380, %v379
  %v482 = vpack.c.b16 %v382, %v381
  %v483 = vpack.c.b16 %v384, %v383
  %v484 = vpack.c.b16 %v386, %v385
  %v485 = vpack.c.b16 %v388, %v387
  %v486 = vpack.c.b16 %v390, %v389
  %v487 = vpack.c.b16 %v392, %v391
  %v488 = vpack.c.b16 %v394, %v393
  %v489 = vpack.c.b16 %v396, %v395
  %v490 = vpack.c.b16 %v398, %v397
  %v491 = vpack.c.b16 %v400, %v399
  %v492 = vpack.c.b16 %v402, %v401
  %v493 = vpack.c.b16 %v404, %v403
  %v494 = vpack.c.b16 %v406, %v405
  %v495 = vpack.c.b16 %v408, %v407
  %v496 = vpack.c.b16 %v410, %v409
  %v497 = vpack.c.b16 %v412, %v411
  %v498 = vpack.c.b16 %v414, %v413
  %v499 = vpack.c.b16 %v416, %v415
  %v500 = vpack.c.b16 %v418, %v417
  %v501 = vpack.c.b16 %v420, %v419
  %v502 = vpack.c.b16 %v422, %v421
  %v503 = vpack.c.b16 %v424, %v423
  %v504 = vpack.c.b16 %v426, %v425
  %v505 = vpack.c.b16 %v428, %v427
  %v506 = vpack.c.b16 %v430, %v429
  %v507 = vpack.c.b16 %v432, %v431
  %v508 = vpack.c.b16 %v434, %v433
  %v509 = vpack.c.b16 %v436, %v435
  %v510 = vpack.c.b16 %v438, %v437
  %v511 = vpack.c.b16 %v440, %v439
  %v512 = vpack.c.b16 %v442, %v441
  %v513 = vpack.c.b16 %v444, %v443
  %v514 = vpack.c.b16 %v446, %v445
  %v515 = vpack.c.b16 %v448, %v447
  %v516 = vpack.c.b16 %v450, %v449
  %v517 = vpack.c.b16 %v452, %v451
  %v518 = vpack.c.b16 %v454, %v453
  %583 = vmatprep.subr.bf16.mxu0 0
  %584 = vmatpush1.bf16.msra.mxu0 %v462
  %585 = vmatprep.subr.bf16.mxu0 0
  %586 = vmatpush1.bf16.msra.mxu0 %v461
  %587 = vmatprep.subr.bf16.mxu0 0
  %588 = vmatpush1.bf16.msra.mxu0 %v460
  %589 = vmatprep.subr.bf16.mxu0 0
  %590 = vmatpush1.bf16.msra.mxu0 %v459
  %591 = vmatprep.subr.bf16.mxu0 0
  %592 = vmatpush1.bf16.msra.mxu0 %v458
  %593 = vmatprep.subr.bf16.mxu0 0
  %594 = vmatpush1.bf16.msra.mxu0 %v457
  %595 = vmatprep.subr.bf16.mxu0 0
  %596 = vmatpush1.bf16.msra.mxu0 %v456
  %597 = vmatprep.subr.bf16.mxu0 0
  %598 = vmatpush1.bf16.msra.mxu0 %v455
  %599 = vmatprep.subr.bf16.mxu0 0
  %600 = vmatpush2.bf16.msra.mxu0 %v470
  %601 = vmatprep.subr.bf16.mxu0 0
  %602 = vmatpush2.bf16.msra.mxu0 %v469
  %603 = vmatprep.subr.bf16.mxu0 0
  %604 = vmatpush2.bf16.msra.mxu0 %v468
  %605 = vmatprep.subr.bf16.mxu0 0
  %606 = vmatpush2.bf16.msra.mxu0 %v467
  %607 = vmatprep.subr.bf16.mxu0 0
  %608 = vmatpush2.bf16.msra.mxu0 %v466
  %609 = vmatprep.subr.bf16.mxu0 0
  %610 = vmatpush2.bf16.msra.mxu0 %v465
  %611 = vmatprep.subr.bf16.mxu0 0
  %612 = vmatpush2.bf16.msra.mxu0 %v464
  %613 = vmatprep.subr.bf16.mxu0 0
  %614 = vmatpush2.bf16.msra.mxu0 %v463
  %615 = vmatprep.mubr.bf16.mxu0 %v179
  %616 = vmatmul.mubr.bf16.gmra.mxu0 %v165
  %v617 = vpop.f32.mrf.mxu0
  %v618 = vadd.f32 0.0, %v617
  %v619 = vpop.f32.mrf.mxu0
  %v620 = vpop.f32.mrf.mxu0
  %v621 = vpop.f32.mrf.mxu0
  %622 = vdwg.mxu0
  %623 = vmatprep.subr.bf16.mxu0 0
  %624 = vmatpush1.bf16.msra.mxu0 %v478
  %625 = vmatprep.subr.bf16.mxu0 0
  %626 = vmatpush1.bf16.msra.mxu0 %v477
  %627 = vmatprep.subr.bf16.mxu0 0
  %628 = vmatpush1.bf16.msra.mxu0 %v476
  %629 = vmatprep.subr.bf16.mxu0 0
  %630 = vmatpush1.bf16.msra.mxu0 %v475
  %631 = vmatprep.subr.bf16.mxu0 0
  %632 = vmatpush1.bf16.msra.mxu0 %v474
  %633 = vmatprep.subr.bf16.mxu0 0
  %634 = vmatpush1.bf16.msra.mxu0 %v473
  %635 = vmatprep.subr.bf16.mxu0 0
  %636 = vmatpush1.bf16.msra.mxu0 %v472
  %637 = vmatprep.subr.bf16.mxu0 0
  %638 = vmatpush1.bf16.msra.mxu0 %v471
  %639 = vmatprep.subr.bf16.mxu0 0
  %640 = vmatpush2.bf16.msra.mxu0 %v486
  %641 = vmatprep.subr.bf16.mxu0 0
  %642 = vmatpush2.bf16.msra.mxu0 %v485
  %643 = vmatprep.subr.bf16.mxu0 0
  %644 = vmatpush2.bf16.msra.mxu0 %v484
  %645 = vmatprep.subr.bf16.mxu0 0
  %646 = vmatpush2.bf16.msra.mxu0 %v483
  %647 = vmatprep.subr.bf16.mxu0 0
  %648 = vmatpush2.bf16.msra.mxu0 %v482
  %649 = vmatprep.subr.bf16.mxu0 0
  %650 = vmatpush2.bf16.msra.mxu0 %v481
  %651 = vmatprep.subr.bf16.mxu0 0
  %652 = vmatpush2.bf16.msra.mxu0 %v480
  %653 = vmatprep.subr.bf16.mxu0 0
  %654 = vmatpush2.bf16.msra.mxu0 %v479
  %655 = vmatprep.mubr.bf16.mxu0 %v189
  %656 = vmatmul.mubr.bf16.gmra.mxu0 %v187
  %v657 = vpop.f32.mrf.mxu0
  %v658 = vadd.f32 %v618, %v657
  %v659 = vpop.f32.mrf.mxu0
  %v660 = vpop.f32.mrf.mxu0
  %v661 = vpop.f32.mrf.mxu0
  %662 = vdwg.mxu0
  %663 = vmatprep.subr.bf16.mxu0 0
  %664 = vmatpush1.bf16.msra.mxu0 %v494
  %665 = vmatprep.subr.bf16.mxu0 0
  %666 = vmatpush1.bf16.msra.mxu0 %v493
  %667 = vmatprep.subr.bf16.mxu0 0
  %668 = vmatpush1.bf16.msra.mxu0 %v492
  %669 = vmatprep.subr.bf16.mxu0 0
  %670 = vmatpush1.bf16.msra.mxu0 %v491
  %671 = vmatprep.subr.bf16.mxu0 0
  %672 = vmatpush1.bf16.msra.mxu0 %v490
  %673 = vmatprep.subr.bf16.mxu0 0
  %674 = vmatpush1.bf16.msra.mxu0 %v489
  %675 = vmatprep.subr.bf16.mxu0 0
  %676 = vmatpush1.bf16.msra.mxu0 %v488
  %677 = vmatprep.subr.bf16.mxu0 0
  %678 = vmatpush1.bf16.msra.mxu0 %v487
  %679 = vmatprep.subr.bf16.mxu0 0
  %680 = vmatpush2.bf16.msra.mxu0 %v502
  %681 = vmatprep.subr.bf16.mxu0 0
  %682 = vmatpush2.bf16.msra.mxu0 %v501
  %683 = vmatprep.subr.bf16.mxu0 0
  %684 = vmatpush2.bf16.msra.mxu0 %v500
  %685 = vmatprep.subr.bf16.mxu0 0
  %686 = vmatpush2.bf16.msra.mxu0 %v499
  %687 = vmatprep.subr.bf16.mxu0 0
  %688 = vmatpush2.bf16.msra.mxu0 %v498
  %689 = vmatprep.subr.bf16.mxu0 0
  %690 = vmatpush2.bf16.msra.mxu0 %v497
  %691 = vmatprep.subr.bf16.mxu0 0
  %692 = vmatpush2.bf16.msra.mxu0 %v496
  %693 = vmatprep.subr.bf16.mxu0 0
  %694 = vmatpush2.bf16.msra.mxu0 %v495
  %695 = vmatprep.mubr.bf16.mxu0 %v186
  %696 = vmatmul.mubr.bf16.gmra.mxu0 %v172
  %v697 = vpop.f32.mrf.mxu0
  %v698 = vadd.f32 %v658, %v697
  %v699 = vpop.f32.mrf.mxu0
  %v700 = vpop.f32.mrf.mxu0
  %v701 = vpop.f32.mrf.mxu0
  %702 = vdwg.mxu0
  %703 = vmatprep.subr.bf16.mxu0 0
  %704 = vmatpush1.bf16.msra.mxu0 %v510
  %705 = vmatprep.subr.bf16.mxu0 0
  %706 = vmatpush1.bf16.msra.mxu0 %v509
  %707 = vmatprep.subr.bf16.mxu0 0
  %708 = vmatpush1.bf16.msra.mxu0 %v508
  %709 = vmatprep.subr.bf16.mxu0 0
  %710 = vmatpush1.bf16.msra.mxu0 %v507
  %711 = vmatprep.subr.bf16.mxu0 0
  %712 = vmatpush1.bf16.msra.mxu0 %v506
  %713 = vmatprep.subr.bf16.mxu0 0
  %714 = vmatpush1.bf16.msra.mxu0 %v505
  %715 = vmatprep.subr.bf16.mxu0 0
  %716 = vmatpush1.bf16.msra.mxu0 %v504
  %717 = vmatprep.subr.bf16.mxu0 0
  %718 = vmatpush1.bf16.msra.mxu0 %v503
  %719 = vmatprep.subr.bf16.mxu0 0
  %720 = vmatpush2.bf16.msra.mxu0 %v518
  %721 = vmatprep.subr.bf16.mxu0 0
  %722 = vmatpush2.bf16.msra.mxu0 %v517
  %723 = vmatprep.subr.bf16.mxu0 0
  %724 = vmatpush2.bf16.msra.mxu0 %v516
  %725 = vmatprep.subr.bf16.mxu0 0
  %726 = vmatpush2.bf16.msra.mxu0 %v515
  %727 = vmatprep.subr.bf16.mxu0 0
  %728 = vmatpush2.bf16.msra.mxu0 %v514
  %729 = vmatprep.subr.bf16.mxu0 0
  %730 = vmatpush2.bf16.msra.mxu0 %v513
  %731 = vmatprep.subr.bf16.mxu0 0
  %732 = vmatpush2.bf16.msra.mxu0 %v512
  %733 = vmatprep.subr.bf16.mxu0 0
  %734 = vmatpush2.bf16.msra.mxu0 %v511
  %735 = vmatprep.mubr.bf16.mxu0 %v190
  %736 = vmatmul.mubr.bf16.gmra.mxu0 %v188
  %v737 = vpop.f32.mrf.mxu0
  %v738 = vadd.f32 %v698, %v737
  %v739 = vpop.f32.mrf.mxu0
  %v740 = vpop.f32.mrf.mxu0
  %v741 = vpop.f32.mrf.mxu0
  %742 = vdwg.mxu0
  %v743 = vsub.f32 0.0, %v738
  %v744 = vmul.f32 %v743, 1.442695
  %v745 = vpow.pop %v744
  %v746 = vadd.f32 %v745, 1.0
  %v747 = vrcp.pop %v746
  %v748 = vmax.f32 %v747, 0.0
  %v749 = vmin.f32 %v748, 1.0
  %750 = vst [vmem:[%s2] sm:$0x3] %v749
  // Predicated region
  $region10: #{_lambda_.9} parent=0 // pred_check
    _
  $region11: #{_lambda_.9} parent=0 // pred_check_branch
    %752 = sbr.rel (0) target = $region13
  $region12: #{_lambda_.9} parent=0 // pred_region
    _
  $region13: #{_lambda_.9} parent=0 // pred_fallthru
    _
  // Predicated region
  $region14: #{_lambda_.9} parent=0 // pred_check
    _
  $region15: #{_lambda_.9} parent=0 // pred_check_branch
    %754 = sbr.rel (0) target = $region17
  $region16: #{_lambda_.9} parent=0 // pred_region
    _
  $region17: #{_lambda_.9} parent=0 // pred_fallthru
    _

</llo_original>
